<compile_context>
chip_gen: v7x
topology: tpu7x:2x2x1
jax: 0.10.0
libtpu: 0.0.40
codegen_flags: <defaults>
</compile_context>

<pallas_src>
import numpy as np
import jax
import jax.numpy as jnp
from jax.experimental import pallas as pl
from jax.experimental.pallas import tpu as pltpu

ALPHA = 0.5   # constructor args of the PyTorch module
K = 3

_A = -0.75    # PyTorch bicubic coefficient


# ----------------------------------------------------------------------------
# Host-side bicubic interpolation matrix (matches F.interpolate(mode='bicubic',
# align_corners=False) with border clamping).
# ----------------------------------------------------------------------------
def _cubic1(x):
    return ((_A + 2.0) * x - (_A + 3.0)) * x * x + 1.0


def _cubic2(x):
    return (((x - 5.0) * x + 8.0) * x - 4.0) * _A


def _bicubic_matrix(out_size, in_size):
    W = np.zeros((out_size, in_size), dtype=np.float32)
    scale = in_size / out_size
    for i in range(out_size):
        real = (i + 0.5) * scale - 0.5
        t0 = int(np.floor(real))
        t = real - t0
        coeffs = (_cubic2(t + 1.0), _cubic1(t), _cubic1(1.0 - t), _cubic2(2.0 - t))
        for c, off in zip(coeffs, (-1, 0, 1, 2)):
            idx = min(max(t0 + off, 0), in_size - 1)
            W[i, idx] += c
    return W


# ----------------------------------------------------------------------------
# In-kernel helper: sum |dx(d)| + sum |dy(d)| for the replicate-padded central
# difference (kornia diff kernel).  Exact decomposition:
#   sum_j |dx[:, j]| = sum |d[:, 2:] - d[:, :-2]|            (interior)
#                    + |d[:, 1] - d[:, 0]| + |d[:, -1] - d[:, -2]|   (borders)
# and likewise for rows.  Only static slices, no concatenates, no rolls.
# ----------------------------------------------------------------------------
def _grad_abs_sum(d, H, W):
    s = jnp.float32(0.0)
    if W >= 3:
        s = s + jnp.sum(jnp.abs(d[:, :, 2:] - d[:, :, :-2]))
    if W >= 2:
        s = s + jnp.sum(jnp.abs(d[:, :, 1:2] - d[:, :, 0:1]))
        s = s + jnp.sum(jnp.abs(d[:, :, W - 1:W] - d[:, :, W - 2:W - 1]))
    if H >= 3:
        s = s + jnp.sum(jnp.abs(d[:, 2:, :] - d[:, :-2, :]))
    if H >= 2:
        s = s + jnp.sum(jnp.abs(d[:, 1:2, :] - d[:, 0:1, :]))
        s = s + jnp.sum(jnp.abs(d[:, H - 1:H, :] - d[:, H - 2:H - 1, :]))
    return s


# ----------------------------------------------------------------------------
# Fused kernel factory: one grid step processes Bt images through all k scales.
# refs = [pred, gt, (sc_j, wy_j, wxt_j) for j=1..k-1, out]
# ----------------------------------------------------------------------------
def _make_fused_kernel(k, alphas, Bt, H, W, scale_hw):
    def kernel(*refs):
        pred_ref, gt_ref = refs[0], refs[1]
        out_ref = refs[-1]

        g = gt_ref[...]                                         # (Bt, H, W) read once
        total = jnp.float32(alphas[0]) * _grad_abs_sum(pred_ref[...] - g, H, W)

        for j in range(1, k):
            base = 2 + 3 * (j - 1)
            sc_ref, wy_ref, wxt_ref = refs[base], refs[base + 1], refs[base + 2]
            h, w = scale_hw[j - 1]

            sc = sc_ref[...]                                    # (Bt, h, w)
            # bicubic upsample: cur[b] = Wy @ sc[b] @ Wx^T, as two batched MXU matmuls
            wxt_b = jnp.broadcast_to(wxt_ref[...], (Bt, w, W))
            tmp = jnp.einsum('bhw,bwj->bhj', sc, wxt_b,
                             preferred_element_type=jnp.float32)    # (Bt, h, W)
            wy_b = jnp.broadcast_to(wy_ref[...], (Bt, H, h))
            cur = jnp.einsum('bik,bkj->bij', wy_b, tmp,
                             preferred_element_type=jnp.float32)    # (Bt, H, W)

            total = total + jnp.float32(alphas[j]) * _grad_abs_sum(cur - g, H, W)

        # per-step partial sum, written to an (8,128)-aligned block (lane-dense,
        # unmasked store); reduced in JAX -> grid axis can be fully parallel.
        out_ref[...] = jnp.broadcast_to(total, (1, 8, 128))

    return kernel


def _pick_bt(BC, H, W):
    """Largest per-step image batch that divides BC and keeps blocks small."""
    bytes_per_img = H * W * 4
    for bt in (32, 16, 8, 4, 2, 1):
        if BC % bt:
            continue
        # pred + gt double-buffered blocks + a few full-res f32 temporaries
        if bt * bytes_per_img * 8 <= 16 * 1024 * 1024:
            return bt
    return 1


# ----------------------------------------------------------------------------
# Forward pass (mirrors MultiScaleGradientLoss.forward)
# ----------------------------------------------------------------------------
def multi_scale_gradient_loss(prediction_d, d_gt, alpha=ALPHA, k=K):
    B, C, H, W = d_gt.shape
    BC = B * C
    N = B * C * H * W
    pred = prediction_d.reshape(BC, H, W).astype(jnp.float32)
    gt = d_gt.reshape(BC, H, W).astype(jnp.float32)

    alphas = [float(alpha) * (0.5 ** i) for i in range(k)]

    # nearest 0.5x downsample chain (F.interpolate default mode='nearest':
    # out[i] = in[2i]) + host-side bicubic matrices back to (H, W).
    scs, wys, wxts, scale_hw = [], [], [], []
    sc = pred
    for _ in range(1, k):
        h, w = sc.shape[1], sc.shape[2]
        ho, wo = int(h * 0.5), int(w * 0.5)
        sc = sc[:, 0:2 * ho:2, 0:2 * wo:2]
        scs.append(sc)
        scale_hw.append((ho, wo))
        wys.append(jnp.asarray(_bicubic_matrix(H, ho)))       # (H, ho)
        wxts.append(jnp.asarray(_bicubic_matrix(W, wo).T))    # (wo, W)

    Bt = _pick_bt(BC, H, W)
    nblk = BC // Bt

    in_specs = [
        pl.BlockSpec((Bt, H, W), lambda i: (i, 0, 0)),   # pred
        pl.BlockSpec((Bt, H, W), lambda i: (i, 0, 0)),   # gt
    ]
    args = [pred, gt]
    for (ho, wo), sc_arr, wy, wxt in zip(scale_hw, scs, wys, wxts):
        in_specs.append(pl.BlockSpec((Bt, ho, wo), lambda i: (i, 0, 0)))
        in_specs.append(pl.BlockSpec((H, ho), lambda i: (0, 0)))
        in_specs.append(pl.BlockSpec((wo, W), lambda i: (0, 0)))
        args.extend([sc_arr, wy, wxt])

    kernel = _make_fused_kernel(k, alphas, Bt, H, W, scale_hw)

    partials = pl.pallas_call(
        kernel,
        out_shape=jax.ShapeDtypeStruct((nblk, 8, 128), jnp.float32),
        grid_spec=pltpu.PrefetchScalarGridSpec(
            num_scalar_prefetch=0,
            grid=(nblk,),
            in_specs=in_specs,
            out_specs=pl.BlockSpec((1, 8, 128), lambda i: (i, 0, 0)),
        ),
        compiler_params=pltpu.CompilerParams(
            dimension_semantics=("parallel",),
            vmem_limit_bytes=32 * 1024 * 1024,
        ),
    )(*args)

    return jnp.sum(partials[:, 0, 0]) / jnp.float32(N)


# ----------------------------------------------------------------------------
# Pure-JAX reference (same math as the PyTorch module) for the correctness check
# ----------------------------------------------------------------------------
def _ref_loss(pred, gt, alpha, k):
    B, C, H, W = gt.shape
    N = gt.size

    def grads(x):
        left = jnp.concatenate([x[..., :, :1], x[..., :, :-1]], axis=-1)
        right = jnp.concatenate([x[..., :, 1:], x[..., :, -1:]], axis=-1)
        up = jnp.concatenate([x[..., :1, :], x[..., :-1, :]], axis=-2)
        down = jnp.concatenate([x[..., 1:, :], x[..., -1:, :]], axis=-2)
        return right - left, down - up

    dxg, dyg = grads(gt)
    loss = 0.0
    a = float(alpha)
    sc = pred
    cur = pred
    for i in range(k):
        dxp, dyp = grads(cur)
        loss = loss + a * (jnp.sum(jnp.abs(dyp - dyg)) + jnp.sum(jnp.abs(dxp - dxg)))
        a /= 2.0
        if i < k - 1:
            h, w = sc.shape[2], sc.shape[3]
            ho, wo = int(h * 0.5), int(w * 0.5)
            sc = sc[:, :, 0:2 * ho:2, 0:2 * wo:2]
            wy = jnp.asarray(_bicubic_matrix(H, ho))
            wx = jnp.asarray(_bicubic_matrix(W, wo))
            cur = jnp.einsum('oh,bchw,pw->bcop', wy, sc, wx)
    return loss / N


if __name__ == "__main__":
    key = jax.random.PRNGKey(0)
    k1, k2 = jax.random.split(key)
    B, C, H, W = 2, 4, 16, 16
    prediction_d = jax.random.normal(k1, (B, C, H, W), dtype=jnp.float32)
    d_gt = jax.random.normal(k2, (B, C, H, W), dtype=jnp.float32)

    loss = multi_scale_gradient_loss(prediction_d, d_gt, ALPHA, K)
    loss = jax.block_until_ready(loss)

    ref = jax.block_until_ready(_ref_loss(prediction_d, d_gt, ALPHA, K))
    np.testing.assert_allclose(np.asarray(loss), np.asarray(ref),
                               rtol=1e-4, atol=1e-5)
    print("KERNEL_OK")
</pallas_src>

<mosaic_0001>
module attributes {stable_mosaic.version = 11 : i64} {
  func.func @kernel(%arg0: i32, %arg1: memref<8x16x16xf32, #tpu.memory_space<vmem>>, %arg2: memref<8x16x16xf32, #tpu.memory_space<vmem>>, %arg3: memref<8x8x8xf32, #tpu.memory_space<vmem>>, %arg4: memref<16x8xf32, #tpu.memory_space<vmem>>, %arg5: memref<8x16xf32, #tpu.memory_space<vmem>>, %arg6: memref<8x4x4xf32, #tpu.memory_space<vmem>>, %arg7: memref<16x4xf32, #tpu.memory_space<vmem>>, %arg8: memref<4x16xf32, #tpu.memory_space<vmem>>, %arg9: memref<1x8x128xf32, #tpu.memory_space<vmem>>) attributes {dimension_semantics = [#tpu.dimension_semantics<parallel>], iteration_bounds = array<i64: 1>, scalar_prefetch = 0 : i64, scratch_operands = 0 : i64, tpu.core_type = #tpu.core_type<tc>, window_params = [{transform_indices = @transform_0, window_bounds = array<i64: 8, 16, 16>}, {transform_indices = @transform_1, window_bounds = array<i64: 8, 16, 16>}, {transform_indices = @transform_2, window_bounds = array<i64: 8, 8, 8>}, {pipeline_mode = #tpu.pipeline_mode<synchronous>, transform_indices = @transform_3, window_bounds = array<i64: 16, 8>}, {pipeline_mode = #tpu.pipeline_mode<synchronous>, transform_indices = @transform_4, window_bounds = array<i64: 8, 16>}, {transform_indices = @transform_5, window_bounds = array<i64: 8, 4, 4>}, {pipeline_mode = #tpu.pipeline_mode<synchronous>, transform_indices = @transform_6, window_bounds = array<i64: 16, 4>}, {pipeline_mode = #tpu.pipeline_mode<synchronous>, transform_indices = @transform_7, window_bounds = array<i64: 4, 16>}, {transform_indices = @transform_8, window_bounds = array<i64: 1, 8, 128>}]} {
    %c0 = arith.constant 0 : index
    %c0_0 = arith.constant 0 : index
    %c0_1 = arith.constant 0 : index
    %0 = vector.load %arg2[%c0, %c0_0, %c0_1] : memref<8x16x16xf32, #tpu.memory_space<vmem>>, vector<8x16x16xf32>
    %c0_2 = arith.constant 0 : index
    %c0_3 = arith.constant 0 : index
    %c0_4 = arith.constant 0 : index
    %1 = vector.load %arg1[%c0_2, %c0_3, %c0_4] : memref<8x16x16xf32, #tpu.memory_space<vmem>>, vector<8x16x16xf32>
    %2 = arith.subf %1, %0 : vector<8x16x16xf32>
    %3 = vector.extract_strided_slice %2 {offsets = [0, 0, 2], sizes = [8, 16, 14], strides = [1, 1, 1]} : vector<8x16x16xf32> to vector<8x16x14xf32>
    %4 = vector.extract_strided_slice %2 {offsets = [0, 0, 0], sizes = [8, 16, 14], strides = [1, 1, 1]} : vector<8x16x16xf32> to vector<8x16x14xf32>
    %5 = arith.subf %3, %4 : vector<8x16x14xf32>
    %6 = math.absf %5 : vector<8x16x14xf32>
    %7 = vector.shape_cast %6 : vector<8x16x14xf32> to vector<1x8x16x14xf32>
    %cst = arith.constant dense<0.000000e+00> : vector<1xf32>
    %8 = vector.multi_reduction <add>, %7, %cst [1, 2, 3] : vector<1x8x16x14xf32> to vector<1xf32>
    %9 = vector.shape_cast %8 : vector<1xf32> to vector<1x1x1x1xf32>
    %10 = vector.extract %9[0, 0, 0, 0] : f32 from vector<1x1x1x1xf32>
    %cst_5 = arith.constant 0.000000e+00 : f32
    %11 = arith.addf %cst_5, %10 : f32
    %12 = vector.extract_strided_slice %2 {offsets = [0, 0, 1], sizes = [8, 16, 1], strides = [1, 1, 1]} : vector<8x16x16xf32> to vector<8x16x1xf32>
    %13 = vector.extract_strided_slice %2 {offsets = [0, 0, 0], sizes = [8, 16, 1], strides = [1, 1, 1]} : vector<8x16x16xf32> to vector<8x16x1xf32>
    %14 = arith.subf %12, %13 : vector<8x16x1xf32>
    %15 = math.absf %14 : vector<8x16x1xf32>
    %16 = vector.shape_cast %15 : vector<8x16x1xf32> to vector<1x8x16x1xf32>
    %cst_6 = arith.constant dense<0.000000e+00> : vector<1xf32>
    %17 = vector.multi_reduction <add>, %16, %cst_6 [1, 2, 3] : vector<1x8x16x1xf32> to vector<1xf32>
    %18 = vector.shape_cast %17 : vector<1xf32> to vector<1x1x1x1xf32>
    %19 = vector.extract %18[0, 0, 0, 0] : f32 from vector<1x1x1x1xf32>
    %20 = arith.addf %11, %19 : f32
    %21 = vector.extract_strided_slice %2 {offsets = [0, 0, 15], sizes = [8, 16, 1], strides = [1, 1, 1]} : vector<8x16x16xf32> to vector<8x16x1xf32>
    %22 = vector.extract_strided_slice %2 {offsets = [0, 0, 14], sizes = [8, 16, 1], strides = [1, 1, 1]} : vector<8x16x16xf32> to vector<8x16x1xf32>
    %23 = arith.subf %21, %22 : vector<8x16x1xf32>
    %24 = math.absf %23 : vector<8x16x1xf32>
    %25 = vector.shape_cast %24 : vector<8x16x1xf32> to vector<1x8x16x1xf32>
    %cst_7 = arith.constant dense<0.000000e+00> : vector<1xf32>
    %26 = vector.multi_reduction <add>, %25, %cst_7 [1, 2, 3] : vector<1x8x16x1xf32> to vector<1xf32>
    %27 = vector.shape_cast %26 : vector<1xf32> to vector<1x1x1x1xf32>
    %28 = vector.extract %27[0, 0, 0, 0] : f32 from vector<1x1x1x1xf32>
    %29 = arith.addf %20, %28 : f32
    %30 = vector.extract_strided_slice %2 {offsets = [0, 2, 0], sizes = [8, 14, 16], strides = [1, 1, 1]} : vector<8x16x16xf32> to vector<8x14x16xf32>
    %31 = vector.extract_strided_slice %2 {offsets = [0, 0, 0], sizes = [8, 14, 16], strides = [1, 1, 1]} : vector<8x16x16xf32> to vector<8x14x16xf32>
    %32 = arith.subf %30, %31 : vector<8x14x16xf32>
    %33 = math.absf %32 : vector<8x14x16xf32>
    %34 = vector.shape_cast %33 : vector<8x14x16xf32> to vector<1x8x14x16xf32>
    %cst_8 = arith.constant dense<0.000000e+00> : vector<1xf32>
    %35 = vector.multi_reduction <add>, %34, %cst_8 [1, 2, 3] : vector<1x8x14x16xf32> to vector<1xf32>
    %36 = vector.shape_cast %35 : vector<1xf32> to vector<1x1x1x1xf32>
    %37 = vector.extract %36[0, 0, 0, 0] : f32 from vector<1x1x1x1xf32>
    %38 = arith.addf %29, %37 : f32
    %39 = vector.extract_strided_slice %2 {offsets = [0, 1, 0], sizes = [8, 1, 16], strides = [1, 1, 1]} : vector<8x16x16xf32> to vector<8x1x16xf32>
    %40 = vector.extract_strided_slice %2 {offsets = [0, 0, 0], sizes = [8, 1, 16], strides = [1, 1, 1]} : vector<8x16x16xf32> to vector<8x1x16xf32>
    %41 = arith.subf %39, %40 : vector<8x1x16xf32>
    %42 = math.absf %41 : vector<8x1x16xf32>
    %43 = vector.shape_cast %42 : vector<8x1x16xf32> to vector<1x8x1x16xf32>
    %cst_9 = arith.constant dense<0.000000e+00> : vector<1xf32>
    %44 = vector.multi_reduction <add>, %43, %cst_9 [1, 2, 3] : vector<1x8x1x16xf32> to vector<1xf32>
    %45 = vector.shape_cast %44 : vector<1xf32> to vector<1x1x1x1xf32>
    %46 = vector.extract %45[0, 0, 0, 0] : f32 from vector<1x1x1x1xf32>
    %47 = arith.addf %38, %46 : f32
    %48 = vector.extract_strided_slice %2 {offsets = [0, 15, 0], sizes = [8, 1, 16], strides = [1, 1, 1]} : vector<8x16x16xf32> to vector<8x1x16xf32>
    %49 = vector.extract_strided_slice %2 {offsets = [0, 14, 0], sizes = [8, 1, 16], strides = [1, 1, 1]} : vector<8x16x16xf32> to vector<8x1x16xf32>
    %50 = arith.subf %48, %49 : vector<8x1x16xf32>
    %51 = math.absf %50 : vector<8x1x16xf32>
    %52 = vector.shape_cast %51 : vector<8x1x16xf32> to vector<1x8x1x16xf32>
    %cst_10 = arith.constant dense<0.000000e+00> : vector<1xf32>
    %53 = vector.multi_reduction <add>, %52, %cst_10 [1, 2, 3] : vector<1x8x1x16xf32> to vector<1xf32>
    %54 = vector.shape_cast %53 : vector<1xf32> to vector<1x1x1x1xf32>
    %55 = vector.extract %54[0, 0, 0, 0] : f32 from vector<1x1x1x1xf32>
    %56 = arith.addf %47, %55 : f32
    %cst_11 = arith.constant 5.000000e-01 : f32
    %57 = arith.mulf %cst_11, %56 : f32
    %c0_12 = arith.constant 0 : index
    %c0_13 = arith.constant 0 : index
    %c0_14 = arith.constant 0 : index
    %58 = vector.load %arg3[%c0_12, %c0_13, %c0_14] : memref<8x8x8xf32, #tpu.memory_space<vmem>>, vector<8x8x8xf32>
    %c0_15 = arith.constant 0 : index
    %c0_16 = arith.constant 0 : index
    %59 = vector.load %arg5[%c0_15, %c0_16] : memref<8x16xf32, #tpu.memory_space<vmem>>, vector<8x16xf32>
    %60 = vector.shape_cast %59 : vector<8x16xf32> to vector<1x8x16xf32>
    %61 = vector.broadcast %60 : vector<1x8x16xf32> to vector<8x8x16xf32>
    "tpu.trace_start"() <{level = 10 : i32, message = "bhw,bwj->bhj"}> : () -> ()
    %cst_17 = arith.constant dense<0.000000e+00> : vector<8x8x16xf32>
    %62 = tpu.matmul %58, %61, %cst_17 {dimension_numbers = #tpu.dot_dimension_numbers<[2], [1], [1], [2], [0, 0, 0, 1, 1, 2], [0], [0]>} : vector<8x8x8xf32>, vector<8x8x16xf32>, vector<8x8x16xf32> -> vector<8x8x16xf32>
    "tpu.trace_stop"() : () -> ()
    %c0_18 = arith.constant 0 : index
    %c0_19 = arith.constant 0 : index
    %63 = vector.load %arg4[%c0_18, %c0_19] : memref<16x8xf32, #tpu.memory_space<vmem>>, vector<16x8xf32>
    %64 = vector.shape_cast %63 : vector<16x8xf32> to vector<1x16x8xf32>
    %65 = vector.broadcast %64 : vector<1x16x8xf32> to vector<8x16x8xf32>
    "tpu.trace_start"() <{level = 10 : i32, message = "bik,bkj->bij"}> : () -> ()
    %cst_20 = arith.constant dense<0.000000e+00> : vector<8x16x16xf32>
    %66 = tpu.matmul %65, %62, %cst_20 {dimension_numbers = #tpu.dot_dimension_numbers<[2], [1], [1], [2], [0, 0, 0, 1, 1, 2], [0], [0]>} : vector<8x16x8xf32>, vector<8x8x16xf32>, vector<8x16x16xf32> -> vector<8x16x16xf32>
    "tpu.trace_stop"() : () -> ()
    %67 = arith.subf %66, %0 : vector<8x16x16xf32>
    %68 = vector.extract_strided_slice %67 {offsets = [0, 0, 2], sizes = [8, 16, 14], strides = [1, 1, 1]} : vector<8x16x16xf32> to vector<8x16x14xf32>
    %69 = vector.extract_strided_slice %67 {offsets = [0, 0, 0], sizes = [8, 16, 14], strides = [1, 1, 1]} : vector<8x16x16xf32> to vector<8x16x14xf32>
    %70 = arith.subf %68, %69 : vector<8x16x14xf32>
    %71 = math.absf %70 : vector<8x16x14xf32>
    %72 = vector.shape_cast %71 : vector<8x16x14xf32> to vector<1x8x16x14xf32>
    %cst_21 = arith.constant dense<0.000000e+00> : vector<1xf32>
    %73 = vector.multi_reduction <add>, %72, %cst_21 [1, 2, 3] : vector<1x8x16x14xf32> to vector<1xf32>
    %74 = vector.shape_cast %73 : vector<1xf32> to vector<1x1x1x1xf32>
    %75 = vector.extract %74[0, 0, 0, 0] : f32 from vector<1x1x1x1xf32>
    %cst_22 = arith.constant 0.000000e+00 : f32
    %76 = arith.addf %cst_22, %75 : f32
    %77 = vector.extract_strided_slice %67 {offsets = [0, 0, 1], sizes = [8, 16, 1], strides = [1, 1, 1]} : vector<8x16x16xf32> to vector<8x16x1xf32>
    %78 = vector.extract_strided_slice %67 {offsets = [0, 0, 0], sizes = [8, 16, 1], strides = [1, 1, 1]} : vector<8x16x16xf32> to vector<8x16x1xf32>
    %79 = arith.subf %77, %78 : vector<8x16x1xf32>
    %80 = math.absf %79 : vector<8x16x1xf32>
    %81 = vector.shape_cast %80 : vector<8x16x1xf32> to vector<1x8x16x1xf32>
    %cst_23 = arith.constant dense<0.000000e+00> : vector<1xf32>
    %82 = vector.multi_reduction <add>, %81, %cst_23 [1, 2, 3] : vector<1x8x16x1xf32> to vector<1xf32>
    %83 = vector.shape_cast %82 : vector<1xf32> to vector<1x1x1x1xf32>
    %84 = vector.extract %83[0, 0, 0, 0] : f32 from vector<1x1x1x1xf32>
    %85 = arith.addf %76, %84 : f32
    %86 = vector.extract_strided_slice %67 {offsets = [0, 0, 15], sizes = [8, 16, 1], strides = [1, 1, 1]} : vector<8x16x16xf32> to vector<8x16x1xf32>
    %87 = vector.extract_strided_slice %67 {offsets = [0, 0, 14], sizes = [8, 16, 1], strides = [1, 1, 1]} : vector<8x16x16xf32> to vector<8x16x1xf32>
    %88 = arith.subf %86, %87 : vector<8x16x1xf32>
    %89 = math.absf %88 : vector<8x16x1xf32>
    %90 = vector.shape_cast %89 : vector<8x16x1xf32> to vector<1x8x16x1xf32>
    %cst_24 = arith.constant dense<0.000000e+00> : vector<1xf32>
    %91 = vector.multi_reduction <add>, %90, %cst_24 [1, 2, 3] : vector<1x8x16x1xf32> to vector<1xf32>
    %92 = vector.shape_cast %91 : vector<1xf32> to vector<1x1x1x1xf32>
    %93 = vector.extract %92[0, 0, 0, 0] : f32 from vector<1x1x1x1xf32>
    %94 = arith.addf %85, %93 : f32
    %95 = vector.extract_strided_slice %67 {offsets = [0, 2, 0], sizes = [8, 14, 16], strides = [1, 1, 1]} : vector<8x16x16xf32> to vector<8x14x16xf32>
    %96 = vector.extract_strided_slice %67 {offsets = [0, 0, 0], sizes = [8, 14, 16], strides = [1, 1, 1]} : vector<8x16x16xf32> to vector<8x14x16xf32>
    %97 = arith.subf %95, %96 : vector<8x14x16xf32>
    %98 = math.absf %97 : vector<8x14x16xf32>
    %99 = vector.shape_cast %98 : vector<8x14x16xf32> to vector<1x8x14x16xf32>
    %cst_25 = arith.constant dense<0.000000e+00> : vector<1xf32>
    %100 = vector.multi_reduction <add>, %99, %cst_25 [1, 2, 3] : vector<1x8x14x16xf32> to vector<1xf32>
    %101 = vector.shape_cast %100 : vector<1xf32> to vector<1x1x1x1xf32>
    %102 = vector.extract %101[0, 0, 0, 0] : f32 from vector<1x1x1x1xf32>
    %103 = arith.addf %94, %102 : f32
    %104 = vector.extract_strided_slice %67 {offsets = [0, 1, 0], sizes = [8, 1, 16], strides = [1, 1, 1]} : vector<8x16x16xf32> to vector<8x1x16xf32>
    %105 = vector.extract_strided_slice %67 {offsets = [0, 0, 0], sizes = [8, 1, 16], strides = [1, 1, 1]} : vector<8x16x16xf32> to vector<8x1x16xf32>
    %106 = arith.subf %104, %105 : vector<8x1x16xf32>
    %107 = math.absf %106 : vector<8x1x16xf32>
    %108 = vector.shape_cast %107 : vector<8x1x16xf32> to vector<1x8x1x16xf32>
    %cst_26 = arith.constant dense<0.000000e+00> : vector<1xf32>
    %109 = vector.multi_reduction <add>, %108, %cst_26 [1, 2, 3] : vector<1x8x1x16xf32> to vector<1xf32>
    %110 = vector.shape_cast %109 : vector<1xf32> to vector<1x1x1x1xf32>
    %111 = vector.extract %110[0, 0, 0, 0] : f32 from vector<1x1x1x1xf32>
    %112 = arith.addf %103, %111 : f32
    %113 = vector.extract_strided_slice %67 {offsets = [0, 15, 0], sizes = [8, 1, 16], strides = [1, 1, 1]} : vector<8x16x16xf32> to vector<8x1x16xf32>
    %114 = vector.extract_strided_slice %67 {offsets = [0, 14, 0], sizes = [8, 1, 16], strides = [1, 1, 1]} : vector<8x16x16xf32> to vector<8x1x16xf32>
    %115 = arith.subf %113, %114 : vector<8x1x16xf32>
    %116 = math.absf %115 : vector<8x1x16xf32>
    %117 = vector.shape_cast %116 : vector<8x1x16xf32> to vector<1x8x1x16xf32>
    %cst_27 = arith.constant dense<0.000000e+00> : vector<1xf32>
    %118 = vector.multi_reduction <add>, %117, %cst_27 [1, 2, 3] : vector<1x8x1x16xf32> to vector<1xf32>
    %119 = vector.shape_cast %118 : vector<1xf32> to vector<1x1x1x1xf32>
    %120 = vector.extract %119[0, 0, 0, 0] : f32 from vector<1x1x1x1xf32>
    %121 = arith.addf %112, %120 : f32
    %cst_28 = arith.constant 2.500000e-01 : f32
    %122 = arith.mulf %cst_28, %121 : f32
    %123 = arith.addf %57, %122 : f32
    %c0_29 = arith.constant 0 : index
    %c0_30 = arith.constant 0 : index
    %c0_31 = arith.constant 0 : index
    %124 = vector.load %arg6[%c0_29, %c0_30, %c0_31] : memref<8x4x4xf32, #tpu.memory_space<vmem>>, vector<8x4x4xf32>
    %c0_32 = arith.constant 0 : index
    %c0_33 = arith.constant 0 : index
    %125 = vector.load %arg8[%c0_32, %c0_33] : memref<4x16xf32, #tpu.memory_space<vmem>>, vector<4x16xf32>
    %126 = vector.shape_cast %125 : vector<4x16xf32> to vector<1x4x16xf32>
    %127 = vector.broadcast %126 : vector<1x4x16xf32> to vector<8x4x16xf32>
    "tpu.trace_start"() <{level = 10 : i32, message = "bhw,bwj->bhj"}> : () -> ()
    %cst_34 = arith.constant dense<0.000000e+00> : vector<8x4x16xf32>
    %128 = tpu.matmul %124, %127, %cst_34 {dimension_numbers = #tpu.dot_dimension_numbers<[2], [1], [1], [2], [0, 0, 0, 1, 1, 2], [0], [0]>} : vector<8x4x4xf32>, vector<8x4x16xf32>, vector<8x4x16xf32> -> vector<8x4x16xf32>
    "tpu.trace_stop"() : () -> ()
    %c0_35 = arith.constant 0 : index
    %c0_36 = arith.constant 0 : index
    %129 = vector.load %arg7[%c0_35, %c0_36] : memref<16x4xf32, #tpu.memory_space<vmem>>, vector<16x4xf32>
    %130 = vector.shape_cast %129 : vector<16x4xf32> to vector<1x16x4xf32>
    %131 = vector.broadcast %130 : vector<1x16x4xf32> to vector<8x16x4xf32>
    "tpu.trace_start"() <{level = 10 : i32, message = "bik,bkj->bij"}> : () -> ()
    %cst_37 = arith.constant dense<0.000000e+00> : vector<8x16x16xf32>
    %132 = tpu.matmul %131, %128, %cst_37 {dimension_numbers = #tpu.dot_dimension_numbers<[2], [1], [1], [2], [0, 0, 0, 1, 1, 2], [0], [0]>} : vector<8x16x4xf32>, vector<8x4x16xf32>, vector<8x16x16xf32> -> vector<8x16x16xf32>
    "tpu.trace_stop"() : () -> ()
    %133 = arith.subf %132, %0 : vector<8x16x16xf32>
    %134 = vector.extract_strided_slice %133 {offsets = [0, 0, 2], sizes = [8, 16, 14], strides = [1, 1, 1]} : vector<8x16x16xf32> to vector<8x16x14xf32>
    %135 = vector.extract_strided_slice %133 {offsets = [0, 0, 0], sizes = [8, 16, 14], strides = [1, 1, 1]} : vector<8x16x16xf32> to vector<8x16x14xf32>
    %136 = arith.subf %134, %135 : vector<8x16x14xf32>
    %137 = math.absf %136 : vector<8x16x14xf32>
    %138 = vector.shape_cast %137 : vector<8x16x14xf32> to vector<1x8x16x14xf32>
    %cst_38 = arith.constant dense<0.000000e+00> : vector<1xf32>
    %139 = vector.multi_reduction <add>, %138, %cst_38 [1, 2, 3] : vector<1x8x16x14xf32> to vector<1xf32>
    %140 = vector.shape_cast %139 : vector<1xf32> to vector<1x1x1x1xf32>
    %141 = vector.extract %140[0, 0, 0, 0] : f32 from vector<1x1x1x1xf32>
    %cst_39 = arith.constant 0.000000e+00 : f32
    %142 = arith.addf %cst_39, %141 : f32
    %143 = vector.extract_strided_slice %133 {offsets = [0, 0, 1], sizes = [8, 16, 1], strides = [1, 1, 1]} : vector<8x16x16xf32> to vector<8x16x1xf32>
    %144 = vector.extract_strided_slice %133 {offsets = [0, 0, 0], sizes = [8, 16, 1], strides = [1, 1, 1]} : vector<8x16x16xf32> to vector<8x16x1xf32>
    %145 = arith.subf %143, %144 : vector<8x16x1xf32>
    %146 = math.absf %145 : vector<8x16x1xf32>
    %147 = vector.shape_cast %146 : vector<8x16x1xf32> to vector<1x8x16x1xf32>
    %cst_40 = arith.constant dense<0.000000e+00> : vector<1xf32>
    %148 = vector.multi_reduction <add>, %147, %cst_40 [1, 2, 3] : vector<1x8x16x1xf32> to vector<1xf32>
    %149 = vector.shape_cast %148 : vector<1xf32> to vector<1x1x1x1xf32>
    %150 = vector.extract %149[0, 0, 0, 0] : f32 from vector<1x1x1x1xf32>
    %151 = arith.addf %142, %150 : f32
    %152 = vector.extract_strided_slice %133 {offsets = [0, 0, 15], sizes = [8, 16, 1], strides = [1, 1, 1]} : vector<8x16x16xf32> to vector<8x16x1xf32>
    %153 = vector.extract_strided_slice %133 {offsets = [0, 0, 14], sizes = [8, 16, 1], strides = [1, 1, 1]} : vector<8x16x16xf32> to vector<8x16x1xf32>
    %154 = arith.subf %152, %153 : vector<8x16x1xf32>
    %155 = math.absf %154 : vector<8x16x1xf32>
    %156 = vector.shape_cast %155 : vector<8x16x1xf32> to vector<1x8x16x1xf32>
    %cst_41 = arith.constant dense<0.000000e+00> : vector<1xf32>
    %157 = vector.multi_reduction <add>, %156, %cst_41 [1, 2, 3] : vector<1x8x16x1xf32> to vector<1xf32>
    %158 = vector.shape_cast %157 : vector<1xf32> to vector<1x1x1x1xf32>
    %159 = vector.extract %158[0, 0, 0, 0] : f32 from vector<1x1x1x1xf32>
    %160 = arith.addf %151, %159 : f32
    %161 = vector.extract_strided_slice %133 {offsets = [0, 2, 0], sizes = [8, 14, 16], strides = [1, 1, 1]} : vector<8x16x16xf32> to vector<8x14x16xf32>
    %162 = vector.extract_strided_slice %133 {offsets = [0, 0, 0], sizes = [8, 14, 16], strides = [1, 1, 1]} : vector<8x16x16xf32> to vector<8x14x16xf32>
    %163 = arith.subf %161, %162 : vector<8x14x16xf32>
    %164 = math.absf %163 : vector<8x14x16xf32>
    %165 = vector.shape_cast %164 : vector<8x14x16xf32> to vector<1x8x14x16xf32>
    %cst_42 = arith.constant dense<0.000000e+00> : vector<1xf32>
    %166 = vector.multi_reduction <add>, %165, %cst_42 [1, 2, 3] : vector<1x8x14x16xf32> to vector<1xf32>
    %167 = vector.shape_cast %166 : vector<1xf32> to vector<1x1x1x1xf32>
    %168 = vector.extract %167[0, 0, 0, 0] : f32 from vector<1x1x1x1xf32>
    %169 = arith.addf %160, %168 : f32
    %170 = vector.extract_strided_slice %133 {offsets = [0, 1, 0], sizes = [8, 1, 16], strides = [1, 1, 1]} : vector<8x16x16xf32> to vector<8x1x16xf32>
    %171 = vector.extract_strided_slice %133 {offsets = [0, 0, 0], sizes = [8, 1, 16], strides = [1, 1, 1]} : vector<8x16x16xf32> to vector<8x1x16xf32>
    %172 = arith.subf %170, %171 : vector<8x1x16xf32>
    %173 = math.absf %172 : vector<8x1x16xf32>
    %174 = vector.shape_cast %173 : vector<8x1x16xf32> to vector<1x8x1x16xf32>
    %cst_43 = arith.constant dense<0.000000e+00> : vector<1xf32>
    %175 = vector.multi_reduction <add>, %174, %cst_43 [1, 2, 3] : vector<1x8x1x16xf32> to vector<1xf32>
    %176 = vector.shape_cast %175 : vector<1xf32> to vector<1x1x1x1xf32>
    %177 = vector.extract %176[0, 0, 0, 0] : f32 from vector<1x1x1x1xf32>
    %178 = arith.addf %169, %177 : f32
    %179 = vector.extract_strided_slice %133 {offsets = [0, 15, 0], sizes = [8, 1, 16], strides = [1, 1, 1]} : vector<8x16x16xf32> to vector<8x1x16xf32>
    %180 = vector.extract_strided_slice %133 {offsets = [0, 14, 0], sizes = [8, 1, 16], strides = [1, 1, 1]} : vector<8x16x16xf32> to vector<8x1x16xf32>
    %181 = arith.subf %179, %180 : vector<8x1x16xf32>
    %182 = math.absf %181 : vector<8x1x16xf32>
    %183 = vector.shape_cast %182 : vector<8x1x16xf32> to vector<1x8x1x16xf32>
    %cst_44 = arith.constant dense<0.000000e+00> : vector<1xf32>
    %184 = vector.multi_reduction <add>, %183, %cst_44 [1, 2, 3] : vector<1x8x1x16xf32> to vector<1xf32>
    %185 = vector.shape_cast %184 : vector<1xf32> to vector<1x1x1x1xf32>
    %186 = vector.extract %185[0, 0, 0, 0] : f32 from vector<1x1x1x1xf32>
    %187 = arith.addf %178, %186 : f32
    %cst_45 = arith.constant 1.250000e-01 : f32
    %188 = arith.mulf %cst_45, %187 : f32
    %189 = arith.addf %123, %188 : f32
    %190 = vector.broadcast %189 : f32 to vector<1x8x128xf32>
    %c0_46 = arith.constant 0 : index
    %c0_47 = arith.constant 0 : index
    %c0_48 = arith.constant 0 : index
    %191 = vector.load %arg9[%c0_46, %c0_47, %c0_48] : memref<1x8x128xf32, #tpu.memory_space<vmem>>, vector<1x8x128xf32>
    tpu.vector_store %arg9[%c0_46, %c0_47, %c0_48], %190 {strides = array<i32>} : memref<1x8x128xf32, #tpu.memory_space<vmem>>, vector<1x8x128xf32>,
    return
  }
  func.func @transform_0(%arg0: i32) -> (i32, i32, i32) {
    %c0_i32 = arith.constant 0 : i32
    %c0_i32_0 = arith.constant 0 : i32
    %c0_i32_1 = arith.constant 0 : i32
    return %arg0, %c0_i32, %c0_i32_0 : i32, i32, i32
  }
  func.func @transform_1(%arg0: i32) -> (i32, i32, i32) {
    %c0_i32 = arith.constant 0 : i32
    %c0_i32_0 = arith.constant 0 : i32
    %c0_i32_1 = arith.constant 0 : i32
    return %arg0, %c0_i32, %c0_i32_0 : i32, i32, i32
  }
  func.func @transform_2(%arg0: i32) -> (i32, i32, i32) {
    %c0_i32 = arith.constant 0 : i32
    %c0_i32_0 = arith.constant 0 : i32
    %c0_i32_1 = arith.constant 0 : i32
    return %arg0, %c0_i32, %c0_i32_0 : i32, i32, i32
  }
  func.func @transform_3(%arg0: i32) -> (i32, i32) {
    %c0_i32 = arith.constant 0 : i32
    %c0_i32_0 = arith.constant 0 : i32
    %c0_i32_1 = arith.constant 0 : i32
    return %c0_i32, %c0_i32_0 : i32, i32
  }
  func.func @transform_4(%arg0: i32) -> (i32, i32) {
    %c0_i32 = arith.constant 0 : i32
    %c0_i32_0 = arith.constant 0 : i32
    %c0_i32_1 = arith.constant 0 : i32
    return %c0_i32, %c0_i32_0 : i32, i32
  }
  func.func @transform_5(%arg0: i32) -> (i32, i32, i32) {
    %c0_i32 = arith.constant 0 : i32
    %c0_i32_0 = arith.constant 0 : i32
    %c0_i32_1 = arith.constant 0 : i32
    return %arg0, %c0_i32, %c0_i32_0 : i32, i32, i32
  }
  func.func @transform_6(%arg0: i32) -> (i32, i32) {
    %c0_i32 = arith.constant 0 : i32
    %c0_i32_0 = arith.constant 0 : i32
    %c0_i32_1 = arith.constant 0 : i32
    return %c0_i32, %c0_i32_0 : i32, i32
  }
  func.func @transform_7(%arg0: i32) -> (i32, i32) {
    %c0_i32 = arith.constant 0 : i32
    %c0_i32_0 = arith.constant 0 : i32
    %c0_i32_1 = arith.constant 0 : i32
    return %c0_i32, %c0_i32_0 : i32, i32
  }
  func.func @transform_8(%arg0: i32) -> (i32, i32, i32) {
    %c0_i32 = arith.constant 0 : i32
    %c0_i32_0 = arith.constant 0 : i32
    %c0_i32_1 = arith.constant 0 : i32
    return %arg0, %c0_i32, %c0_i32_0 : i32, i32, i32
  }
}

</mosaic_0001>

<llo_original>
// kernel: tpu_custom_call.1
$region0: #{tpu_custom_call.1}
  #allocation0 [shape = 'u32[]', space=smem, size = 0x4, offset = 0x4, fixed_abs, tag = 'smem constant byte address 0x4 - core index']
  #allocation1 [shape = 'u32[144,128]{1,0:T(1,128)}', space=vmem, size = 0x12000, scoped, tag = 'internal scratch']
  %s0 = inlined_call_operand.hbm [shape: f32[8,16,16], index: 0, kind: input, shape index: {}]
  %s1 = inlined_call_operand.hbm [shape: f32[8,16,16], index: 1, kind: input, shape index: {}]
  %s2 = inlined_call_operand.vmem [shape: f32[8,8,8], index: 2, kind: input, shape index: {}]
  %s3 = inlined_call_operand.vmem [shape: f32[16,8], index: 3, kind: input, shape index: {}]
  %s4 = inlined_call_operand.vmem [shape: f32[8,16], index: 4, kind: input, shape index: {}]
  %s5 = inlined_call_operand.vmem [shape: f32[8,4,4], index: 5, kind: input, shape index: {}]
  %s6 = inlined_call_operand.vmem [shape: f32[16,4], index: 6, kind: input, shape index: {}]
  %s7 = inlined_call_operand.vmem [shape: f32[4,16], index: 7, kind: input, shape index: {}]
  %s8 = inlined_call_operand.hbm [shape: f32[1,8,128], index: 8, kind: output, shape index: {}]
  %s9 = sld [smem:[#allocation0]]
  $region50: #{tpu_custom_call.1} parent=0
    _
  %s11 = ssub.s32 1, %s9
  %s12 = scalar_select 0, %s11, %s9
  $region1: #{tpu_custom_call.1} parent=0
    #allocation2 [shape = 'u8[65536]{0}', space=vmem, size = 0x10000, scoped, tag = 'input window, operand 0, single buffered']
    #allocation3 [shape = 's32[1]{0}', space=sflag, size = 0x4, scoped, tag = 'scoped memory for tpu_custom_call.1']
    #allocation4 [shape = 's32[1]{0}', space=sflag, size = 0x4, scoped, tag = 'scoped memory for tpu_custom_call.1']
    #allocation5 [shape = 'u8[65536]{0}', space=vmem, size = 0x10000, scoped, tag = 'input window, operand 1, single buffered']
    #allocation6 [shape = 's32[1]{0}', space=sflag, size = 0x4, scoped, tag = 'scoped memory for tpu_custom_call.1']
    #allocation7 [shape = 'u8[4096]{0}', space=vmem, size = 0x1000, scoped, tag = 'output window, operand 0, single buffered']
    %13 = vsyncpa [#allocation3], 0
    %14 = vsyncpa [#allocation6], 0
    %15 = vsyncpa [#allocation4], 0
    // Predicated region
    $region2: #{tpu_custom_call.1} parent=1 // pred_check
      _
    $region3: #{tpu_custom_call.1} parent=1 // pred_check_branch
      %17 = sbr.rel (0) target = $region5
    $region4: #{tpu_custom_call.1} parent=1 // pred_region
      %s19 = ssub.s32 2048, 2048
      %20 = vsyncadd [#allocation3], %s19
      %s21 = sshll.u32 [#allocation2], 4
      %s22 = int_to_ptr.vmem [resolvable:$true] %s21
      %27 = dma.hbm_to_vmem [thread:$0]  %s0, 2048, %s22, [#allocation3], 128, 128, 8
    $region5: #{tpu_custom_call.1} parent=1 // pred_fallthru
      _
    // Predicated region
    $region6: #{tpu_custom_call.1} parent=1 // pred_check
      _
    $region7: #{tpu_custom_call.1} parent=1 // pred_check_branch
      %29 = sbr.rel (0) target = $region9
    $region8: #{tpu_custom_call.1} parent=1 // pred_region
      %s31 = ssub.s32 2048, 2048
      %32 = vsyncadd [#allocation6], %s31
      %s33 = sshll.u32 [#allocation5], 4
      %s34 = int_to_ptr.vmem [resolvable:$true] %s33
      %39 = dma.hbm_to_vmem [thread:$0]  %s1, 2048, %s34, [#allocation6], 128, 128, 8
    $region9: #{tpu_custom_call.1} parent=1 // pred_fallthru
      _
    // Predicated region
    $region10: #{tpu_custom_call.1} parent=1 // pred_check
      _
    $region11: #{tpu_custom_call.1} parent=1 // pred_check_branch
      %41 = sbr.rel (0) target = $region13
    $region12: #{tpu_custom_call.1} parent=1 // pred_region
      _
    $region13: #{tpu_custom_call.1} parent=1 // pred_fallthru
      _
    // Predicated region
    $region14: #{tpu_custom_call.1} parent=1 // pred_check
      _
    $region15: #{tpu_custom_call.1} parent=1 // pred_check_branch
      %43 = sbr.rel (0) target = $region17
    $region16: #{tpu_custom_call.1} parent=1 // pred_region
      _
    $region17: #{tpu_custom_call.1} parent=1 // pred_fallthru
      _
    // Predicated region
    $region18: #{tpu_custom_call.1} parent=1 // pred_check
      _
    $region19: #{tpu_custom_call.1} parent=1 // pred_check_branch
      %45 = sbr.rel (0) target = $region21
    $region20: #{tpu_custom_call.1} parent=1 // pred_region
      _
    $region21: #{tpu_custom_call.1} parent=1 // pred_fallthru
      _
    // Predicated region
    $region22: #{tpu_custom_call.1} parent=1 // pred_check
      _
    $region23: #{tpu_custom_call.1} parent=1 // pred_check_branch
      %47 = sbr.rel (0) target = $region25
    $region24: #{tpu_custom_call.1} parent=1 // pred_region
      _
    $region25: #{tpu_custom_call.1} parent=1 // pred_fallthru
      _
    // Predicated region
    $region26: #{tpu_custom_call.1} parent=1 // pred_check
      _
    $region27: #{tpu_custom_call.1} parent=1 // pred_check_branch
      %49 = sbr.rel (0) target = $region29
    $region28: #{tpu_custom_call.1} parent=1 // pred_region
      _
    $region29: #{tpu_custom_call.1} parent=1 // pred_fallthru
      _
    // Predicated region
    $region30: #{tpu_custom_call.1} parent=1 // pred_check
      _
    $region31: #{tpu_custom_call.1} parent=1 // pred_check_branch
      %51 = sbr.rel (0) target = $region33
    $region32: #{tpu_custom_call.1} parent=1 // pred_region
      _
    $region33: #{tpu_custom_call.1} parent=1 // pred_fallthru
      _
    // Predicated region
    $region34: #{tpu_custom_call.1} parent=1 // pred_check
      _
    $region35: #{tpu_custom_call.1} parent=1 // pred_check_branch
      %53 = sbr.rel (0) target = $region37
    $region36: #{tpu_custom_call.1} parent=1 // pred_region
      %54 = dma.done [#allocation3], 2048
    $region37: #{tpu_custom_call.1} parent=1 // pred_fallthru
      _
    // Predicated region
    $region38: #{tpu_custom_call.1} parent=1 // pred_check
      _
    $region39: #{tpu_custom_call.1} parent=1 // pred_check_branch
      %56 = sbr.rel (0) target = $region41
    $region40: #{tpu_custom_call.1} parent=1 // pred_region
      %57 = dma.done [#allocation6], 2048
    $region41: #{tpu_custom_call.1} parent=1 // pred_fallthru
      _
    %v58 = vld [vmem:[#allocation5] sm:$0xff]
    %v59 = vld [vmem:[#allocation5 + $0x8] sm:$0xff]
    %v60 = vld [vmem:[#allocation5 + $0x10] sm:$0xff]
    %v61 = vld [vmem:[#allocation5 + $0x18] sm:$0xff]
    %v62 = vld [vmem:[#allocation5 + $0x20] sm:$0xff]
    %v63 = vld [vmem:[#allocation5 + $0x28] sm:$0xff]
    %v64 = vld [vmem:[#allocation5 + $0x30] sm:$0xff]
    %v65 = vld [vmem:[#allocation5 + $0x38] sm:$0xff]
    %v66 = vld [vmem:[#allocation5 + $0x40] sm:$0xff]
    %v67 = vld [vmem:[#allocation5 + $0x48] sm:$0xff]
    %v68 = vld [vmem:[#allocation5 + $0x50] sm:$0xff]
    %v69 = vld [vmem:[#allocation5 + $0x58] sm:$0xff]
    %v70 = vld [vmem:[#allocation5 + $0x60] sm:$0xff]
    %v71 = vld [vmem:[#allocation5 + $0x68] sm:$0xff]
    %v72 = vld [vmem:[#allocation5 + $0x70] sm:$0xff]
    %v73 = vld [vmem:[#allocation5 + $0x78] sm:$0xff]
    %v74 = vld [vmem:[#allocation2] sm:$0xff]
    %v75 = vld [vmem:[#allocation2 + $0x8] sm:$0xff]
    %v76 = vld [vmem:[#allocation2 + $0x10] sm:$0xff]
    %v77 = vld [vmem:[#allocation2 + $0x18] sm:$0xff]
    %v78 = vld [vmem:[#allocation2 + $0x20] sm:$0xff]
    %v79 = vld [vmem:[#allocation2 + $0x28] sm:$0xff]
    %v80 = vld [vmem:[#allocation2 + $0x30] sm:$0xff]
    %v81 = vld [vmem:[#allocation2 + $0x38] sm:$0xff]
    %v82 = vld [vmem:[#allocation2 + $0x40] sm:$0xff]
    %v83 = vld [vmem:[#allocation2 + $0x48] sm:$0xff]
    %v84 = vld [vmem:[#allocation2 + $0x50] sm:$0xff]
    %v85 = vld [vmem:[#allocation2 + $0x58] sm:$0xff]
    %v86 = vld [vmem:[#allocation2 + $0x60] sm:$0xff]
    %v87 = vld [vmem:[#allocation2 + $0x68] sm:$0xff]
    %v88 = vld [vmem:[#allocation2 + $0x70] sm:$0xff]
    %v89 = vld [vmem:[#allocation2 + $0x78] sm:$0xff]
    %v90 = vsub.f32 %v74, %v58
    %v91 = vsub.f32 %v75, %v59
    %v92 = vsub.f32 %v76, %v60
    %v93 = vsub.f32 %v77, %v61
    %v94 = vsub.f32 %v78, %v62
    %v95 = vsub.f32 %v79, %v63
    %v96 = vsub.f32 %v80, %v64
    %v97 = vsub.f32 %v81, %v65
    %v98 = vsub.f32 %v82, %v66
    %v99 = vsub.f32 %v83, %v67
    %v100 = vsub.f32 %v84, %v68
    %v101 = vsub.f32 %v85, %v69
    %v102 = vsub.f32 %v86, %v70
    %v103 = vsub.f32 %v87, %v71
    %v104 = vsub.f32 %v88, %v72
    %v105 = vsub.f32 %v89, %v73
    %122 = vrot.lane.b32.xlu0 %v90, 2
    %v123 = vpop.permute.xlu0 %122
    %124 = vrot.lane.b32.xlu0 %v91, 2
    %v125 = vpop.permute.xlu0 %124
    %126 = vrot.lane.b32.xlu0 %v92, 2
    %v127 = vpop.permute.xlu0 %126
    %128 = vrot.lane.b32.xlu0 %v93, 2
    %v129 = vpop.permute.xlu0 %128
    %130 = vrot.lane.b32.xlu0 %v94, 2
    %v131 = vpop.permute.xlu0 %130
    %132 = vrot.lane.b32.xlu0 %v95, 2
    %v133 = vpop.permute.xlu0 %132
    %134 = vrot.lane.b32.xlu0 %v96, 2
    %v135 = vpop.permute.xlu0 %134
    %136 = vrot.lane.b32.xlu0 %v97, 2
    %v137 = vpop.permute.xlu0 %136
    %138 = vrot.lane.b32.xlu0 %v98, 2
    %v139 = vpop.permute.xlu0 %138
    %140 = vrot.lane.b32.xlu0 %v99, 2
    %v141 = vpop.permute.xlu0 %140
    %142 = vrot.lane.b32.xlu0 %v100, 2
    %v143 = vpop.permute.xlu0 %142
    %144 = vrot.lane.b32.xlu0 %v101, 2
    %v145 = vpop.permute.xlu0 %144
    %146 = vrot.lane.b32.xlu0 %v102, 2
    %v147 = vpop.permute.xlu0 %146
    %148 = vrot.lane.b32.xlu0 %v103, 2
    %v149 = vpop.permute.xlu0 %148
    %150 = vrot.lane.b32.xlu0 %v104, 2
    %v151 = vpop.permute.xlu0 %150
    %152 = vrot.lane.b32.xlu0 %v105, 2
    %v153 = vpop.permute.xlu0 %152
    %v170 = vsub.f32 %v90, %v123
    %v171 = vsub.f32 %v91, %v125
    %v172 = vsub.f32 %v92, %v127
    %v173 = vsub.f32 %v93, %v129
    %v174 = vsub.f32 %v94, %v131
    %v175 = vsub.f32 %v95, %v133
    %v176 = vsub.f32 %v96, %v135
    %v177 = vsub.f32 %v97, %v137
    %v178 = vsub.f32 %v98, %v139
    %v179 = vsub.f32 %v99, %v141
    %v180 = vsub.f32 %v100, %v143
    %v181 = vsub.f32 %v101, %v145
    %v182 = vsub.f32 %v102, %v147
    %v183 = vsub.f32 %v103, %v149
    %v184 = vsub.f32 %v104, %v151
    %v185 = vsub.f32 %v105, %v153
    %v186 = vand.u32 2147483647, %v170
    %v187 = vand.u32 2147483647, %v171
    %v188 = vand.u32 2147483647, %v172
    %v189 = vand.u32 2147483647, %v173
    %v190 = vand.u32 2147483647, %v174
    %v191 = vand.u32 2147483647, %v175
    %v192 = vand.u32 2147483647, %v176
    %v193 = vand.u32 2147483647, %v177
    %v194 = vand.u32 2147483647, %v178
    %v195 = vand.u32 2147483647, %v179
    %v196 = vand.u32 2147483647, %v180
    %v197 = vand.u32 2147483647, %v181
    %v198 = vand.u32 2147483647, %v182
    %v199 = vand.u32 2147483647, %v183
    %v200 = vand.u32 2147483647, %v184
    %v201 = vand.u32 2147483647, %v185
    %218 = vrot.lane.b32.xlu0 %v186, 126
    %v219 = vpop.permute.xlu0 %218
    %220 = vrot.lane.b32.xlu0 %v187, 126
    %v221 = vpop.permute.xlu0 %220
    %222 = vrot.lane.b32.xlu0 %v188, 126
    %v223 = vpop.permute.xlu0 %222
    %224 = vrot.lane.b32.xlu0 %v189, 126
    %v225 = vpop.permute.xlu0 %224
    %226 = vrot.lane.b32.xlu0 %v190, 126
    %v227 = vpop.permute.xlu0 %226
    %228 = vrot.lane.b32.xlu0 %v191, 126
    %v229 = vpop.permute.xlu0 %228
    %230 = vrot.lane.b32.xlu0 %v192, 126
    %v231 = vpop.permute.xlu0 %230
    %232 = vrot.lane.b32.xlu0 %v193, 126
    %v233 = vpop.permute.xlu0 %232
    %234 = vrot.lane.b32.xlu0 %v194, 126
    %v235 = vpop.permute.xlu0 %234
    %236 = vrot.lane.b32.xlu0 %v195, 126
    %v237 = vpop.permute.xlu0 %236
    %238 = vrot.lane.b32.xlu0 %v196, 126
    %v239 = vpop.permute.xlu0 %238
    %240 = vrot.lane.b32.xlu0 %v197, 126
    %v241 = vpop.permute.xlu0 %240
    %242 = vrot.lane.b32.xlu0 %v198, 126
    %v243 = vpop.permute.xlu0 %242
    %244 = vrot.lane.b32.xlu0 %v199, 126
    %v245 = vpop.permute.xlu0 %244
    %246 = vrot.lane.b32.xlu0 %v200, 126
    %v247 = vpop.permute.xlu0 %246
    %248 = vrot.lane.b32.xlu0 %v201, 126
    %v249 = vpop.permute.xlu0 %248
    %vm266 = vcmask 113664
    %v267 = vsel %vm266, %v219, 0.0
    %v268 = vsel %vm266, %v221, 0.0
    %v269 = vadd.f32 %v267, %v268
    %v270 = vsel %vm266, %v223, 0.0
    %v271 = vadd.f32 %v269, %v270
    %v272 = vsel %vm266, %v225, 0.0
    %v273 = vadd.f32 %v271, %v272
    %v274 = vsel %vm266, %v227, 0.0
    %v275 = vadd.f32 %v273, %v274
    %v276 = vsel %vm266, %v229, 0.0
    %v277 = vadd.f32 %v275, %v276
    %v278 = vsel %vm266, %v231, 0.0
    %v279 = vadd.f32 %v277, %v278
    %v280 = vsel %vm266, %v233, 0.0
    %v281 = vadd.f32 %v279, %v280
    %v282 = vsel %vm266, %v235, 0.0
    %v283 = vadd.f32 %v281, %v282
    %v284 = vsel %vm266, %v237, 0.0
    %v285 = vadd.f32 %v283, %v284
    %v286 = vsel %vm266, %v239, 0.0
    %v287 = vadd.f32 %v285, %v286
    %v288 = vsel %vm266, %v241, 0.0
    %v289 = vadd.f32 %v287, %v288
    %v290 = vsel %vm266, %v243, 0.0
    %v291 = vadd.f32 %v289, %v290
    %v292 = vsel %vm266, %v245, 0.0
    %v293 = vadd.f32 %v291, %v292
    %v294 = vsel %vm266, %v247, 0.0
    %v295 = vadd.f32 %v293, %v294
    %v296 = vsel %vm266, %v249, 0.0
    %v297 = vadd.f32 %v295, %v296
    %298 = vadd.xlane.f32.xlu0 %v297
    %v299 = vpop.xlane.xlu0 %298
    %v300 = vrot.slane %v299, 4
    %v301 = vadd.f32 %v299, %v300
    %v302 = vrot.slane %v301, 2
    %v303 = vadd.f32 %v301, %v302
    %v304 = vrot.slane %v303, 1
    %v305 = vadd.f32 %v303, %v304
    %s306 = vtos %v305
    %s307 = sadd.f32 %s306, 0.0
    %308 = vrot.lane.b32.xlu0 %v90, 1
    %v309 = vpop.permute.xlu0 %308
    %310 = vrot.lane.b32.xlu0 %v91, 1
    %v311 = vpop.permute.xlu0 %310
    %312 = vrot.lane.b32.xlu0 %v92, 1
    %v313 = vpop.permute.xlu0 %312
    %314 = vrot.lane.b32.xlu0 %v93, 1
    %v315 = vpop.permute.xlu0 %314
    %316 = vrot.lane.b32.xlu0 %v94, 1
    %v317 = vpop.permute.xlu0 %316
    %318 = vrot.lane.b32.xlu0 %v95, 1
    %v319 = vpop.permute.xlu0 %318
    %320 = vrot.lane.b32.xlu0 %v96, 1
    %v321 = vpop.permute.xlu0 %320
    %322 = vrot.lane.b32.xlu0 %v97, 1
    %v323 = vpop.permute.xlu0 %322
    %324 = vrot.lane.b32.xlu0 %v98, 1
    %v325 = vpop.permute.xlu0 %324
    %326 = vrot.lane.b32.xlu0 %v99, 1
    %v327 = vpop.permute.xlu0 %326
    %328 = vrot.lane.b32.xlu0 %v100, 1
    %v329 = vpop.permute.xlu0 %328
    %330 = vrot.lane.b32.xlu0 %v101, 1
    %v331 = vpop.permute.xlu0 %330
    %332 = vrot.lane.b32.xlu0 %v102, 1
    %v333 = vpop.permute.xlu0 %332
    %334 = vrot.lane.b32.xlu0 %v103, 1
    %v335 = vpop.permute.xlu0 %334
    %336 = vrot.lane.b32.xlu0 %v104, 1
    %v337 = vpop.permute.xlu0 %336
    %338 = vrot.lane.b32.xlu0 %v105, 1
    %v339 = vpop.permute.xlu0 %338
    %v356 = vsub.f32 %v90, %v309
    %v357 = vsub.f32 %v91, %v311
    %v358 = vsub.f32 %v92, %v313
    %v359 = vsub.f32 %v93, %v315
    %v360 = vsub.f32 %v94, %v317
    %v361 = vsub.f32 %v95, %v319
    %v362 = vsub.f32 %v96, %v321
    %v363 = vsub.f32 %v97, %v323
    %v364 = vsub.f32 %v98, %v325
    %v365 = vsub.f32 %v99, %v327
    %v366 = vsub.f32 %v100, %v329
    %v367 = vsub.f32 %v101, %v331
    %v368 = vsub.f32 %v102, %v333
    %v369 = vsub.f32 %v103, %v335
    %v370 = vsub.f32 %v104, %v337
    %v371 = vsub.f32 %v105, %v339
    %v372 = vand.u32 2147483647, %v356
    %v373 = vand.u32 2147483647, %v357
    %v374 = vand.u32 2147483647, %v358
    %v375 = vand.u32 2147483647, %v359
    %v376 = vand.u32 2147483647, %v360
    %v377 = vand.u32 2147483647, %v361
    %v378 = vand.u32 2147483647, %v362
    %v379 = vand.u32 2147483647, %v363
    %v380 = vand.u32 2147483647, %v364
    %v381 = vand.u32 2147483647, %v365
    %v382 = vand.u32 2147483647, %v366
    %v383 = vand.u32 2147483647, %v367
    %v384 = vand.u32 2147483647, %v368
    %v385 = vand.u32 2147483647, %v369
    %v386 = vand.u32 2147483647, %v370
    %v387 = vand.u32 2147483647, %v371
    %404 = vrot.lane.b32.xlu0 %v372, 127
    %v405 = vpop.permute.xlu0 %404
    %406 = vrot.lane.b32.xlu0 %v373, 127
    %v407 = vpop.permute.xlu0 %406
    %408 = vrot.lane.b32.xlu0 %v374, 127
    %v409 = vpop.permute.xlu0 %408
    %410 = vrot.lane.b32.xlu0 %v375, 127
    %v411 = vpop.permute.xlu0 %410
    %412 = vrot.lane.b32.xlu0 %v376, 127
    %v413 = vpop.permute.xlu0 %412
    %414 = vrot.lane.b32.xlu0 %v377, 127
    %v415 = vpop.permute.xlu0 %414
    %416 = vrot.lane.b32.xlu0 %v378, 127
    %v417 = vpop.permute.xlu0 %416
    %418 = vrot.lane.b32.xlu0 %v379, 127
    %v419 = vpop.permute.xlu0 %418
    %420 = vrot.lane.b32.xlu0 %v380, 127
    %v421 = vpop.permute.xlu0 %420
    %422 = vrot.lane.b32.xlu0 %v381, 127
    %v423 = vpop.permute.xlu0 %422
    %424 = vrot.lane.b32.xlu0 %v382, 127
    %v425 = vpop.permute.xlu0 %424
    %426 = vrot.lane.b32.xlu0 %v383, 127
    %v427 = vpop.permute.xlu0 %426
    %428 = vrot.lane.b32.xlu0 %v384, 127
    %v429 = vpop.permute.xlu0 %428
    %430 = vrot.lane.b32.xlu0 %v385, 127
    %v431 = vpop.permute.xlu0 %430
    %432 = vrot.lane.b32.xlu0 %v386, 127
    %v433 = vpop.permute.xlu0 %432
    %434 = vrot.lane.b32.xlu0 %v387, 127
    %v435 = vpop.permute.xlu0 %434
    %vm452 = vcmask 7168
    %v453 = vsel %vm452, %v405, 0.0
    %v454 = vsel %vm452, %v407, 0.0
    %v455 = vadd.f32 %v453, %v454
    %v456 = vsel %vm452, %v409, 0.0
    %v457 = vadd.f32 %v455, %v456
    %v458 = vsel %vm452, %v411, 0.0
    %v459 = vadd.f32 %v457, %v458
    %v460 = vsel %vm452, %v413, 0.0
    %v461 = vadd.f32 %v459, %v460
    %v462 = vsel %vm452, %v415, 0.0
    %v463 = vadd.f32 %v461, %v462
    %v464 = vsel %vm452, %v417, 0.0
    %v465 = vadd.f32 %v463, %v464
    %v466 = vsel %vm452, %v419, 0.0
    %v467 = vadd.f32 %v465, %v466
    %v468 = vsel %vm452, %v421, 0.0
    %v469 = vadd.f32 %v467, %v468
    %v470 = vsel %vm452, %v423, 0.0
    %v471 = vadd.f32 %v469, %v470
    %v472 = vsel %vm452, %v425, 0.0
    %v473 = vadd.f32 %v471, %v472
    %v474 = vsel %vm452, %v427, 0.0
    %v475 = vadd.f32 %v473, %v474
    %v476 = vsel %vm452, %v429, 0.0
    %v477 = vadd.f32 %v475, %v476
    %v478 = vsel %vm452, %v431, 0.0
    %v479 = vadd.f32 %v477, %v478
    %v480 = vsel %vm452, %v433, 0.0
    %v481 = vadd.f32 %v479, %v480
    %v482 = vsel %vm452, %v435, 0.0
    %v483 = vadd.f32 %v481, %v482
    %484 = vadd.xlane.f32.xlu0 %v483
    %v485 = vpop.xlane.xlu0 %484
    %v486 = vrot.slane %v485, 4
    %v487 = vadd.f32 %v485, %v486
    %v488 = vrot.slane %v487, 2
    %v489 = vadd.f32 %v487, %v488
    %v490 = vrot.slane %v489, 1
    %v491 = vadd.f32 %v489, %v490
    %s492 = vtos %v491
    %s493 = sadd.f32 %s307, %s492
    %494 = vrot.lane.b32.xlu0 %v372, 113
    %v495 = vpop.permute.xlu0 %494
    %496 = vrot.lane.b32.xlu0 %v373, 113
    %v497 = vpop.permute.xlu0 %496
    %498 = vrot.lane.b32.xlu0 %v374, 113
    %v499 = vpop.permute.xlu0 %498
    %500 = vrot.lane.b32.xlu0 %v375, 113
    %v501 = vpop.permute.xlu0 %500
    %502 = vrot.lane.b32.xlu0 %v376, 113
    %v503 = vpop.permute.xlu0 %502
    %504 = vrot.lane.b32.xlu0 %v377, 113
    %v505 = vpop.permute.xlu0 %504
    %506 = vrot.lane.b32.xlu0 %v378, 113
    %v507 = vpop.permute.xlu0 %506
    %508 = vrot.lane.b32.xlu0 %v379, 113
    %v509 = vpop.permute.xlu0 %508
    %510 = vrot.lane.b32.xlu0 %v380, 113
    %v511 = vpop.permute.xlu0 %510
    %512 = vrot.lane.b32.xlu0 %v381, 113
    %v513 = vpop.permute.xlu0 %512
    %514 = vrot.lane.b32.xlu0 %v382, 113
    %v515 = vpop.permute.xlu0 %514
    %516 = vrot.lane.b32.xlu0 %v383, 113
    %v517 = vpop.permute.xlu0 %516
    %518 = vrot.lane.b32.xlu0 %v384, 113
    %v519 = vpop.permute.xlu0 %518
    %520 = vrot.lane.b32.xlu0 %v385, 113
    %v521 = vpop.permute.xlu0 %520
    %522 = vrot.lane.b32.xlu0 %v386, 113
    %v523 = vpop.permute.xlu0 %522
    %524 = vrot.lane.b32.xlu0 %v387, 113
    %v525 = vpop.permute.xlu0 %524
    %v542 = vsel %vm452, %v495, 0.0
    %v543 = vsel %vm452, %v497, 0.0
    %v544 = vadd.f32 %v542, %v543
    %v545 = vsel %vm452, %v499, 0.0
    %v546 = vadd.f32 %v544, %v545
    %v547 = vsel %vm452, %v501, 0.0
    %v548 = vadd.f32 %v546, %v547
    %v549 = vsel %vm452, %v503, 0.0
    %v550 = vadd.f32 %v548, %v549
    %v551 = vsel %vm452, %v505, 0.0
    %v552 = vadd.f32 %v550, %v551
    %v553 = vsel %vm452, %v507, 0.0
    %v554 = vadd.f32 %v552, %v553
    %v555 = vsel %vm452, %v509, 0.0
    %v556 = vadd.f32 %v554, %v555
    %v557 = vsel %vm452, %v511, 0.0
    %v558 = vadd.f32 %v556, %v557
    %v559 = vsel %vm452, %v513, 0.0
    %v560 = vadd.f32 %v558, %v559
    %v561 = vsel %vm452, %v515, 0.0
    %v562 = vadd.f32 %v560, %v561
    %v563 = vsel %vm452, %v517, 0.0
    %v564 = vadd.f32 %v562, %v563
    %v565 = vsel %vm452, %v519, 0.0
    %v566 = vadd.f32 %v564, %v565
    %v567 = vsel %vm452, %v521, 0.0
    %v568 = vadd.f32 %v566, %v567
    %v569 = vsel %vm452, %v523, 0.0
    %v570 = vadd.f32 %v568, %v569
    %v571 = vsel %vm452, %v525, 0.0
    %v572 = vadd.f32 %v570, %v571
    %573 = vadd.xlane.f32.xlu0 %v572
    %v574 = vpop.xlane.xlu0 %573
    %v575 = vrot.slane %v574, 4
    %v576 = vadd.f32 %v574, %v575
    %v577 = vrot.slane %v576, 2
    %v578 = vadd.f32 %v576, %v577
    %v579 = vrot.slane %v578, 1
    %v580 = vadd.f32 %v578, %v579
    %s581 = vtos %v580
    %s582 = sadd.f32 %s493, %s581
    %vm583 = vcmask 1041408
    %v584 = vrot.slane %v90, 6
    %v585 = vrot.slane %v91, 6
    %v586 = vsel %vm583, %v584, %v585
    %v587 = vrot.slane %v92, 6
    %v588 = vrot.slane %v93, 6
    %v589 = vsel %vm583, %v587, %v588
    %v590 = vrot.slane %v94, 6
    %v591 = vrot.slane %v95, 6
    %v592 = vsel %vm583, %v590, %v591
    %v593 = vrot.slane %v96, 6
    %v594 = vrot.slane %v97, 6
    %v595 = vsel %vm583, %v593, %v594
    %v596 = vrot.slane %v98, 6
    %v597 = vrot.slane %v99, 6
    %v598 = vsel %vm583, %v596, %v597
    %v599 = vrot.slane %v100, 6
    %v600 = vrot.slane %v101, 6
    %v601 = vsel %vm583, %v599, %v600
    %v602 = vrot.slane %v102, 6
    %v603 = vrot.slane %v103, 6
    %v604 = vsel %vm583, %v602, %v603
    %v605 = vrot.slane %v104, 6
    %v606 = vrot.slane %v105, 6
    %v607 = vsel %vm583, %v605, %v606
    %v624 = vsub.f32 %v90, %v584
    %v625 = vsub.f32 %v91, %v586
    %v626 = vsub.f32 %v92, %v587
    %v627 = vsub.f32 %v93, %v589
    %v628 = vsub.f32 %v94, %v590
    %v629 = vsub.f32 %v95, %v592
    %v630 = vsub.f32 %v96, %v593
    %v631 = vsub.f32 %v97, %v595
    %v632 = vsub.f32 %v98, %v596
    %v633 = vsub.f32 %v99, %v598
    %v634 = vsub.f32 %v100, %v599
    %v635 = vsub.f32 %v101, %v601
    %v636 = vsub.f32 %v102, %v602
    %v637 = vsub.f32 %v103, %v604
    %v638 = vsub.f32 %v104, %v605
    %v639 = vsub.f32 %v105, %v607
    %v640 = vand.u32 2147483647, %v624
    %v641 = vand.u32 2147483647, %v625
    %v642 = vand.u32 2147483647, %v626
    %v643 = vand.u32 2147483647, %v627
    %v644 = vand.u32 2147483647, %v628
    %v645 = vand.u32 2147483647, %v629
    %v646 = vand.u32 2147483647, %v630
    %v647 = vand.u32 2147483647, %v631
    %v648 = vand.u32 2147483647, %v632
    %v649 = vand.u32 2147483647, %v633
    %v650 = vand.u32 2147483647, %v634
    %v651 = vand.u32 2147483647, %v635
    %v652 = vand.u32 2147483647, %v636
    %v653 = vand.u32 2147483647, %v637
    %v654 = vand.u32 2147483647, %v638
    %v655 = vand.u32 2147483647, %v639
    %vm672 = vcmask 1045504
    %v673 = vrot.slane %v640, 2
    %v674 = vrot.slane %v641, 2
    %v675 = vsel %vm672, %v673, %v674
    %v676 = vrot.slane %v642, 2
    %v677 = vrot.slane %v643, 2
    %v678 = vsel %vm672, %v676, %v677
    %v679 = vrot.slane %v644, 2
    %v680 = vrot.slane %v645, 2
    %v681 = vsel %vm672, %v679, %v680
    %v682 = vrot.slane %v646, 2
    %v683 = vrot.slane %v647, 2
    %v684 = vsel %vm672, %v682, %v683
    %v685 = vrot.slane %v648, 2
    %v686 = vrot.slane %v649, 2
    %v687 = vsel %vm672, %v685, %v686
    %v688 = vrot.slane %v650, 2
    %v689 = vrot.slane %v651, 2
    %v690 = vsel %vm672, %v688, %v689
    %v691 = vrot.slane %v652, 2
    %v692 = vrot.slane %v653, 2
    %v693 = vsel %vm672, %v691, %v692
    %v694 = vrot.slane %v654, 2
    %v695 = vrot.slane %v655, 2
    %v696 = vsel %vm672, %v694, %v695
    %vm713 = vcmask 130048
    %v714 = vsel %vm713, %v675, 0.0
    %vm715 = vcmask 128000
    %v716 = vsel %vm715, %v674, 0.0
    %v717 = vadd.f32 %v714, %v716
    %v718 = vsel %vm713, %v678, 0.0
    %v719 = vadd.f32 %v717, %v718
    %v720 = vsel %vm715, %v677, 0.0
    %v721 = vadd.f32 %v719, %v720
    %v722 = vsel %vm713, %v681, 0.0
    %v723 = vadd.f32 %v721, %v722
    %v724 = vsel %vm715, %v680, 0.0
    %v725 = vadd.f32 %v723, %v724
    %v726 = vsel %vm713, %v684, 0.0
    %v727 = vadd.f32 %v725, %v726
    %v728 = vsel %vm715, %v683, 0.0
    %v729 = vadd.f32 %v727, %v728
    %v730 = vsel %vm713, %v687, 0.0
    %v731 = vadd.f32 %v729, %v730
    %v732 = vsel %vm715, %v686, 0.0
    %v733 = vadd.f32 %v731, %v732
    %v734 = vsel %vm713, %v690, 0.0
    %v735 = vadd.f32 %v733, %v734
    %v736 = vsel %vm715, %v689, 0.0
    %v737 = vadd.f32 %v735, %v736
    %v738 = vsel %vm713, %v693, 0.0
    %v739 = vadd.f32 %v737, %v738
    %v740 = vsel %vm715, %v692, 0.0
    %v741 = vadd.f32 %v739, %v740
    %v742 = vsel %vm713, %v696, 0.0
    %v743 = vadd.f32 %v741, %v742
    %v744 = vsel %vm715, %v695, 0.0
    %v745 = vadd.f32 %v743, %v744
    %746 = vadd.xlane.f32.xlu0 %v745
    %v747 = vpop.xlane.xlu0 %746
    %v748 = vrot.slane %v747, 4
    %v749 = vadd.f32 %v747, %v748
    %v750 = vrot.slane %v749, 2
    %v751 = vadd.f32 %v749, %v750
    %v752 = vrot.slane %v751, 1
    %v753 = vadd.f32 %v751, %v752
    %s754 = vtos %v753
    %s755 = sadd.f32 %s582, %s754
    %v756 = vrot.slane %v90, 7
    %v757 = vrot.slane %v92, 7
    %v758 = vrot.slane %v94, 7
    %v759 = vrot.slane %v96, 7
    %v760 = vrot.slane %v98, 7
    %v761 = vrot.slane %v100, 7
    %v762 = vrot.slane %v102, 7
    %v763 = vrot.slane %v104, 7
    %v772 = vsub.f32 %v90, %v756
    %v773 = vsub.f32 %v92, %v757
    %v774 = vsub.f32 %v94, %v758
    %v775 = vsub.f32 %v96, %v759
    %v776 = vsub.f32 %v98, %v760
    %v777 = vsub.f32 %v100, %v761
    %v778 = vsub.f32 %v102, %v762
    %v779 = vsub.f32 %v104, %v763
    %v780 = vand.u32 2147483647, %v772
    %v781 = vand.u32 2147483647, %v773
    %v782 = vand.u32 2147483647, %v774
    %v783 = vand.u32 2147483647, %v775
    %v784 = vand.u32 2147483647, %v776
    %v785 = vand.u32 2147483647, %v777
    %v786 = vand.u32 2147483647, %v778
    %v787 = vand.u32 2147483647, %v779
    %v796 = vrot.slane %v780, 1
    %v797 = vrot.slane %v781, 1
    %v798 = vrot.slane %v782, 1
    %v799 = vrot.slane %v783, 1
    %v800 = vrot.slane %v784, 1
    %v801 = vrot.slane %v785, 1
    %v802 = vrot.slane %v786, 1
    %v803 = vrot.slane %v787, 1
    %vm812 = vcmask 122880
    %v813 = vsel %vm812, %v796, 0.0
    %v814 = vsel %vm812, %v797, 0.0
    %v815 = vadd.f32 %v813, %v814
    %v816 = vsel %vm812, %v798, 0.0
    %v817 = vadd.f32 %v815, %v816
    %v818 = vsel %vm812, %v799, 0.0
    %v819 = vadd.f32 %v817, %v818
    %v820 = vsel %vm812, %v800, 0.0
    %v821 = vadd.f32 %v819, %v820
    %v822 = vsel %vm812, %v801, 0.0
    %v823 = vadd.f32 %v821, %v822
    %v824 = vsel %vm812, %v802, 0.0
    %v825 = vadd.f32 %v823, %v824
    %v826 = vsel %vm812, %v803, 0.0
    %v827 = vadd.f32 %v825, %v826
    %828 = vadd.xlane.f32.xlu0 %v827
    %v829 = vpop.xlane.xlu0 %828
    %v830 = vrot.slane %v829, 4
    %v831 = vadd.f32 %v829, %v830
    %v832 = vrot.slane %v831, 2
    %v833 = vadd.f32 %v831, %v832
    %v834 = vrot.slane %v833, 1
    %v835 = vadd.f32 %v833, %v834
    %s836 = vtos %v835
    %s837 = sadd.f32 %s755, %s836
    %v838 = vrot.slane %v91, 7
    %v839 = vrot.slane %v93, 7
    %v840 = vrot.slane %v95, 7
    %v841 = vrot.slane %v97, 7
    %v842 = vrot.slane %v99, 7
    %v843 = vrot.slane %v101, 7
    %v844 = vrot.slane %v103, 7
    %v845 = vrot.slane %v105, 7
    %v854 = vsub.f32 %v91, %v838
    %v855 = vsub.f32 %v93, %v839
    %v856 = vsub.f32 %v95, %v840
    %v857 = vsub.f32 %v97, %v841
    %v858 = vsub.f32 %v99, %v842
    %v859 = vsub.f32 %v101, %v843
    %v860 = vsub.f32 %v103, %v844
    %v861 = vsub.f32 %v105, %v845
    %v862 = vand.u32 2147483647, %v854
    %v863 = vand.u32 2147483647, %v855
    %v864 = vand.u32 2147483647, %v856
    %v865 = vand.u32 2147483647, %v857
    %v866 = vand.u32 2147483647, %v858
    %v867 = vand.u32 2147483647, %v859
    %v868 = vand.u32 2147483647, %v860
    %v869 = vand.u32 2147483647, %v861
    %v878 = vrot.slane %v862, 7
    %v879 = vrot.slane %v863, 7
    %v880 = vrot.slane %v864, 7
    %v881 = vrot.slane %v865, 7
    %v882 = vrot.slane %v866, 7
    %v883 = vrot.slane %v867, 7
    %v884 = vrot.slane %v868, 7
    %v885 = vrot.slane %v869, 7
    %v894 = vsel %vm812, %v878, 0.0
    %v895 = vsel %vm812, %v879, 0.0
    %v896 = vadd.f32 %v894, %v895
    %v897 = vsel %vm812, %v880, 0.0
    %v898 = vadd.f32 %v896, %v897
    %v899 = vsel %vm812, %v881, 0.0
    %v900 = vadd.f32 %v898, %v899
    %v901 = vsel %vm812, %v882, 0.0
    %v902 = vadd.f32 %v900, %v901
    %v903 = vsel %vm812, %v883, 0.0
    %v904 = vadd.f32 %v902, %v903
    %v905 = vsel %vm812, %v884, 0.0
    %v906 = vadd.f32 %v904, %v905
    %v907 = vsel %vm812, %v885, 0.0
    %v908 = vadd.f32 %v906, %v907
    %909 = vadd.xlane.f32.xlu0 %v908
    %v910 = vpop.xlane.xlu0 %909
    %v911 = vrot.slane %v910, 4
    %v912 = vadd.f32 %v910, %v911
    %v913 = vrot.slane %v912, 2
    %v914 = vadd.f32 %v912, %v913
    %v915 = vrot.slane %v914, 1
    %v916 = vadd.f32 %v914, %v915
    %s917 = vtos %v916
    %s918 = sadd.f32 %s837, %s917
    %s919 = smul.f32 %s918, 0.5
    %v920 = vld [vmem:[%s2] sm:$0xff]
    %v921 = vld [vmem:[%s2 + $0x8] sm:$0xff]
    %v922 = vld [vmem:[%s2 + $0x10] sm:$0xff]
    %v923 = vld [vmem:[%s2 + $0x18] sm:$0xff]
    %v924 = vld [vmem:[%s2 + $0x20] sm:$0xff]
    %v925 = vld [vmem:[%s2 + $0x28] sm:$0xff]
    %v926 = vld [vmem:[%s2 + $0x30] sm:$0xff]
    %v927 = vld [vmem:[%s2 + $0x38] sm:$0xff]
    %v928 = vld [vmem:[%s4] sm:$0xff]
    %vm929 = vcmask 64512
    %v931 = vsel %vm929, %v920, 0
    %933 = vmatprep.subr.mxu0 0.0
    %934 = vmatpush1.msra.mxu0 %v928
    %935 = vmatprep.subr.mxu0 0.0
    %936 = vmatpush1.msra.mxu0 0.0
    %937 = vmatprep.subr.mxu0 0.0
    %938 = vmatpush1.msra.mxu0 0.0
    %939 = vmatprep.subr.mxu0 0.0
    %940 = vmatpush1.msra.mxu0 0.0
    %941 = vmatprep.subr.mxu0 0.0
    %942 = vmatpush1.msra.mxu0 0.0
    %943 = vmatprep.subr.mxu0 0.0
    %944 = vmatpush1.msra.mxu0 0.0
    %945 = vmatprep.subr.mxu0 0.0
    %946 = vmatpush1.msra.mxu0 0.0
    %947 = vmatprep.subr.mxu0 0.0
    %948 = vmatpush1.msra.mxu0 0.0
    %949 = vmatprep.subr.mxu0 0.0
    %950 = vmatpush1.msra.mxu0 0.0
    %951 = vmatprep.subr.mxu0 0.0
    %952 = vmatpush1.msra.mxu0 0.0
    %953 = vmatprep.subr.mxu0 0.0
    %954 = vmatpush1.msra.mxu0 0.0
    %955 = vmatprep.subr.mxu0 0.0
    %956 = vmatpush1.msra.mxu0 0.0
    %957 = vmatprep.subr.mxu0 0.0
    %958 = vmatpush1.msra.mxu0 0.0
    %959 = vmatprep.subr.mxu0 0.0
    %960 = vmatpush1.msra.mxu0 0.0
    %961 = vmatprep.subr.mxu0 0.0
    %962 = vmatpush1.msra.mxu0 0.0
    %963 = vmatprep.subr.mxu0 0.0
    %964 = vmatpush1.msra.mxu0 0.0
    %965 = vmatprep.subr.mxu0 0.0
    %966 = vmatpush1.msra.mxu0 0.0
    %967 = vmatprep.subr.mxu0 0.0
    %968 = vmatpush1.msra.mxu0 0.0
    %969 = vmatprep.subr.mxu0 0.0
    %970 = vmatpush1.msra.mxu0 0.0
    %971 = vmatprep.subr.mxu0 0.0
    %972 = vmatpush1.msra.mxu0 0.0
    %973 = vmatprep.subr.mxu0 0.0
    %974 = vmatpush1.msra.mxu0 0.0
    %975 = vmatprep.subr.mxu0 0.0
    %976 = vmatpush1.msra.mxu0 0.0
    %977 = vmatprep.subr.mxu0 0.0
    %978 = vmatpush1.msra.mxu0 0.0
    %979 = vmatprep.subr.mxu0 0.0
    %980 = vmatpush1.msra.mxu0 0.0
    %981 = vmatprep.subr.mxu0 0.0
    %982 = vmatpush1.msra.mxu0 0.0
    %983 = vmatprep.subr.mxu0 0.0
    %984 = vmatpush1.msra.mxu0 0.0
    %985 = vmatprep.subr.mxu0 0.0
    %986 = vmatpush1.msra.mxu0 0.0
    %987 = vmatprep.subr.mxu0 0.0
    %988 = vmatpush1.msra.mxu0 0.0
    %989 = vmatprep.subr.mxu0 0.0
    %990 = vmatpush1.msra.mxu0 0.0
    %991 = vmatprep.subr.mxu0 0.0
    %992 = vmatpush1.msra.mxu0 0.0
    %993 = vmatprep.subr.mxu0 0.0
    %994 = vmatpush1.msra.mxu0 0.0
    %995 = vmatprep.subr.mxu0 0.0
    %996 = vmatpush1.msra.mxu0 0.0
    %997 = vmatprep.mubr.f32.mxu0 0.0
    %998 = vmatmul.mubr.f32.gmra.mrb[0].mxu0 %v931
    %v999 = vpop.f32.mrb[0].mxu0
    %v1000 = vadd.f32 0.0, %v999
    %v1001 = vpop.f32.mrb[0].mxu0
    %1002 = vdwg.mxu0
    %v1004 = vsel %vm929, %v921, 0
    %1006 = vmatprep.subr.mxu0 0.0
    %1007 = vmatpush1.msra.mxu0 %v928
    %1008 = vmatprep.subr.mxu0 0.0
    %1009 = vmatpush1.msra.mxu0 0.0
    %1010 = vmatprep.subr.mxu0 0.0
    %1011 = vmatpush1.msra.mxu0 0.0
    %1012 = vmatprep.subr.mxu0 0.0
    %1013 = vmatpush1.msra.mxu0 0.0
    %1014 = vmatprep.subr.mxu0 0.0
    %1015 = vmatpush1.msra.mxu0 0.0
    %1016 = vmatprep.subr.mxu0 0.0
    %1017 = vmatpush1.msra.mxu0 0.0
    %1018 = vmatprep.subr.mxu0 0.0
    %1019 = vmatpush1.msra.mxu0 0.0
    %1020 = vmatprep.subr.mxu0 0.0
    %1021 = vmatpush1.msra.mxu0 0.0
    %1022 = vmatprep.subr.mxu0 0.0
    %1023 = vmatpush1.msra.mxu0 0.0
    %1024 = vmatprep.subr.mxu0 0.0
    %1025 = vmatpush1.msra.mxu0 0.0
    %1026 = vmatprep.subr.mxu0 0.0
    %1027 = vmatpush1.msra.mxu0 0.0
    %1028 = vmatprep.subr.mxu0 0.0
    %1029 = vmatpush1.msra.mxu0 0.0
    %1030 = vmatprep.subr.mxu0 0.0
    %1031 = vmatpush1.msra.mxu0 0.0
    %1032 = vmatprep.subr.mxu0 0.0
    %1033 = vmatpush1.msra.mxu0 0.0
    %1034 = vmatprep.subr.mxu0 0.0
    %1035 = vmatpush1.msra.mxu0 0.0
    %1036 = vmatprep.subr.mxu0 0.0
    %1037 = vmatpush1.msra.mxu0 0.0
    %1038 = vmatprep.subr.mxu0 0.0
    %1039 = vmatpush1.msra.mxu0 0.0
    %1040 = vmatprep.subr.mxu0 0.0
    %1041 = vmatpush1.msra.mxu0 0.0
    %1042 = vmatprep.subr.mxu0 0.0
    %1043 = vmatpush1.msra.mxu0 0.0
    %1044 = vmatprep.subr.mxu0 0.0
    %1045 = vmatpush1.msra.mxu0 0.0
    %1046 = vmatprep.subr.mxu0 0.0
    %1047 = vmatpush1.msra.mxu0 0.0
    %1048 = vmatprep.subr.mxu0 0.0
    %1049 = vmatpush1.msra.mxu0 0.0
    %1050 = vmatprep.subr.mxu0 0.0
    %1051 = vmatpush1.msra.mxu0 0.0
    %1052 = vmatprep.subr.mxu0 0.0
    %1053 = vmatpush1.msra.mxu0 0.0
    %1054 = vmatprep.subr.mxu0 0.0
    %1055 = vmatpush1.msra.mxu0 0.0
    %1056 = vmatprep.subr.mxu0 0.0
    %1057 = vmatpush1.msra.mxu0 0.0
    %1058 = vmatprep.subr.mxu0 0.0
    %1059 = vmatpush1.msra.mxu0 0.0
    %1060 = vmatprep.subr.mxu0 0.0
    %1061 = vmatpush1.msra.mxu0 0.0
    %1062 = vmatprep.subr.mxu0 0.0
    %1063 = vmatpush1.msra.mxu0 0.0
    %1064 = vmatprep.subr.mxu0 0.0
    %1065 = vmatpush1.msra.mxu0 0.0
    %1066 = vmatprep.subr.mxu0 0.0
    %1067 = vmatpush1.msra.mxu0 0.0
    %1068 = vmatprep.subr.mxu0 0.0
    %1069 = vmatpush1.msra.mxu0 0.0
    %1070 = vmatprep.mubr.f32.mxu0 0.0
    %1071 = vmatmul.mubr.f32.gmra.mrb[0].mxu0 %v1004
    %v1072 = vpop.f32.mrb[0].mxu0
    %v1073 = vadd.f32 0.0, %v1072
    %v1074 = vpop.f32.mrb[0].mxu0
    %1075 = vdwg.mxu0
    %v1077 = vsel %vm929, %v922, 0
    %1079 = vmatprep.subr.mxu0 0.0
    %1080 = vmatpush1.msra.mxu0 %v928
    %1081 = vmatprep.subr.mxu0 0.0
    %1082 = vmatpush1.msra.mxu0 0.0
    %1083 = vmatprep.subr.mxu0 0.0
    %1084 = vmatpush1.msra.mxu0 0.0
    %1085 = vmatprep.subr.mxu0 0.0
    %1086 = vmatpush1.msra.mxu0 0.0
    %1087 = vmatprep.subr.mxu0 0.0
    %1088 = vmatpush1.msra.mxu0 0.0
    %1089 = vmatprep.subr.mxu0 0.0
    %1090 = vmatpush1.msra.mxu0 0.0
    %1091 = vmatprep.subr.mxu0 0.0
    %1092 = vmatpush1.msra.mxu0 0.0
    %1093 = vmatprep.subr.mxu0 0.0
    %1094 = vmatpush1.msra.mxu0 0.0
    %1095 = vmatprep.subr.mxu0 0.0
    %1096 = vmatpush1.msra.mxu0 0.0
    %1097 = vmatprep.subr.mxu0 0.0
    %1098 = vmatpush1.msra.mxu0 0.0
    %1099 = vmatprep.subr.mxu0 0.0
    %1100 = vmatpush1.msra.mxu0 0.0
    %1101 = vmatprep.subr.mxu0 0.0
    %1102 = vmatpush1.msra.mxu0 0.0
    %1103 = vmatprep.subr.mxu0 0.0
    %1104 = vmatpush1.msra.mxu0 0.0
    %1105 = vmatprep.subr.mxu0 0.0
    %1106 = vmatpush1.msra.mxu0 0.0
    %1107 = vmatprep.subr.mxu0 0.0
    %1108 = vmatpush1.msra.mxu0 0.0
    %1109 = vmatprep.subr.mxu0 0.0
    %1110 = vmatpush1.msra.mxu0 0.0
    %1111 = vmatprep.subr.mxu0 0.0
    %1112 = vmatpush1.msra.mxu0 0.0
    %1113 = vmatprep.subr.mxu0 0.0
    %1114 = vmatpush1.msra.mxu0 0.0
    %1115 = vmatprep.subr.mxu0 0.0
    %1116 = vmatpush1.msra.mxu0 0.0
    %1117 = vmatprep.subr.mxu0 0.0
    %1118 = vmatpush1.msra.mxu0 0.0
    %1119 = vmatprep.subr.mxu0 0.0
    %1120 = vmatpush1.msra.mxu0 0.0
    %1121 = vmatprep.subr.mxu0 0.0
    %1122 = vmatpush1.msra.mxu0 0.0
    %1123 = vmatprep.subr.mxu0 0.0
    %1124 = vmatpush1.msra.mxu0 0.0
    %1125 = vmatprep.subr.mxu0 0.0
    %1126 = vmatpush1.msra.mxu0 0.0
    %1127 = vmatprep.subr.mxu0 0.0
    %1128 = vmatpush1.msra.mxu0 0.0
    %1129 = vmatprep.subr.mxu0 0.0
    %1130 = vmatpush1.msra.mxu0 0.0
    %1131 = vmatprep.subr.mxu0 0.0
    %1132 = vmatpush1.msra.mxu0 0.0
    %1133 = vmatprep.subr.mxu0 0.0
    %1134 = vmatpush1.msra.mxu0 0.0
    %1135 = vmatprep.subr.mxu0 0.0
    %1136 = vmatpush1.msra.mxu0 0.0
    %1137 = vmatprep.subr.mxu0 0.0
    %1138 = vmatpush1.msra.mxu0 0.0
    %1139 = vmatprep.subr.mxu0 0.0
    %1140 = vmatpush1.msra.mxu0 0.0
    %1141 = vmatprep.subr.mxu0 0.0
    %1142 = vmatpush1.msra.mxu0 0.0
    %1143 = vmatprep.mubr.f32.mxu0 0.0
    %1144 = vmatmul.mubr.f32.gmra.mrb[0].mxu0 %v1077
    %v1145 = vpop.f32.mrb[0].mxu0
    %v1146 = vadd.f32 0.0, %v1145
    %v1147 = vpop.f32.mrb[0].mxu0
    %1148 = vdwg.mxu0
    %v1150 = vsel %vm929, %v923, 0
    %1152 = vmatprep.subr.mxu0 0.0
    %1153 = vmatpush1.msra.mxu0 %v928
    %1154 = vmatprep.subr.mxu0 0.0
    %1155 = vmatpush1.msra.mxu0 0.0
    %1156 = vmatprep.subr.mxu0 0.0
    %1157 = vmatpush1.msra.mxu0 0.0
    %1158 = vmatprep.subr.mxu0 0.0
    %1159 = vmatpush1.msra.mxu0 0.0
    %1160 = vmatprep.subr.mxu0 0.0
    %1161 = vmatpush1.msra.mxu0 0.0
    %1162 = vmatprep.subr.mxu0 0.0
    %1163 = vmatpush1.msra.mxu0 0.0
    %1164 = vmatprep.subr.mxu0 0.0
    %1165 = vmatpush1.msra.mxu0 0.0
    %1166 = vmatprep.subr.mxu0 0.0
    %1167 = vmatpush1.msra.mxu0 0.0
    %1168 = vmatprep.subr.mxu0 0.0
    %1169 = vmatpush1.msra.mxu0 0.0
    %1170 = vmatprep.subr.mxu0 0.0
    %1171 = vmatpush1.msra.mxu0 0.0
    %1172 = vmatprep.subr.mxu0 0.0
    %1173 = vmatpush1.msra.mxu0 0.0
    %1174 = vmatprep.subr.mxu0 0.0
    %1175 = vmatpush1.msra.mxu0 0.0
    %1176 = vmatprep.subr.mxu0 0.0
    %1177 = vmatpush1.msra.mxu0 0.0
    %1178 = vmatprep.subr.mxu0 0.0
    %1179 = vmatpush1.msra.mxu0 0.0
    %1180 = vmatprep.subr.mxu0 0.0
    %1181 = vmatpush1.msra.mxu0 0.0
    %1182 = vmatprep.subr.mxu0 0.0
    %1183 = vmatpush1.msra.mxu0 0.0
    %1184 = vmatprep.subr.mxu0 0.0
    %1185 = vmatpush1.msra.mxu0 0.0
    %1186 = vmatprep.subr.mxu0 0.0
    %1187 = vmatpush1.msra.mxu0 0.0
    %1188 = vmatprep.subr.mxu0 0.0
    %1189 = vmatpush1.msra.mxu0 0.0
    %1190 = vmatprep.subr.mxu0 0.0
    %1191 = vmatpush1.msra.mxu0 0.0
    %1192 = vmatprep.subr.mxu0 0.0
    %1193 = vmatpush1.msra.mxu0 0.0
    %1194 = vmatprep.subr.mxu0 0.0
    %1195 = vmatpush1.msra.mxu0 0.0
    %1196 = vmatprep.subr.mxu0 0.0
    %1197 = vmatpush1.msra.mxu0 0.0
    %1198 = vmatprep.subr.mxu0 0.0
    %1199 = vmatpush1.msra.mxu0 0.0
    %1200 = vmatprep.subr.mxu0 0.0
    %1201 = vmatpush1.msra.mxu0 0.0
    %1202 = vmatprep.subr.mxu0 0.0
    %1203 = vmatpush1.msra.mxu0 0.0
    %1204 = vmatprep.subr.mxu0 0.0
    %1205 = vmatpush1.msra.mxu0 0.0
    %1206 = vmatprep.subr.mxu0 0.0
    %1207 = vmatpush1.msra.mxu0 0.0
    %1208 = vmatprep.subr.mxu0 0.0
    %1209 = vmatpush1.msra.mxu0 0.0
    %1210 = vmatprep.subr.mxu0 0.0
    %1211 = vmatpush1.msra.mxu0 0.0
    %1212 = vmatprep.subr.mxu0 0.0
    %1213 = vmatpush1.msra.mxu0 0.0
    %1214 = vmatprep.subr.mxu0 0.0
    %1215 = vmatpush1.msra.mxu0 0.0
    %1216 = vmatprep.mubr.f32.mxu0 0.0
    %1217 = vmatmul.mubr.f32.gmra.mrb[0].mxu0 %v1150
    %v1218 = vpop.f32.mrb[0].mxu0
    %v1219 = vadd.f32 0.0, %v1218
    %v1220 = vpop.f32.mrb[0].mxu0
    %1221 = vdwg.mxu0
    %v1223 = vsel %vm929, %v924, 0
    %1225 = vmatprep.subr.mxu0 0.0
    %1226 = vmatpush1.msra.mxu0 %v928
    %1227 = vmatprep.subr.mxu0 0.0
    %1228 = vmatpush1.msra.mxu0 0.0
    %1229 = vmatprep.subr.mxu0 0.0
    %1230 = vmatpush1.msra.mxu0 0.0
    %1231 = vmatprep.subr.mxu0 0.0
    %1232 = vmatpush1.msra.mxu0 0.0
    %1233 = vmatprep.subr.mxu0 0.0
    %1234 = vmatpush1.msra.mxu0 0.0
    %1235 = vmatprep.subr.mxu0 0.0
    %1236 = vmatpush1.msra.mxu0 0.0
    %1237 = vmatprep.subr.mxu0 0.0
    %1238 = vmatpush1.msra.mxu0 0.0
    %1239 = vmatprep.subr.mxu0 0.0
    %1240 = vmatpush1.msra.mxu0 0.0
    %1241 = vmatprep.subr.mxu0 0.0
    %1242 = vmatpush1.msra.mxu0 0.0
    %1243 = vmatprep.subr.mxu0 0.0
    %1244 = vmatpush1.msra.mxu0 0.0
    %1245 = vmatprep.subr.mxu0 0.0
    %1246 = vmatpush1.msra.mxu0 0.0
    %1247 = vmatprep.subr.mxu0 0.0
    %1248 = vmatpush1.msra.mxu0 0.0
    %1249 = vmatprep.subr.mxu0 0.0
    %1250 = vmatpush1.msra.mxu0 0.0
    %1251 = vmatprep.subr.mxu0 0.0
    %1252 = vmatpush1.msra.mxu0 0.0
    %1253 = vmatprep.subr.mxu0 0.0
    %1254 = vmatpush1.msra.mxu0 0.0
    %1255 = vmatprep.subr.mxu0 0.0
    %1256 = vmatpush1.msra.mxu0 0.0
    %1257 = vmatprep.subr.mxu0 0.0
    %1258 = vmatpush1.msra.mxu0 0.0
    %1259 = vmatprep.subr.mxu0 0.0
    %1260 = vmatpush1.msra.mxu0 0.0
    %1261 = vmatprep.subr.mxu0 0.0
    %1262 = vmatpush1.msra.mxu0 0.0
    %1263 = vmatprep.subr.mxu0 0.0
    %1264 = vmatpush1.msra.mxu0 0.0
    %1265 = vmatprep.subr.mxu0 0.0
    %1266 = vmatpush1.msra.mxu0 0.0
    %1267 = vmatprep.subr.mxu0 0.0
    %1268 = vmatpush1.msra.mxu0 0.0
    %1269 = vmatprep.subr.mxu0 0.0
    %1270 = vmatpush1.msra.mxu0 0.0
    %1271 = vmatprep.subr.mxu0 0.0
    %1272 = vmatpush1.msra.mxu0 0.0
    %1273 = vmatprep.subr.mxu0 0.0
    %1274 = vmatpush1.msra.mxu0 0.0
    %1275 = vmatprep.subr.mxu0 0.0
    %1276 = vmatpush1.msra.mxu0 0.0
    %1277 = vmatprep.subr.mxu0 0.0
    %1278 = vmatpush1.msra.mxu0 0.0
    %1279 = vmatprep.subr.mxu0 0.0
    %1280 = vmatpush1.msra.mxu0 0.0
    %1281 = vmatprep.subr.mxu0 0.0
    %1282 = vmatpush1.msra.mxu0 0.0
    %1283 = vmatprep.subr.mxu0 0.0
    %1284 = vmatpush1.msra.mxu0 0.0
    %1285 = vmatprep.subr.mxu0 0.0
    %1286 = vmatpush1.msra.mxu0 0.0
    %1287 = vmatprep.subr.mxu0 0.0
    %1288 = vmatpush1.msra.mxu0 0.0
    %1289 = vmatprep.mubr.f32.mxu0 0.0
    %1290 = vmatmul.mubr.f32.gmra.mrb[0].mxu0 %v1223
    %v1291 = vpop.f32.mrb[0].mxu0
    %v1292 = vadd.f32 0.0, %v1291
    %v1293 = vpop.f32.mrb[0].mxu0
    %1294 = vdwg.mxu0
    %v1296 = vsel %vm929, %v925, 0
    %1298 = vmatprep.subr.mxu0 0.0
    %1299 = vmatpush1.msra.mxu0 %v928
    %1300 = vmatprep.subr.mxu0 0.0
    %1301 = vmatpush1.msra.mxu0 0.0
    %1302 = vmatprep.subr.mxu0 0.0
    %1303 = vmatpush1.msra.mxu0 0.0
    %1304 = vmatprep.subr.mxu0 0.0
    %1305 = vmatpush1.msra.mxu0 0.0
    %1306 = vmatprep.subr.mxu0 0.0
    %1307 = vmatpush1.msra.mxu0 0.0
    %1308 = vmatprep.subr.mxu0 0.0
    %1309 = vmatpush1.msra.mxu0 0.0
    %1310 = vmatprep.subr.mxu0 0.0
    %1311 = vmatpush1.msra.mxu0 0.0
    %1312 = vmatprep.subr.mxu0 0.0
    %1313 = vmatpush1.msra.mxu0 0.0
    %1314 = vmatprep.subr.mxu0 0.0
    %1315 = vmatpush1.msra.mxu0 0.0
    %1316 = vmatprep.subr.mxu0 0.0
    %1317 = vmatpush1.msra.mxu0 0.0
    %1318 = vmatprep.subr.mxu0 0.0
    %1319 = vmatpush1.msra.mxu0 0.0
    %1320 = vmatprep.subr.mxu0 0.0
    %1321 = vmatpush1.msra.mxu0 0.0
    %1322 = vmatprep.subr.mxu0 0.0
    %1323 = vmatpush1.msra.mxu0 0.0
    %1324 = vmatprep.subr.mxu0 0.0
    %1325 = vmatpush1.msra.mxu0 0.0
    %1326 = vmatprep.subr.mxu0 0.0
    %1327 = vmatpush1.msra.mxu0 0.0
    %1328 = vmatprep.subr.mxu0 0.0
    %1329 = vmatpush1.msra.mxu0 0.0
    %1330 = vmatprep.subr.mxu0 0.0
    %1331 = vmatpush1.msra.mxu0 0.0
    %1332 = vmatprep.subr.mxu0 0.0
    %1333 = vmatpush1.msra.mxu0 0.0
    %1334 = vmatprep.subr.mxu0 0.0
    %1335 = vmatpush1.msra.mxu0 0.0
    %1336 = vmatprep.subr.mxu0 0.0
    %1337 = vmatpush1.msra.mxu0 0.0
    %1338 = vmatprep.subr.mxu0 0.0
    %1339 = vmatpush1.msra.mxu0 0.0
    %1340 = vmatprep.subr.mxu0 0.0
    %1341 = vmatpush1.msra.mxu0 0.0
    %1342 = vmatprep.subr.mxu0 0.0
    %1343 = vmatpush1.msra.mxu0 0.0
    %1344 = vmatprep.subr.mxu0 0.0
    %1345 = vmatpush1.msra.mxu0 0.0
    %1346 = vmatprep.subr.mxu0 0.0
    %1347 = vmatpush1.msra.mxu0 0.0
    %1348 = vmatprep.subr.mxu0 0.0
    %1349 = vmatpush1.msra.mxu0 0.0
    %1350 = vmatprep.subr.mxu0 0.0
    %1351 = vmatpush1.msra.mxu0 0.0
    %1352 = vmatprep.subr.mxu0 0.0
    %1353 = vmatpush1.msra.mxu0 0.0
    %1354 = vmatprep.subr.mxu0 0.0
    %1355 = vmatpush1.msra.mxu0 0.0
    %1356 = vmatprep.subr.mxu0 0.0
    %1357 = vmatpush1.msra.mxu0 0.0
    %1358 = vmatprep.subr.mxu0 0.0
    %1359 = vmatpush1.msra.mxu0 0.0
    %1360 = vmatprep.subr.mxu0 0.0
    %1361 = vmatpush1.msra.mxu0 0.0
    %1362 = vmatprep.mubr.f32.mxu0 0.0
    %1363 = vmatmul.mubr.f32.gmra.mrb[0].mxu0 %v1296
    %v1364 = vpop.f32.mrb[0].mxu0
    %v1365 = vadd.f32 0.0, %v1364
    %v1366 = vpop.f32.mrb[0].mxu0
    %1367 = vdwg.mxu0
    %v1369 = vsel %vm929, %v926, 0
    %1371 = vmatprep.subr.mxu0 0.0
    %1372 = vmatpush1.msra.mxu0 %v928
    %1373 = vmatprep.subr.mxu0 0.0
    %1374 = vmatpush1.msra.mxu0 0.0
    %1375 = vmatprep.subr.mxu0 0.0
    %1376 = vmatpush1.msra.mxu0 0.0
    %1377 = vmatprep.subr.mxu0 0.0
    %1378 = vmatpush1.msra.mxu0 0.0
    %1379 = vmatprep.subr.mxu0 0.0
    %1380 = vmatpush1.msra.mxu0 0.0
    %1381 = vmatprep.subr.mxu0 0.0
    %1382 = vmatpush1.msra.mxu0 0.0
    %1383 = vmatprep.subr.mxu0 0.0
    %1384 = vmatpush1.msra.mxu0 0.0
    %1385 = vmatprep.subr.mxu0 0.0
    %1386 = vmatpush1.msra.mxu0 0.0
    %1387 = vmatprep.subr.mxu0 0.0
    %1388 = vmatpush1.msra.mxu0 0.0
    %1389 = vmatprep.subr.mxu0 0.0
    %1390 = vmatpush1.msra.mxu0 0.0
    %1391 = vmatprep.subr.mxu0 0.0
    %1392 = vmatpush1.msra.mxu0 0.0
    %1393 = vmatprep.subr.mxu0 0.0
    %1394 = vmatpush1.msra.mxu0 0.0
    %1395 = vmatprep.subr.mxu0 0.0
    %1396 = vmatpush1.msra.mxu0 0.0
    %1397 = vmatprep.subr.mxu0 0.0
    %1398 = vmatpush1.msra.mxu0 0.0
    %1399 = vmatprep.subr.mxu0 0.0
    %1400 = vmatpush1.msra.mxu0 0.0
    %1401 = vmatprep.subr.mxu0 0.0
    %1402 = vmatpush1.msra.mxu0 0.0
    %1403 = vmatprep.subr.mxu0 0.0
    %1404 = vmatpush1.msra.mxu0 0.0
    %1405 = vmatprep.subr.mxu0 0.0
    %1406 = vmatpush1.msra.mxu0 0.0
    %1407 = vmatprep.subr.mxu0 0.0
    %1408 = vmatpush1.msra.mxu0 0.0
    %1409 = vmatprep.subr.mxu0 0.0
    %1410 = vmatpush1.msra.mxu0 0.0
    %1411 = vmatprep.subr.mxu0 0.0
    %1412 = vmatpush1.msra.mxu0 0.0
    %1413 = vmatprep.subr.mxu0 0.0
    %1414 = vmatpush1.msra.mxu0 0.0
    %1415 = vmatprep.subr.mxu0 0.0
    %1416 = vmatpush1.msra.mxu0 0.0
    %1417 = vmatprep.subr.mxu0 0.0
    %1418 = vmatpush1.msra.mxu0 0.0
    %1419 = vmatprep.subr.mxu0 0.0
    %1420 = vmatpush1.msra.mxu0 0.0
    %1421 = vmatprep.subr.mxu0 0.0
    %1422 = vmatpush1.msra.mxu0 0.0
    %1423 = vmatprep.subr.mxu0 0.0
    %1424 = vmatpush1.msra.mxu0 0.0
    %1425 = vmatprep.subr.mxu0 0.0
    %1426 = vmatpush1.msra.mxu0 0.0
    %1427 = vmatprep.subr.mxu0 0.0
    %1428 = vmatpush1.msra.mxu0 0.0
    %1429 = vmatprep.subr.mxu0 0.0
    %1430 = vmatpush1.msra.mxu0 0.0
    %1431 = vmatprep.subr.mxu0 0.0
    %1432 = vmatpush1.msra.mxu0 0.0
    %1433 = vmatprep.subr.mxu0 0.0
    %1434 = vmatpush1.msra.mxu0 0.0
    %1435 = vmatprep.mubr.f32.mxu0 0.0
    %1436 = vmatmul.mubr.f32.gmra.mrb[0].mxu0 %v1369
    %v1437 = vpop.f32.mrb[0].mxu0
    %v1438 = vadd.f32 0.0, %v1437
    %v1439 = vpop.f32.mrb[0].mxu0
    %1440 = vdwg.mxu0
    %v1442 = vsel %vm929, %v927, 0
    %1444 = vmatprep.subr.mxu0 0.0
    %1445 = vmatpush1.msra.mxu0 %v928
    %1446 = vmatprep.subr.mxu0 0.0
    %1447 = vmatpush1.msra.mxu0 0.0
    %1448 = vmatprep.subr.mxu0 0.0
    %1449 = vmatpush1.msra.mxu0 0.0
    %1450 = vmatprep.subr.mxu0 0.0
    %1451 = vmatpush1.msra.mxu0 0.0
    %1452 = vmatprep.subr.mxu0 0.0
    %1453 = vmatpush1.msra.mxu0 0.0
    %1454 = vmatprep.subr.mxu0 0.0
    %1455 = vmatpush1.msra.mxu0 0.0
    %1456 = vmatprep.subr.mxu0 0.0
    %1457 = vmatpush1.msra.mxu0 0.0
    %1458 = vmatprep.subr.mxu0 0.0
    %1459 = vmatpush1.msra.mxu0 0.0
    %1460 = vmatprep.subr.mxu0 0.0
    %1461 = vmatpush1.msra.mxu0 0.0
    %1462 = vmatprep.subr.mxu0 0.0
    %1463 = vmatpush1.msra.mxu0 0.0
    %1464 = vmatprep.subr.mxu0 0.0
    %1465 = vmatpush1.msra.mxu0 0.0
    %1466 = vmatprep.subr.mxu0 0.0
    %1467 = vmatpush1.msra.mxu0 0.0
    %1468 = vmatprep.subr.mxu0 0.0
    %1469 = vmatpush1.msra.mxu0 0.0
    %1470 = vmatprep.subr.mxu0 0.0
    %1471 = vmatpush1.msra.mxu0 0.0
    %1472 = vmatprep.subr.mxu0 0.0
    %1473 = vmatpush1.msra.mxu0 0.0
    %1474 = vmatprep.subr.mxu0 0.0
    %1475 = vmatpush1.msra.mxu0 0.0
    %1476 = vmatprep.subr.mxu0 0.0
    %1477 = vmatpush1.msra.mxu0 0.0
    %1478 = vmatprep.subr.mxu0 0.0
    %1479 = vmatpush1.msra.mxu0 0.0
    %1480 = vmatprep.subr.mxu0 0.0
    %1481 = vmatpush1.msra.mxu0 0.0
    %1482 = vmatprep.subr.mxu0 0.0
    %1483 = vmatpush1.msra.mxu0 0.0
    %1484 = vmatprep.subr.mxu0 0.0
    %1485 = vmatpush1.msra.mxu0 0.0
    %1486 = vmatprep.subr.mxu0 0.0
    %1487 = vmatpush1.msra.mxu0 0.0
    %1488 = vmatprep.subr.mxu0 0.0
    %1489 = vmatpush1.msra.mxu0 0.0
    %1490 = vmatprep.subr.mxu0 0.0
    %1491 = vmatpush1.msra.mxu0 0.0
    %1492 = vmatprep.subr.mxu0 0.0
    %1493 = vmatpush1.msra.mxu0 0.0
    %1494 = vmatprep.subr.mxu0 0.0
    %1495 = vmatpush1.msra.mxu0 0.0
    %1496 = vmatprep.subr.mxu0 0.0
    %1497 = vmatpush1.msra.mxu0 0.0
    %1498 = vmatprep.subr.mxu0 0.0
    %1499 = vmatpush1.msra.mxu0 0.0
    %1500 = vmatprep.subr.mxu0 0.0
    %1501 = vmatpush1.msra.mxu0 0.0
    %1502 = vmatprep.subr.mxu0 0.0
    %1503 = vmatpush1.msra.mxu0 0.0
    %1504 = vmatprep.subr.mxu0 0.0
    %1505 = vmatpush1.msra.mxu0 0.0
    %1506 = vmatprep.subr.mxu0 0.0
    %1507 = vmatpush1.msra.mxu0 0.0
    %1508 = vmatprep.mubr.f32.mxu0 0.0
    %1509 = vmatmul.mubr.f32.gmra.mrb[0].mxu0 %v1442
    %v1510 = vpop.f32.mrb[0].mxu0
    %v1511 = vadd.f32 0.0, %v1510
    %v1512 = vpop.f32.mrb[0].mxu0
    %1513 = vdwg.mxu0
    %v1514 = vld [vmem:[%s3] sm:$0xff]
    %v1515 = vld [vmem:[%s3 + $0x8] sm:$0xff]
    %v1517 = vsel %vm929, %v1514, 0
    %v1520 = vsel %vm929, %v1515, 0
    %1522 = vmatprep.subr.mxu0 0.0
    %1523 = vmatpush1.msra.mxu0 %v1000
    %1524 = vmatprep.subr.mxu0 0.0
    %1525 = vmatpush1.msra.mxu0 0.0
    %1526 = vmatprep.subr.mxu0 0.0
    %1527 = vmatpush1.msra.mxu0 0.0
    %1528 = vmatprep.subr.mxu0 0.0
    %1529 = vmatpush1.msra.mxu0 0.0
    %1530 = vmatprep.subr.mxu0 0.0
    %1531 = vmatpush1.msra.mxu0 0.0
    %1532 = vmatprep.subr.mxu0 0.0
    %1533 = vmatpush1.msra.mxu0 0.0
    %1534 = vmatprep.subr.mxu0 0.0
    %1535 = vmatpush1.msra.mxu0 0.0
    %1536 = vmatprep.subr.mxu0 0.0
    %1537 = vmatpush1.msra.mxu0 0.0
    %1538 = vmatprep.subr.mxu0 0.0
    %1539 = vmatpush1.msra.mxu0 0.0
    %1540 = vmatprep.subr.mxu0 0.0
    %1541 = vmatpush1.msra.mxu0 0.0
    %1542 = vmatprep.subr.mxu0 0.0
    %1543 = vmatpush1.msra.mxu0 0.0
    %1544 = vmatprep.subr.mxu0 0.0
    %1545 = vmatpush1.msra.mxu0 0.0
    %1546 = vmatprep.subr.mxu0 0.0
    %1547 = vmatpush1.msra.mxu0 0.0
    %1548 = vmatprep.subr.mxu0 0.0
    %1549 = vmatpush1.msra.mxu0 0.0
    %1550 = vmatprep.subr.mxu0 0.0
    %1551 = vmatpush1.msra.mxu0 0.0
    %1552 = vmatprep.subr.mxu0 0.0
    %1553 = vmatpush1.msra.mxu0 0.0
    %1554 = vmatprep.subr.mxu0 0.0
    %1555 = vmatpush1.msra.mxu0 0.0
    %1556 = vmatprep.subr.mxu0 0.0
    %1557 = vmatpush1.msra.mxu0 0.0
    %1558 = vmatprep.subr.mxu0 0.0
    %1559 = vmatpush1.msra.mxu0 0.0
    %1560 = vmatprep.subr.mxu0 0.0
    %1561 = vmatpush1.msra.mxu0 0.0
    %1562 = vmatprep.subr.mxu0 0.0
    %1563 = vmatpush1.msra.mxu0 0.0
    %1564 = vmatprep.subr.mxu0 0.0
    %1565 = vmatpush1.msra.mxu0 0.0
    %1566 = vmatprep.subr.mxu0 0.0
    %1567 = vmatpush1.msra.mxu0 0.0
    %1568 = vmatprep.subr.mxu0 0.0
    %1569 = vmatpush1.msra.mxu0 0.0
    %1570 = vmatprep.subr.mxu0 0.0
    %1571 = vmatpush1.msra.mxu0 0.0
    %1572 = vmatprep.subr.mxu0 0.0
    %1573 = vmatpush1.msra.mxu0 0.0
    %1574 = vmatprep.subr.mxu0 0.0
    %1575 = vmatpush1.msra.mxu0 0.0
    %1576 = vmatprep.subr.mxu0 0.0
    %1577 = vmatpush1.msra.mxu0 0.0
    %1578 = vmatprep.subr.mxu0 0.0
    %1579 = vmatpush1.msra.mxu0 0.0
    %1580 = vmatprep.subr.mxu0 0.0
    %1581 = vmatpush1.msra.mxu0 0.0
    %1582 = vmatprep.subr.mxu0 0.0
    %1583 = vmatpush1.msra.mxu0 0.0
    %1584 = vmatprep.subr.mxu0 0.0
    %1585 = vmatpush1.msra.mxu0 0.0
    %1586 = vmatprep.mubr.f32.mxu0 0.0
    %1587 = vmatmul.mubr.f32.gmra.mrb[0].mxu0 %v1517
    %v1588 = vpop.f32.mrb[0].mxu0
    %v1589 = vadd.f32 0.0, %v1588
    %v1590 = vpop.f32.mrb[0].mxu0
    %1591 = vmatprep.mubr.f32.mxu0 0.0
    %1592 = vmatmul.mubr.f32.gmra.mrb[0].mxu0 %v1520
    %v1593 = vpop.f32.mrb[0].mxu0
    %v1594 = vadd.f32 0.0, %v1593
    %v1595 = vpop.f32.mrb[0].mxu0
    %1596 = vdwg.mxu0
    %1597 = vmatprep.subr.mxu0 0.0
    %1598 = vmatpush1.msra.mxu0 %v1073
    %1599 = vmatprep.subr.mxu0 0.0
    %1600 = vmatpush1.msra.mxu0 0.0
    %1601 = vmatprep.subr.mxu0 0.0
    %1602 = vmatpush1.msra.mxu0 0.0
    %1603 = vmatprep.subr.mxu0 0.0
    %1604 = vmatpush1.msra.mxu0 0.0
    %1605 = vmatprep.subr.mxu0 0.0
    %1606 = vmatpush1.msra.mxu0 0.0
    %1607 = vmatprep.subr.mxu0 0.0
    %1608 = vmatpush1.msra.mxu0 0.0
    %1609 = vmatprep.subr.mxu0 0.0
    %1610 = vmatpush1.msra.mxu0 0.0
    %1611 = vmatprep.subr.mxu0 0.0
    %1612 = vmatpush1.msra.mxu0 0.0
    %1613 = vmatprep.subr.mxu0 0.0
    %1614 = vmatpush1.msra.mxu0 0.0
    %1615 = vmatprep.subr.mxu0 0.0
    %1616 = vmatpush1.msra.mxu0 0.0
    %1617 = vmatprep.subr.mxu0 0.0
    %1618 = vmatpush1.msra.mxu0 0.0
    %1619 = vmatprep.subr.mxu0 0.0
    %1620 = vmatpush1.msra.mxu0 0.0
    %1621 = vmatprep.subr.mxu0 0.0
    %1622 = vmatpush1.msra.mxu0 0.0
    %1623 = vmatprep.subr.mxu0 0.0
    %1624 = vmatpush1.msra.mxu0 0.0
    %1625 = vmatprep.subr.mxu0 0.0
    %1626 = vmatpush1.msra.mxu0 0.0
    %1627 = vmatprep.subr.mxu0 0.0
    %1628 = vmatpush1.msra.mxu0 0.0
    %1629 = vmatprep.subr.mxu0 0.0
    %1630 = vmatpush1.msra.mxu0 0.0
    %1631 = vmatprep.subr.mxu0 0.0
    %1632 = vmatpush1.msra.mxu0 0.0
    %1633 = vmatprep.subr.mxu0 0.0
    %1634 = vmatpush1.msra.mxu0 0.0
    %1635 = vmatprep.subr.mxu0 0.0
    %1636 = vmatpush1.msra.mxu0 0.0
    %1637 = vmatprep.subr.mxu0 0.0
    %1638 = vmatpush1.msra.mxu0 0.0
    %1639 = vmatprep.subr.mxu0 0.0
    %1640 = vmatpush1.msra.mxu0 0.0
    %1641 = vmatprep.subr.mxu0 0.0
    %1642 = vmatpush1.msra.mxu0 0.0
    %1643 = vmatprep.subr.mxu0 0.0
    %1644 = vmatpush1.msra.mxu0 0.0
    %1645 = vmatprep.subr.mxu0 0.0
    %1646 = vmatpush1.msra.mxu0 0.0
    %1647 = vmatprep.subr.mxu0 0.0
    %1648 = vmatpush1.msra.mxu0 0.0
    %1649 = vmatprep.subr.mxu0 0.0
    %1650 = vmatpush1.msra.mxu0 0.0
    %1651 = vmatprep.subr.mxu0 0.0
    %1652 = vmatpush1.msra.mxu0 0.0
    %1653 = vmatprep.subr.mxu0 0.0
    %1654 = vmatpush1.msra.mxu0 0.0
    %1655 = vmatprep.subr.mxu0 0.0
    %1656 = vmatpush1.msra.mxu0 0.0
    %1657 = vmatprep.subr.mxu0 0.0
    %1658 = vmatpush1.msra.mxu0 0.0
    %1659 = vmatprep.subr.mxu0 0.0
    %1660 = vmatpush1.msra.mxu0 0.0
    %1661 = vmatprep.mubr.f32.mxu0 0.0
    %1662 = vmatmul.mubr.f32.gmra.mrb[0].mxu0 %v1517
    %v1663 = vpop.f32.mrb[0].mxu0
    %v1664 = vadd.f32 0.0, %v1663
    %v1665 = vpop.f32.mrb[0].mxu0
    %1666 = vmatprep.mubr.f32.mxu0 0.0
    %1667 = vmatmul.mubr.f32.gmra.mrb[0].mxu0 %v1520
    %v1668 = vpop.f32.mrb[0].mxu0
    %v1669 = vadd.f32 0.0, %v1668
    %v1670 = vpop.f32.mrb[0].mxu0
    %1671 = vdwg.mxu0
    %1672 = vmatprep.subr.mxu0 0.0
    %1673 = vmatpush1.msra.mxu0 %v1146
    %1674 = vmatprep.subr.mxu0 0.0
    %1675 = vmatpush1.msra.mxu0 0.0
    %1676 = vmatprep.subr.mxu0 0.0
    %1677 = vmatpush1.msra.mxu0 0.0
    %1678 = vmatprep.subr.mxu0 0.0
    %1679 = vmatpush1.msra.mxu0 0.0
    %1680 = vmatprep.subr.mxu0 0.0
    %1681 = vmatpush1.msra.mxu0 0.0
    %1682 = vmatprep.subr.mxu0 0.0
    %1683 = vmatpush1.msra.mxu0 0.0
    %1684 = vmatprep.subr.mxu0 0.0
    %1685 = vmatpush1.msra.mxu0 0.0
    %1686 = vmatprep.subr.mxu0 0.0
    %1687 = vmatpush1.msra.mxu0 0.0
    %1688 = vmatprep.subr.mxu0 0.0
    %1689 = vmatpush1.msra.mxu0 0.0
    %1690 = vmatprep.subr.mxu0 0.0
    %1691 = vmatpush1.msra.mxu0 0.0
    %1692 = vmatprep.subr.mxu0 0.0
    %1693 = vmatpush1.msra.mxu0 0.0
    %1694 = vmatprep.subr.mxu0 0.0
    %1695 = vmatpush1.msra.mxu0 0.0
    %1696 = vmatprep.subr.mxu0 0.0
    %1697 = vmatpush1.msra.mxu0 0.0
    %1698 = vmatprep.subr.mxu0 0.0
    %1699 = vmatpush1.msra.mxu0 0.0
    %1700 = vmatprep.subr.mxu0 0.0
    %1701 = vmatpush1.msra.mxu0 0.0
    %1702 = vmatprep.subr.mxu0 0.0
    %1703 = vmatpush1.msra.mxu0 0.0
    %1704 = vmatprep.subr.mxu0 0.0
    %1705 = vmatpush1.msra.mxu0 0.0
    %1706 = vmatprep.subr.mxu0 0.0
    %1707 = vmatpush1.msra.mxu0 0.0
    %1708 = vmatprep.subr.mxu0 0.0
    %1709 = vmatpush1.msra.mxu0 0.0
    %1710 = vmatprep.subr.mxu0 0.0
    %1711 = vmatpush1.msra.mxu0 0.0
    %1712 = vmatprep.subr.mxu0 0.0
    %1713 = vmatpush1.msra.mxu0 0.0
    %1714 = vmatprep.subr.mxu0 0.0
    %1715 = vmatpush1.msra.mxu0 0.0
    %1716 = vmatprep.subr.mxu0 0.0
    %1717 = vmatpush1.msra.mxu0 0.0
    %1718 = vmatprep.subr.mxu0 0.0
    %1719 = vmatpush1.msra.mxu0 0.0
    %1720 = vmatprep.subr.mxu0 0.0
    %1721 = vmatpush1.msra.mxu0 0.0
    %1722 = vmatprep.subr.mxu0 0.0
    %1723 = vmatpush1.msra.mxu0 0.0
    %1724 = vmatprep.subr.mxu0 0.0
    %1725 = vmatpush1.msra.mxu0 0.0
    %1726 = vmatprep.subr.mxu0 0.0
    %1727 = vmatpush1.msra.mxu0 0.0
    %1728 = vmatprep.subr.mxu0 0.0
    %1729 = vmatpush1.msra.mxu0 0.0
    %1730 = vmatprep.subr.mxu0 0.0
    %1731 = vmatpush1.msra.mxu0 0.0
    %1732 = vmatprep.subr.mxu0 0.0
    %1733 = vmatpush1.msra.mxu0 0.0
    %1734 = vmatprep.subr.mxu0 0.0
    %1735 = vmatpush1.msra.mxu0 0.0
    %1736 = vmatprep.mubr.f32.mxu0 0.0
    %1737 = vmatmul.mubr.f32.gmra.mrb[0].mxu0 %v1517
    %v1738 = vpop.f32.mrb[0].mxu0
    %v1739 = vadd.f32 0.0, %v1738
    %v1740 = vpop.f32.mrb[0].mxu0
    %1741 = vmatprep.mubr.f32.mxu0 0.0
    %1742 = vmatmul.mubr.f32.gmra.mrb[0].mxu0 %v1520
    %v1743 = vpop.f32.mrb[0].mxu0
    %v1744 = vadd.f32 0.0, %v1743
    %v1745 = vpop.f32.mrb[0].mxu0
    %1746 = vdwg.mxu0
    %1747 = vmatprep.subr.mxu0 0.0
    %1748 = vmatpush1.msra.mxu0 %v1219
    %1749 = vmatprep.subr.mxu0 0.0
    %1750 = vmatpush1.msra.mxu0 0.0
    %1751 = vmatprep.subr.mxu0 0.0
    %1752 = vmatpush1.msra.mxu0 0.0
    %1753 = vmatprep.subr.mxu0 0.0
    %1754 = vmatpush1.msra.mxu0 0.0
    %1755 = vmatprep.subr.mxu0 0.0
    %1756 = vmatpush1.msra.mxu0 0.0
    %1757 = vmatprep.subr.mxu0 0.0
    %1758 = vmatpush1.msra.mxu0 0.0
    %1759 = vmatprep.subr.mxu0 0.0
    %1760 = vmatpush1.msra.mxu0 0.0
    %1761 = vmatprep.subr.mxu0 0.0
    %1762 = vmatpush1.msra.mxu0 0.0
    %1763 = vmatprep.subr.mxu0 0.0
    %1764 = vmatpush1.msra.mxu0 0.0
    %1765 = vmatprep.subr.mxu0 0.0
    %1766 = vmatpush1.msra.mxu0 0.0
    %1767 = vmatprep.subr.mxu0 0.0
    %1768 = vmatpush1.msra.mxu0 0.0
    %1769 = vmatprep.subr.mxu0 0.0
    %1770 = vmatpush1.msra.mxu0 0.0
    %1771 = vmatprep.subr.mxu0 0.0
    %1772 = vmatpush1.msra.mxu0 0.0
    %1773 = vmatprep.subr.mxu0 0.0
    %1774 = vmatpush1.msra.mxu0 0.0
    %1775 = vmatprep.subr.mxu0 0.0
    %1776 = vmatpush1.msra.mxu0 0.0
    %1777 = vmatprep.subr.mxu0 0.0
    %1778 = vmatpush1.msra.mxu0 0.0
    %1779 = vmatprep.subr.mxu0 0.0
    %1780 = vmatpush1.msra.mxu0 0.0
    %1781 = vmatprep.subr.mxu0 0.0
    %1782 = vmatpush1.msra.mxu0 0.0
    %1783 = vmatprep.subr.mxu0 0.0
    %1784 = vmatpush1.msra.mxu0 0.0
    %1785 = vmatprep.subr.mxu0 0.0
    %1786 = vmatpush1.msra.mxu0 0.0
    %1787 = vmatprep.subr.mxu0 0.0
    %1788 = vmatpush1.msra.mxu0 0.0
    %1789 = vmatprep.subr.mxu0 0.0
    %1790 = vmatpush1.msra.mxu0 0.0
    %1791 = vmatprep.subr.mxu0 0.0
    %1792 = vmatpush1.msra.mxu0 0.0
    %1793 = vmatprep.subr.mxu0 0.0
    %1794 = vmatpush1.msra.mxu0 0.0
    %1795 = vmatprep.subr.mxu0 0.0
    %1796 = vmatpush1.msra.mxu0 0.0
    %1797 = vmatprep.subr.mxu0 0.0
    %1798 = vmatpush1.msra.mxu0 0.0
    %1799 = vmatprep.subr.mxu0 0.0
    %1800 = vmatpush1.msra.mxu0 0.0
    %1801 = vmatprep.subr.mxu0 0.0
    %1802 = vmatpush1.msra.mxu0 0.0
    %1803 = vmatprep.subr.mxu0 0.0
    %1804 = vmatpush1.msra.mxu0 0.0
    %1805 = vmatprep.subr.mxu0 0.0
    %1806 = vmatpush1.msra.mxu0 0.0
    %1807 = vmatprep.subr.mxu0 0.0
    %1808 = vmatpush1.msra.mxu0 0.0
    %1809 = vmatprep.subr.mxu0 0.0
    %1810 = vmatpush1.msra.mxu0 0.0
    %1811 = vmatprep.mubr.f32.mxu0 0.0
    %1812 = vmatmul.mubr.f32.gmra.mrb[0].mxu0 %v1517
    %v1813 = vpop.f32.mrb[0].mxu0
    %v1814 = vadd.f32 0.0, %v1813
    %v1815 = vpop.f32.mrb[0].mxu0
    %1816 = vmatprep.mubr.f32.mxu0 0.0
    %1817 = vmatmul.mubr.f32.gmra.mrb[0].mxu0 %v1520
    %v1818 = vpop.f32.mrb[0].mxu0
    %v1819 = vadd.f32 0.0, %v1818
    %v1820 = vpop.f32.mrb[0].mxu0
    %1821 = vdwg.mxu0
    %1822 = vmatprep.subr.mxu0 0.0
    %1823 = vmatpush1.msra.mxu0 %v1292
    %1824 = vmatprep.subr.mxu0 0.0
    %1825 = vmatpush1.msra.mxu0 0.0
    %1826 = vmatprep.subr.mxu0 0.0
    %1827 = vmatpush1.msra.mxu0 0.0
    %1828 = vmatprep.subr.mxu0 0.0
    %1829 = vmatpush1.msra.mxu0 0.0
    %1830 = vmatprep.subr.mxu0 0.0
    %1831 = vmatpush1.msra.mxu0 0.0
    %1832 = vmatprep.subr.mxu0 0.0
    %1833 = vmatpush1.msra.mxu0 0.0
    %1834 = vmatprep.subr.mxu0 0.0
    %1835 = vmatpush1.msra.mxu0 0.0
    %1836 = vmatprep.subr.mxu0 0.0
    %1837 = vmatpush1.msra.mxu0 0.0
    %1838 = vmatprep.subr.mxu0 0.0
    %1839 = vmatpush1.msra.mxu0 0.0
    %1840 = vmatprep.subr.mxu0 0.0
    %1841 = vmatpush1.msra.mxu0 0.0
    %1842 = vmatprep.subr.mxu0 0.0
    %1843 = vmatpush1.msra.mxu0 0.0
    %1844 = vmatprep.subr.mxu0 0.0
    %1845 = vmatpush1.msra.mxu0 0.0
    %1846 = vmatprep.subr.mxu0 0.0
    %1847 = vmatpush1.msra.mxu0 0.0
    %1848 = vmatprep.subr.mxu0 0.0
    %1849 = vmatpush1.msra.mxu0 0.0
    %1850 = vmatprep.subr.mxu0 0.0
    %1851 = vmatpush1.msra.mxu0 0.0
    %1852 = vmatprep.subr.mxu0 0.0
    %1853 = vmatpush1.msra.mxu0 0.0
    %1854 = vmatprep.subr.mxu0 0.0
    %1855 = vmatpush1.msra.mxu0 0.0
    %1856 = vmatprep.subr.mxu0 0.0
    %1857 = vmatpush1.msra.mxu0 0.0
    %1858 = vmatprep.subr.mxu0 0.0
    %1859 = vmatpush1.msra.mxu0 0.0
    %1860 = vmatprep.subr.mxu0 0.0
    %1861 = vmatpush1.msra.mxu0 0.0
    %1862 = vmatprep.subr.mxu0 0.0
    %1863 = vmatpush1.msra.mxu0 0.0
    %1864 = vmatprep.subr.mxu0 0.0
    %1865 = vmatpush1.msra.mxu0 0.0
    %1866 = vmatprep.subr.mxu0 0.0
    %1867 = vmatpush1.msra.mxu0 0.0
    %1868 = vmatprep.subr.mxu0 0.0
    %1869 = vmatpush1.msra.mxu0 0.0
    %1870 = vmatprep.subr.mxu0 0.0
    %1871 = vmatpush1.msra.mxu0 0.0
    %1872 = vmatprep.subr.mxu0 0.0
    %1873 = vmatpush1.msra.mxu0 0.0
    %1874 = vmatprep.subr.mxu0 0.0
    %1875 = vmatpush1.msra.mxu0 0.0
    %1876 = vmatprep.subr.mxu0 0.0
    %1877 = vmatpush1.msra.mxu0 0.0
    %1878 = vmatprep.subr.mxu0 0.0
    %1879 = vmatpush1.msra.mxu0 0.0
    %1880 = vmatprep.subr.mxu0 0.0
    %1881 = vmatpush1.msra.mxu0 0.0
    %1882 = vmatprep.subr.mxu0 0.0
    %1883 = vmatpush1.msra.mxu0 0.0
    %1884 = vmatprep.subr.mxu0 0.0
    %1885 = vmatpush1.msra.mxu0 0.0
    %1886 = vmatprep.mubr.f32.mxu0 0.0
    %1887 = vmatmul.mubr.f32.gmra.mrb[0].mxu0 %v1517
    %v1888 = vpop.f32.mrb[0].mxu0
    %v1889 = vadd.f32 0.0, %v1888
    %v1890 = vpop.f32.mrb[0].mxu0
    %1891 = vmatprep.mubr.f32.mxu0 0.0
    %1892 = vmatmul.mubr.f32.gmra.mrb[0].mxu0 %v1520
    %v1893 = vpop.f32.mrb[0].mxu0
    %v1894 = vadd.f32 0.0, %v1893
    %v1895 = vpop.f32.mrb[0].mxu0
    %1896 = vdwg.mxu0
    %1897 = vmatprep.subr.mxu0 0.0
    %1898 = vmatpush1.msra.mxu0 %v1365
    %1899 = vmatprep.subr.mxu0 0.0
    %1900 = vmatpush1.msra.mxu0 0.0
    %1901 = vmatprep.subr.mxu0 0.0
    %1902 = vmatpush1.msra.mxu0 0.0
    %1903 = vmatprep.subr.mxu0 0.0
    %1904 = vmatpush1.msra.mxu0 0.0
    %1905 = vmatprep.subr.mxu0 0.0
    %1906 = vmatpush1.msra.mxu0 0.0
    %1907 = vmatprep.subr.mxu0 0.0
    %1908 = vmatpush1.msra.mxu0 0.0
    %1909 = vmatprep.subr.mxu0 0.0
    %1910 = vmatpush1.msra.mxu0 0.0
    %1911 = vmatprep.subr.mxu0 0.0
    %1912 = vmatpush1.msra.mxu0 0.0
    %1913 = vmatprep.subr.mxu0 0.0
    %1914 = vmatpush1.msra.mxu0 0.0
    %1915 = vmatprep.subr.mxu0 0.0
    %1916 = vmatpush1.msra.mxu0 0.0
    %1917 = vmatprep.subr.mxu0 0.0
    %1918 = vmatpush1.msra.mxu0 0.0
    %1919 = vmatprep.subr.mxu0 0.0
    %1920 = vmatpush1.msra.mxu0 0.0
    %1921 = vmatprep.subr.mxu0 0.0
    %1922 = vmatpush1.msra.mxu0 0.0
    %1923 = vmatprep.subr.mxu0 0.0
    %1924 = vmatpush1.msra.mxu0 0.0
    %1925 = vmatprep.subr.mxu0 0.0
    %1926 = vmatpush1.msra.mxu0 0.0
    %1927 = vmatprep.subr.mxu0 0.0
    %1928 = vmatpush1.msra.mxu0 0.0
    %1929 = vmatprep.subr.mxu0 0.0
    %1930 = vmatpush1.msra.mxu0 0.0
    %1931 = vmatprep.subr.mxu0 0.0
    %1932 = vmatpush1.msra.mxu0 0.0
    %1933 = vmatprep.subr.mxu0 0.0
    %1934 = vmatpush1.msra.mxu0 0.0
    %1935 = vmatprep.subr.mxu0 0.0
    %1936 = vmatpush1.msra.mxu0 0.0
    %1937 = vmatprep.subr.mxu0 0.0
    %1938 = vmatpush1.msra.mxu0 0.0
    %1939 = vmatprep.subr.mxu0 0.0
    %1940 = vmatpush1.msra.mxu0 0.0
    %1941 = vmatprep.subr.mxu0 0.0
    %1942 = vmatpush1.msra.mxu0 0.0
    %1943 = vmatprep.subr.mxu0 0.0
    %1944 = vmatpush1.msra.mxu0 0.0
    %1945 = vmatprep.subr.mxu0 0.0
    %1946 = vmatpush1.msra.mxu0 0.0
    %1947 = vmatprep.subr.mxu0 0.0
    %1948 = vmatpush1.msra.mxu0 0.0
    %1949 = vmatprep.subr.mxu0 0.0
    %1950 = vmatpush1.msra.mxu0 0.0
    %1951 = vmatprep.subr.mxu0 0.0
    %1952 = vmatpush1.msra.mxu0 0.0
    %1953 = vmatprep.subr.mxu0 0.0
    %1954 = vmatpush1.msra.mxu0 0.0
    %1955 = vmatprep.subr.mxu0 0.0
    %1956 = vmatpush1.msra.mxu0 0.0
    %1957 = vmatprep.subr.mxu0 0.0
    %1958 = vmatpush1.msra.mxu0 0.0
    %1959 = vmatprep.subr.mxu0 0.0
    %1960 = vmatpush1.msra.mxu0 0.0
    %1961 = vmatprep.mubr.f32.mxu0 0.0
    %1962 = vmatmul.mubr.f32.gmra.mrb[0].mxu0 %v1517
    %v1963 = vpop.f32.mrb[0].mxu0
    %v1964 = vadd.f32 0.0, %v1963
    %v1965 = vpop.f32.mrb[0].mxu0
    %1966 = vmatprep.mubr.f32.mxu0 0.0
    %1967 = vmatmul.mubr.f32.gmra.mrb[0].mxu0 %v1520
    %v1968 = vpop.f32.mrb[0].mxu0
    %v1969 = vadd.f32 0.0, %v1968
    %v1970 = vpop.f32.mrb[0].mxu0
    %1971 = vdwg.mxu0
    %1972 = vmatprep.subr.mxu0 0.0
    %1973 = vmatpush1.msra.mxu0 %v1438
    %1974 = vmatprep.subr.mxu0 0.0
    %1975 = vmatpush1.msra.mxu0 0.0
    %1976 = vmatprep.subr.mxu0 0.0
    %1977 = vmatpush1.msra.mxu0 0.0
    %1978 = vmatprep.subr.mxu0 0.0
    %1979 = vmatpush1.msra.mxu0 0.0
    %1980 = vmatprep.subr.mxu0 0.0
    %1981 = vmatpush1.msra.mxu0 0.0
    %1982 = vmatprep.subr.mxu0 0.0
    %1983 = vmatpush1.msra.mxu0 0.0
    %1984 = vmatprep.subr.mxu0 0.0
    %1985 = vmatpush1.msra.mxu0 0.0
    %1986 = vmatprep.subr.mxu0 0.0
    %1987 = vmatpush1.msra.mxu0 0.0
    %1988 = vmatprep.subr.mxu0 0.0
    %1989 = vmatpush1.msra.mxu0 0.0
    %1990 = vmatprep.subr.mxu0 0.0
    %1991 = vmatpush1.msra.mxu0 0.0
    %1992 = vmatprep.subr.mxu0 0.0
    %1993 = vmatpush1.msra.mxu0 0.0
    %1994 = vmatprep.subr.mxu0 0.0
    %1995 = vmatpush1.msra.mxu0 0.0
    %1996 = vmatprep.subr.mxu0 0.0
    %1997 = vmatpush1.msra.mxu0 0.0
    %1998 = vmatprep.subr.mxu0 0.0
    %1999 = vmatpush1.msra.mxu0 0.0
    %2000 = vmatprep.subr.mxu0 0.0
    %2001 = vmatpush1.msra.mxu0 0.0
    %2002 = vmatprep.subr.mxu0 0.0
    %2003 = vmatpush1.msra.mxu0 0.0
    %2004 = vmatprep.subr.mxu0 0.0
    %2005 = vmatpush1.msra.mxu0 0.0
    %2006 = vmatprep.subr.mxu0 0.0
    %2007 = vmatpush1.msra.mxu0 0.0
    %2008 = vmatprep.subr.mxu0 0.0
    %2009 = vmatpush1.msra.mxu0 0.0
    %2010 = vmatprep.subr.mxu0 0.0
    %2011 = vmatpush1.msra.mxu0 0.0
    %2012 = vmatprep.subr.mxu0 0.0
    %2013 = vmatpush1.msra.mxu0 0.0
    %2014 = vmatprep.subr.mxu0 0.0
    %2015 = vmatpush1.msra.mxu0 0.0
    %2016 = vmatprep.subr.mxu0 0.0
    %2017 = vmatpush1.msra.mxu0 0.0
    %2018 = vmatprep.subr.mxu0 0.0
    %2019 = vmatpush1.msra.mxu0 0.0
    %2020 = vmatprep.subr.mxu0 0.0
    %2021 = vmatpush1.msra.mxu0 0.0
    %2022 = vmatprep.subr.mxu0 0.0
    %2023 = vmatpush1.msra.mxu0 0.0
    %2024 = vmatprep.subr.mxu0 0.0
    %2025 = vmatpush1.msra.mxu0 0.0
    %2026 = vmatprep.subr.mxu0 0.0
    %2027 = vmatpush1.msra.mxu0 0.0
    %2028 = vmatprep.subr.mxu0 0.0
    %2029 = vmatpush1.msra.mxu0 0.0
    %2030 = vmatprep.subr.mxu0 0.0
    %2031 = vmatpush1.msra.mxu0 0.0
    %2032 = vmatprep.subr.mxu0 0.0
    %2033 = vmatpush1.msra.mxu0 0.0
    %2034 = vmatprep.subr.mxu0 0.0
    %2035 = vmatpush1.msra.mxu0 0.0
    %2036 = vmatprep.mubr.f32.mxu0 0.0
    %2037 = vmatmul.mubr.f32.gmra.mrb[0].mxu0 %v1517
    %v2038 = vpop.f32.mrb[0].mxu0
    %v2039 = vadd.f32 0.0, %v2038
    %v2040 = vpop.f32.mrb[0].mxu0
    %2041 = vmatprep.mubr.f32.mxu0 0.0
    %2042 = vmatmul.mubr.f32.gmra.mrb[0].mxu0 %v1520
    %v2043 = vpop.f32.mrb[0].mxu0
    %v2044 = vadd.f32 0.0, %v2043
    %v2045 = vpop.f32.mrb[0].mxu0
    %2046 = vdwg.mxu0
    %2047 = vmatprep.subr.mxu0 0.0
    %2048 = vmatpush1.msra.mxu0 %v1511
    %2049 = vmatprep.subr.mxu0 0.0
    %2050 = vmatpush1.msra.mxu0 0.0
    %2051 = vmatprep.subr.mxu0 0.0
    %2052 = vmatpush1.msra.mxu0 0.0
    %2053 = vmatprep.subr.mxu0 0.0
    %2054 = vmatpush1.msra.mxu0 0.0
    %2055 = vmatprep.subr.mxu0 0.0
    %2056 = vmatpush1.msra.mxu0 0.0
    %2057 = vmatprep.subr.mxu0 0.0
    %2058 = vmatpush1.msra.mxu0 0.0
    %2059 = vmatprep.subr.mxu0 0.0
    %2060 = vmatpush1.msra.mxu0 0.0
    %2061 = vmatprep.subr.mxu0 0.0
    %2062 = vmatpush1.msra.mxu0 0.0
    %2063 = vmatprep.subr.mxu0 0.0
    %2064 = vmatpush1.msra.mxu0 0.0
    %2065 = vmatprep.subr.mxu0 0.0
    %2066 = vmatpush1.msra.mxu0 0.0
    %2067 = vmatprep.subr.mxu0 0.0
    %2068 = vmatpush1.msra.mxu0 0.0
    %2069 = vmatprep.subr.mxu0 0.0
    %2070 = vmatpush1.msra.mxu0 0.0
    %2071 = vmatprep.subr.mxu0 0.0
    %2072 = vmatpush1.msra.mxu0 0.0
    %2073 = vmatprep.subr.mxu0 0.0
    %2074 = vmatpush1.msra.mxu0 0.0
    %2075 = vmatprep.subr.mxu0 0.0
    %2076 = vmatpush1.msra.mxu0 0.0
    %2077 = vmatprep.subr.mxu0 0.0
    %2078 = vmatpush1.msra.mxu0 0.0
    %2079 = vmatprep.subr.mxu0 0.0
    %2080 = vmatpush1.msra.mxu0 0.0
    %2081 = vmatprep.subr.mxu0 0.0
    %2082 = vmatpush1.msra.mxu0 0.0
    %2083 = vmatprep.subr.mxu0 0.0
    %2084 = vmatpush1.msra.mxu0 0.0
    %2085 = vmatprep.subr.mxu0 0.0
    %2086 = vmatpush1.msra.mxu0 0.0
    %2087 = vmatprep.subr.mxu0 0.0
    %2088 = vmatpush1.msra.mxu0 0.0
    %2089 = vmatprep.subr.mxu0 0.0
    %2090 = vmatpush1.msra.mxu0 0.0
    %2091 = vmatprep.subr.mxu0 0.0
    %2092 = vmatpush1.msra.mxu0 0.0
    %2093 = vmatprep.subr.mxu0 0.0
    %2094 = vmatpush1.msra.mxu0 0.0
    %2095 = vmatprep.subr.mxu0 0.0
    %2096 = vmatpush1.msra.mxu0 0.0
    %2097 = vmatprep.subr.mxu0 0.0
    %2098 = vmatpush1.msra.mxu0 0.0
    %2099 = vmatprep.subr.mxu0 0.0
    %2100 = vmatpush1.msra.mxu0 0.0
    %2101 = vmatprep.subr.mxu0 0.0
    %2102 = vmatpush1.msra.mxu0 0.0
    %2103 = vmatprep.subr.mxu0 0.0
    %2104 = vmatpush1.msra.mxu0 0.0
    %2105 = vmatprep.subr.mxu0 0.0
    %2106 = vmatpush1.msra.mxu0 0.0
    %2107 = vmatprep.subr.mxu0 0.0
    %2108 = vmatpush1.msra.mxu0 0.0
    %2109 = vmatprep.subr.mxu0 0.0
    %2110 = vmatpush1.msra.mxu0 0.0
    %2111 = vmatprep.mubr.f32.mxu0 0.0
    %2112 = vmatmul.mubr.f32.gmra.mrb[0].mxu0 %v1517
    %v2113 = vpop.f32.mrb[0].mxu0
    %v2114 = vadd.f32 0.0, %v2113
    %v2115 = vpop.f32.mrb[0].mxu0
    %2116 = vmatprep.mubr.f32.mxu0 0.0
    %2117 = vmatmul.mubr.f32.gmra.mrb[0].mxu0 %v1520
    %v2118 = vpop.f32.mrb[0].mxu0
    %v2119 = vadd.f32 0.0, %v2118
    %v2120 = vpop.f32.mrb[0].mxu0
    %2121 = vdwg.mxu0
    %v2122 = vsub.f32 %v1589, %v58
    %v2123 = vsub.f32 %v1594, %v59
    %v2124 = vsub.f32 %v1664, %v60
    %v2125 = vsub.f32 %v1669, %v61
    %v2126 = vsub.f32 %v1739, %v62
    %v2127 = vsub.f32 %v1744, %v63
    %v2128 = vsub.f32 %v1814, %v64
    %v2129 = vsub.f32 %v1819, %v65
    %v2130 = vsub.f32 %v1889, %v66
    %v2131 = vsub.f32 %v1894, %v67
    %v2132 = vsub.f32 %v1964, %v68
    %v2133 = vsub.f32 %v1969, %v69
    %v2134 = vsub.f32 %v2039, %v70
    %v2135 = vsub.f32 %v2044, %v71
    %v2136 = vsub.f32 %v2114, %v72
    %v2137 = vsub.f32 %v2119, %v73
    %2154 = vrot.lane.b32.xlu0 %v2122, 2
    %v2155 = vpop.permute.xlu0 %2154
    %2156 = vrot.lane.b32.xlu0 %v2123, 2
    %v2157 = vpop.permute.xlu0 %2156
    %2158 = vrot.lane.b32.xlu0 %v2124, 2
    %v2159 = vpop.permute.xlu0 %2158
    %2160 = vrot.lane.b32.xlu0 %v2125, 2
    %v2161 = vpop.permute.xlu0 %2160
    %2162 = vrot.lane.b32.xlu0 %v2126, 2
    %v2163 = vpop.permute.xlu0 %2162
    %2164 = vrot.lane.b32.xlu0 %v2127, 2
    %v2165 = vpop.permute.xlu0 %2164
    %2166 = vrot.lane.b32.xlu0 %v2128, 2
    %v2167 = vpop.permute.xlu0 %2166
    %2168 = vrot.lane.b32.xlu0 %v2129, 2
    %v2169 = vpop.permute.xlu0 %2168
    %2170 = vrot.lane.b32.xlu0 %v2130, 2
    %v2171 = vpop.permute.xlu0 %2170
    %2172 = vrot.lane.b32.xlu0 %v2131, 2
    %v2173 = vpop.permute.xlu0 %2172
    %2174 = vrot.lane.b32.xlu0 %v2132, 2
    %v2175 = vpop.permute.xlu0 %2174
    %2176 = vrot.lane.b32.xlu0 %v2133, 2
    %v2177 = vpop.permute.xlu0 %2176
    %2178 = vrot.lane.b32.xlu0 %v2134, 2
    %v2179 = vpop.permute.xlu0 %2178
    %2180 = vrot.lane.b32.xlu0 %v2135, 2
    %v2181 = vpop.permute.xlu0 %2180
    %2182 = vrot.lane.b32.xlu0 %v2136, 2
    %v2183 = vpop.permute.xlu0 %2182
    %2184 = vrot.lane.b32.xlu0 %v2137, 2
    %v2185 = vpop.permute.xlu0 %2184
    %v2202 = vsub.f32 %v2122, %v2155
    %v2203 = vsub.f32 %v2123, %v2157
    %v2204 = vsub.f32 %v2124, %v2159
    %v2205 = vsub.f32 %v2125, %v2161
    %v2206 = vsub.f32 %v2126, %v2163
    %v2207 = vsub.f32 %v2127, %v2165
    %v2208 = vsub.f32 %v2128, %v2167
    %v2209 = vsub.f32 %v2129, %v2169
    %v2210 = vsub.f32 %v2130, %v2171
    %v2211 = vsub.f32 %v2131, %v2173
    %v2212 = vsub.f32 %v2132, %v2175
    %v2213 = vsub.f32 %v2133, %v2177
    %v2214 = vsub.f32 %v2134, %v2179
    %v2215 = vsub.f32 %v2135, %v2181
    %v2216 = vsub.f32 %v2136, %v2183
    %v2217 = vsub.f32 %v2137, %v2185
    %v2218 = vand.u32 2147483647, %v2202
    %v2219 = vand.u32 2147483647, %v2203
    %v2220 = vand.u32 2147483647, %v2204
    %v2221 = vand.u32 2147483647, %v2205
    %v2222 = vand.u32 2147483647, %v2206
    %v2223 = vand.u32 2147483647, %v2207
    %v2224 = vand.u32 2147483647, %v2208
    %v2225 = vand.u32 2147483647, %v2209
    %v2226 = vand.u32 2147483647, %v2210
    %v2227 = vand.u32 2147483647, %v2211
    %v2228 = vand.u32 2147483647, %v2212
    %v2229 = vand.u32 2147483647, %v2213
    %v2230 = vand.u32 2147483647, %v2214
    %v2231 = vand.u32 2147483647, %v2215
    %v2232 = vand.u32 2147483647, %v2216
    %v2233 = vand.u32 2147483647, %v2217
    %2250 = vrot.lane.b32.xlu0 %v2218, 126
    %v2251 = vpop.permute.xlu0 %2250
    %2252 = vrot.lane.b32.xlu0 %v2219, 126
    %v2253 = vpop.permute.xlu0 %2252
    %2254 = vrot.lane.b32.xlu0 %v2220, 126
    %v2255 = vpop.permute.xlu0 %2254
    %2256 = vrot.lane.b32.xlu0 %v2221, 126
    %v2257 = vpop.permute.xlu0 %2256
    %2258 = vrot.lane.b32.xlu0 %v2222, 126
    %v2259 = vpop.permute.xlu0 %2258
    %2260 = vrot.lane.b32.xlu0 %v2223, 126
    %v2261 = vpop.permute.xlu0 %2260
    %2262 = vrot.lane.b32.xlu0 %v2224, 126
    %v2263 = vpop.permute.xlu0 %2262
    %2264 = vrot.lane.b32.xlu0 %v2225, 126
    %v2265 = vpop.permute.xlu0 %2264
    %2266 = vrot.lane.b32.xlu0 %v2226, 126
    %v2267 = vpop.permute.xlu0 %2266
    %2268 = vrot.lane.b32.xlu0 %v2227, 126
    %v2269 = vpop.permute.xlu0 %2268
    %2270 = vrot.lane.b32.xlu0 %v2228, 126
    %v2271 = vpop.permute.xlu0 %2270
    %2272 = vrot.lane.b32.xlu0 %v2229, 126
    %v2273 = vpop.permute.xlu0 %2272
    %2274 = vrot.lane.b32.xlu0 %v2230, 126
    %v2275 = vpop.permute.xlu0 %2274
    %2276 = vrot.lane.b32.xlu0 %v2231, 126
    %v2277 = vpop.permute.xlu0 %2276
    %2278 = vrot.lane.b32.xlu0 %v2232, 126
    %v2279 = vpop.permute.xlu0 %2278
    %2280 = vrot.lane.b32.xlu0 %v2233, 126
    %v2281 = vpop.permute.xlu0 %2280
    %v2298 = vsel %vm266, %v2251, 0.0
    %v2299 = vsel %vm266, %v2253, 0.0
    %v2300 = vadd.f32 %v2298, %v2299
    %v2301 = vsel %vm266, %v2255, 0.0
    %v2302 = vadd.f32 %v2300, %v2301
    %v2303 = vsel %vm266, %v2257, 0.0
    %v2304 = vadd.f32 %v2302, %v2303
    %v2305 = vsel %vm266, %v2259, 0.0
    %v2306 = vadd.f32 %v2304, %v2305
    %v2307 = vsel %vm266, %v2261, 0.0
    %v2308 = vadd.f32 %v2306, %v2307
    %v2309 = vsel %vm266, %v2263, 0.0
    %v2310 = vadd.f32 %v2308, %v2309
    %v2311 = vsel %vm266, %v2265, 0.0
    %v2312 = vadd.f32 %v2310, %v2311
    %v2313 = vsel %vm266, %v2267, 0.0
    %v2314 = vadd.f32 %v2312, %v2313
    %v2315 = vsel %vm266, %v2269, 0.0
    %v2316 = vadd.f32 %v2314, %v2315
    %v2317 = vsel %vm266, %v2271, 0.0
    %v2318 = vadd.f32 %v2316, %v2317
    %v2319 = vsel %vm266, %v2273, 0.0
    %v2320 = vadd.f32 %v2318, %v2319
    %v2321 = vsel %vm266, %v2275, 0.0
    %v2322 = vadd.f32 %v2320, %v2321
    %v2323 = vsel %vm266, %v2277, 0.0
    %v2324 = vadd.f32 %v2322, %v2323
    %v2325 = vsel %vm266, %v2279, 0.0
    %v2326 = vadd.f32 %v2324, %v2325
    %v2327 = vsel %vm266, %v2281, 0.0
    %v2328 = vadd.f32 %v2326, %v2327
    %2329 = vadd.xlane.f32.xlu0 %v2328
    %v2330 = vpop.xlane.xlu0 %2329
    %v2331 = vrot.slane %v2330, 4
    %v2332 = vadd.f32 %v2330, %v2331
    %v2333 = vrot.slane %v2332, 2
    %v2334 = vadd.f32 %v2332, %v2333
    %v2335 = vrot.slane %v2334, 1
    %v2336 = vadd.f32 %v2334, %v2335
    %s2337 = vtos %v2336
    %s2338 = sadd.f32 %s2337, 0.0
    %2339 = vrot.lane.b32.xlu0 %v2122, 1
    %v2340 = vpop.permute.xlu0 %2339
    %2341 = vrot.lane.b32.xlu0 %v2123, 1
    %v2342 = vpop.permute.xlu0 %2341
    %2343 = vrot.lane.b32.xlu0 %v2124, 1
    %v2344 = vpop.permute.xlu0 %2343
    %2345 = vrot.lane.b32.xlu0 %v2125, 1
    %v2346 = vpop.permute.xlu0 %2345
    %2347 = vrot.lane.b32.xlu0 %v2126, 1
    %v2348 = vpop.permute.xlu0 %2347
    %2349 = vrot.lane.b32.xlu0 %v2127, 1
    %v2350 = vpop.permute.xlu0 %2349
    %2351 = vrot.lane.b32.xlu0 %v2128, 1
    %v2352 = vpop.permute.xlu0 %2351
    %2353 = vrot.lane.b32.xlu0 %v2129, 1
    %v2354 = vpop.permute.xlu0 %2353
    %2355 = vrot.lane.b32.xlu0 %v2130, 1
    %v2356 = vpop.permute.xlu0 %2355
    %2357 = vrot.lane.b32.xlu0 %v2131, 1
    %v2358 = vpop.permute.xlu0 %2357
    %2359 = vrot.lane.b32.xlu0 %v2132, 1
    %v2360 = vpop.permute.xlu0 %2359
    %2361 = vrot.lane.b32.xlu0 %v2133, 1
    %v2362 = vpop.permute.xlu0 %2361
    %2363 = vrot.lane.b32.xlu0 %v2134, 1
    %v2364 = vpop.permute.xlu0 %2363
    %2365 = vrot.lane.b32.xlu0 %v2135, 1
    %v2366 = vpop.permute.xlu0 %2365
    %2367 = vrot.lane.b32.xlu0 %v2136, 1
    %v2368 = vpop.permute.xlu0 %2367
    %2369 = vrot.lane.b32.xlu0 %v2137, 1
    %v2370 = vpop.permute.xlu0 %2369
    %v2387 = vsub.f32 %v2122, %v2340
    %v2388 = vsub.f32 %v2123, %v2342
    %v2389 = vsub.f32 %v2124, %v2344
    %v2390 = vsub.f32 %v2125, %v2346
    %v2391 = vsub.f32 %v2126, %v2348
    %v2392 = vsub.f32 %v2127, %v2350
    %v2393 = vsub.f32 %v2128, %v2352
    %v2394 = vsub.f32 %v2129, %v2354
    %v2395 = vsub.f32 %v2130, %v2356
    %v2396 = vsub.f32 %v2131, %v2358
    %v2397 = vsub.f32 %v2132, %v2360
    %v2398 = vsub.f32 %v2133, %v2362
    %v2399 = vsub.f32 %v2134, %v2364
    %v2400 = vsub.f32 %v2135, %v2366
    %v2401 = vsub.f32 %v2136, %v2368
    %v2402 = vsub.f32 %v2137, %v2370
    %v2403 = vand.u32 2147483647, %v2387
    %v2404 = vand.u32 2147483647, %v2388
    %v2405 = vand.u32 2147483647, %v2389
    %v2406 = vand.u32 2147483647, %v2390
    %v2407 = vand.u32 2147483647, %v2391
    %v2408 = vand.u32 2147483647, %v2392
    %v2409 = vand.u32 2147483647, %v2393
    %v2410 = vand.u32 2147483647, %v2394
    %v2411 = vand.u32 2147483647, %v2395
    %v2412 = vand.u32 2147483647, %v2396
    %v2413 = vand.u32 2147483647, %v2397
    %v2414 = vand.u32 2147483647, %v2398
    %v2415 = vand.u32 2147483647, %v2399
    %v2416 = vand.u32 2147483647, %v2400
    %v2417 = vand.u32 2147483647, %v2401
    %v2418 = vand.u32 2147483647, %v2402
    %2435 = vrot.lane.b32.xlu0 %v2403, 127
    %v2436 = vpop.permute.xlu0 %2435
    %2437 = vrot.lane.b32.xlu0 %v2404, 127
    %v2438 = vpop.permute.xlu0 %2437
    %2439 = vrot.lane.b32.xlu0 %v2405, 127
    %v2440 = vpop.permute.xlu0 %2439
    %2441 = vrot.lane.b32.xlu0 %v2406, 127
    %v2442 = vpop.permute.xlu0 %2441
    %2443 = vrot.lane.b32.xlu0 %v2407, 127
    %v2444 = vpop.permute.xlu0 %2443
    %2445 = vrot.lane.b32.xlu0 %v2408, 127
    %v2446 = vpop.permute.xlu0 %2445
    %2447 = vrot.lane.b32.xlu0 %v2409, 127
    %v2448 = vpop.permute.xlu0 %2447
    %2449 = vrot.lane.b32.xlu0 %v2410, 127
    %v2450 = vpop.permute.xlu0 %2449
    %2451 = vrot.lane.b32.xlu0 %v2411, 127
    %v2452 = vpop.permute.xlu0 %2451
    %2453 = vrot.lane.b32.xlu0 %v2412, 127
    %v2454 = vpop.permute.xlu0 %2453
    %2455 = vrot.lane.b32.xlu0 %v2413, 127
    %v2456 = vpop.permute.xlu0 %2455
    %2457 = vrot.lane.b32.xlu0 %v2414, 127
    %v2458 = vpop.permute.xlu0 %2457
    %2459 = vrot.lane.b32.xlu0 %v2415, 127
    %v2460 = vpop.permute.xlu0 %2459
    %2461 = vrot.lane.b32.xlu0 %v2416, 127
    %v2462 = vpop.permute.xlu0 %2461
    %2463 = vrot.lane.b32.xlu0 %v2417, 127
    %v2464 = vpop.permute.xlu0 %2463
    %2465 = vrot.lane.b32.xlu0 %v2418, 127
    %v2466 = vpop.permute.xlu0 %2465
    %v2483 = vsel %vm452, %v2436, 0.0
    %v2484 = vsel %vm452, %v2438, 0.0
    %v2485 = vadd.f32 %v2483, %v2484
    %v2486 = vsel %vm452, %v2440, 0.0
    %v2487 = vadd.f32 %v2485, %v2486
    %v2488 = vsel %vm452, %v2442, 0.0
    %v2489 = vadd.f32 %v2487, %v2488
    %v2490 = vsel %vm452, %v2444, 0.0
    %v2491 = vadd.f32 %v2489, %v2490
    %v2492 = vsel %vm452, %v2446, 0.0
    %v2493 = vadd.f32 %v2491, %v2492
    %v2494 = vsel %vm452, %v2448, 0.0
    %v2495 = vadd.f32 %v2493, %v2494
    %v2496 = vsel %vm452, %v2450, 0.0
    %v2497 = vadd.f32 %v2495, %v2496
    %v2498 = vsel %vm452, %v2452, 0.0
    %v2499 = vadd.f32 %v2497, %v2498
    %v2500 = vsel %vm452, %v2454, 0.0
    %v2501 = vadd.f32 %v2499, %v2500
    %v2502 = vsel %vm452, %v2456, 0.0
    %v2503 = vadd.f32 %v2501, %v2502
    %v2504 = vsel %vm452, %v2458, 0.0
    %v2505 = vadd.f32 %v2503, %v2504
    %v2506 = vsel %vm452, %v2460, 0.0
    %v2507 = vadd.f32 %v2505, %v2506
    %v2508 = vsel %vm452, %v2462, 0.0
    %v2509 = vadd.f32 %v2507, %v2508
    %v2510 = vsel %vm452, %v2464, 0.0
    %v2511 = vadd.f32 %v2509, %v2510
    %v2512 = vsel %vm452, %v2466, 0.0
    %v2513 = vadd.f32 %v2511, %v2512
    %2514 = vadd.xlane.f32.xlu0 %v2513
    %v2515 = vpop.xlane.xlu0 %2514
    %v2516 = vrot.slane %v2515, 4
    %v2517 = vadd.f32 %v2515, %v2516
    %v2518 = vrot.slane %v2517, 2
    %v2519 = vadd.f32 %v2517, %v2518
    %v2520 = vrot.slane %v2519, 1
    %v2521 = vadd.f32 %v2519, %v2520
    %s2522 = vtos %v2521
    %s2523 = sadd.f32 %s2338, %s2522
    %2524 = vrot.lane.b32.xlu0 %v2403, 113
    %v2525 = vpop.permute.xlu0 %2524
    %2526 = vrot.lane.b32.xlu0 %v2404, 113
    %v2527 = vpop.permute.xlu0 %2526
    %2528 = vrot.lane.b32.xlu0 %v2405, 113
    %v2529 = vpop.permute.xlu0 %2528
    %2530 = vrot.lane.b32.xlu0 %v2406, 113
    %v2531 = vpop.permute.xlu0 %2530
    %2532 = vrot.lane.b32.xlu0 %v2407, 113
    %v2533 = vpop.permute.xlu0 %2532
    %2534 = vrot.lane.b32.xlu0 %v2408, 113
    %v2535 = vpop.permute.xlu0 %2534
    %2536 = vrot.lane.b32.xlu0 %v2409, 113
    %v2537 = vpop.permute.xlu0 %2536
    %2538 = vrot.lane.b32.xlu0 %v2410, 113
    %v2539 = vpop.permute.xlu0 %2538
    %2540 = vrot.lane.b32.xlu0 %v2411, 113
    %v2541 = vpop.permute.xlu0 %2540
    %2542 = vrot.lane.b32.xlu0 %v2412, 113
    %v2543 = vpop.permute.xlu0 %2542
    %2544 = vrot.lane.b32.xlu0 %v2413, 113
    %v2545 = vpop.permute.xlu0 %2544
    %2546 = vrot.lane.b32.xlu0 %v2414, 113
    %v2547 = vpop.permute.xlu0 %2546
    %2548 = vrot.lane.b32.xlu0 %v2415, 113
    %v2549 = vpop.permute.xlu0 %2548
    %2550 = vrot.lane.b32.xlu0 %v2416, 113
    %v2551 = vpop.permute.xlu0 %2550
    %2552 = vrot.lane.b32.xlu0 %v2417, 113
    %v2553 = vpop.permute.xlu0 %2552
    %2554 = vrot.lane.b32.xlu0 %v2418, 113
    %v2555 = vpop.permute.xlu0 %2554
    %v2572 = vsel %vm452, %v2525, 0.0
    %v2573 = vsel %vm452, %v2527, 0.0
    %v2574 = vadd.f32 %v2572, %v2573
    %v2575 = vsel %vm452, %v2529, 0.0
    %v2576 = vadd.f32 %v2574, %v2575
    %v2577 = vsel %vm452, %v2531, 0.0
    %v2578 = vadd.f32 %v2576, %v2577
    %v2579 = vsel %vm452, %v2533, 0.0
    %v2580 = vadd.f32 %v2578, %v2579
    %v2581 = vsel %vm452, %v2535, 0.0
    %v2582 = vadd.f32 %v2580, %v2581
    %v2583 = vsel %vm452, %v2537, 0.0
    %v2584 = vadd.f32 %v2582, %v2583
    %v2585 = vsel %vm452, %v2539, 0.0
    %v2586 = vadd.f32 %v2584, %v2585
    %v2587 = vsel %vm452, %v2541, 0.0
    %v2588 = vadd.f32 %v2586, %v2587
    %v2589 = vsel %vm452, %v2543, 0.0
    %v2590 = vadd.f32 %v2588, %v2589
    %v2591 = vsel %vm452, %v2545, 0.0
    %v2592 = vadd.f32 %v2590, %v2591
    %v2593 = vsel %vm452, %v2547, 0.0
    %v2594 = vadd.f32 %v2592, %v2593
    %v2595 = vsel %vm452, %v2549, 0.0
    %v2596 = vadd.f32 %v2594, %v2595
    %v2597 = vsel %vm452, %v2551, 0.0
    %v2598 = vadd.f32 %v2596, %v2597
    %v2599 = vsel %vm452, %v2553, 0.0
    %v2600 = vadd.f32 %v2598, %v2599
    %v2601 = vsel %vm452, %v2555, 0.0
    %v2602 = vadd.f32 %v2600, %v2601
    %2603 = vadd.xlane.f32.xlu0 %v2602
    %v2604 = vpop.xlane.xlu0 %2603
    %v2605 = vrot.slane %v2604, 4
    %v2606 = vadd.f32 %v2604, %v2605
    %v2607 = vrot.slane %v2606, 2
    %v2608 = vadd.f32 %v2606, %v2607
    %v2609 = vrot.slane %v2608, 1
    %v2610 = vadd.f32 %v2608, %v2609
    %s2611 = vtos %v2610
    %s2612 = sadd.f32 %s2523, %s2611
    %v2613 = vrot.slane %v2122, 6
    %v2614 = vrot.slane %v2123, 6
    %v2615 = vsel %vm583, %v2613, %v2614
    %v2616 = vrot.slane %v2124, 6
    %v2617 = vrot.slane %v2125, 6
    %v2618 = vsel %vm583, %v2616, %v2617
    %v2619 = vrot.slane %v2126, 6
    %v2620 = vrot.slane %v2127, 6
    %v2621 = vsel %vm583, %v2619, %v2620
    %v2622 = vrot.slane %v2128, 6
    %v2623 = vrot.slane %v2129, 6
    %v2624 = vsel %vm583, %v2622, %v2623
    %v2625 = vrot.slane %v2130, 6
    %v2626 = vrot.slane %v2131, 6
    %v2627 = vsel %vm583, %v2625, %v2626
    %v2628 = vrot.slane %v2132, 6
    %v2629 = vrot.slane %v2133, 6
    %v2630 = vsel %vm583, %v2628, %v2629
    %v2631 = vrot.slane %v2134, 6
    %v2632 = vrot.slane %v2135, 6
    %v2633 = vsel %vm583, %v2631, %v2632
    %v2634 = vrot.slane %v2136, 6
    %v2635 = vrot.slane %v2137, 6
    %v2636 = vsel %vm583, %v2634, %v2635
    %v2653 = vsub.f32 %v2122, %v2613
    %v2654 = vsub.f32 %v2123, %v2615
    %v2655 = vsub.f32 %v2124, %v2616
    %v2656 = vsub.f32 %v2125, %v2618
    %v2657 = vsub.f32 %v2126, %v2619
    %v2658 = vsub.f32 %v2127, %v2621
    %v2659 = vsub.f32 %v2128, %v2622
    %v2660 = vsub.f32 %v2129, %v2624
    %v2661 = vsub.f32 %v2130, %v2625
    %v2662 = vsub.f32 %v2131, %v2627
    %v2663 = vsub.f32 %v2132, %v2628
    %v2664 = vsub.f32 %v2133, %v2630
    %v2665 = vsub.f32 %v2134, %v2631
    %v2666 = vsub.f32 %v2135, %v2633
    %v2667 = vsub.f32 %v2136, %v2634
    %v2668 = vsub.f32 %v2137, %v2636
    %v2669 = vand.u32 2147483647, %v2653
    %v2670 = vand.u32 2147483647, %v2654
    %v2671 = vand.u32 2147483647, %v2655
    %v2672 = vand.u32 2147483647, %v2656
    %v2673 = vand.u32 2147483647, %v2657
    %v2674 = vand.u32 2147483647, %v2658
    %v2675 = vand.u32 2147483647, %v2659
    %v2676 = vand.u32 2147483647, %v2660
    %v2677 = vand.u32 2147483647, %v2661
    %v2678 = vand.u32 2147483647, %v2662
    %v2679 = vand.u32 2147483647, %v2663
    %v2680 = vand.u32 2147483647, %v2664
    %v2681 = vand.u32 2147483647, %v2665
    %v2682 = vand.u32 2147483647, %v2666
    %v2683 = vand.u32 2147483647, %v2667
    %v2684 = vand.u32 2147483647, %v2668
    %v2701 = vrot.slane %v2669, 2
    %v2702 = vrot.slane %v2670, 2
    %v2703 = vsel %vm672, %v2701, %v2702
    %v2704 = vrot.slane %v2671, 2
    %v2705 = vrot.slane %v2672, 2
    %v2706 = vsel %vm672, %v2704, %v2705
    %v2707 = vrot.slane %v2673, 2
    %v2708 = vrot.slane %v2674, 2
    %v2709 = vsel %vm672, %v2707, %v2708
    %v2710 = vrot.slane %v2675, 2
    %v2711 = vrot.slane %v2676, 2
    %v2712 = vsel %vm672, %v2710, %v2711
    %v2713 = vrot.slane %v2677, 2
    %v2714 = vrot.slane %v2678, 2
    %v2715 = vsel %vm672, %v2713, %v2714
    %v2716 = vrot.slane %v2679, 2
    %v2717 = vrot.slane %v2680, 2
    %v2718 = vsel %vm672, %v2716, %v2717
    %v2719 = vrot.slane %v2681, 2
    %v2720 = vrot.slane %v2682, 2
    %v2721 = vsel %vm672, %v2719, %v2720
    %v2722 = vrot.slane %v2683, 2
    %v2723 = vrot.slane %v2684, 2
    %v2724 = vsel %vm672, %v2722, %v2723
    %v2741 = vsel %vm713, %v2703, 0.0
    %v2742 = vsel %vm715, %v2702, 0.0
    %v2743 = vadd.f32 %v2741, %v2742
    %v2744 = vsel %vm713, %v2706, 0.0
    %v2745 = vadd.f32 %v2743, %v2744
    %v2746 = vsel %vm715, %v2705, 0.0
    %v2747 = vadd.f32 %v2745, %v2746
    %v2748 = vsel %vm713, %v2709, 0.0
    %v2749 = vadd.f32 %v2747, %v2748
    %v2750 = vsel %vm715, %v2708, 0.0
    %v2751 = vadd.f32 %v2749, %v2750
    %v2752 = vsel %vm713, %v2712, 0.0
    %v2753 = vadd.f32 %v2751, %v2752
    %v2754 = vsel %vm715, %v2711, 0.0
    %v2755 = vadd.f32 %v2753, %v2754
    %v2756 = vsel %vm713, %v2715, 0.0
    %v2757 = vadd.f32 %v2755, %v2756
    %v2758 = vsel %vm715, %v2714, 0.0
    %v2759 = vadd.f32 %v2757, %v2758
    %v2760 = vsel %vm713, %v2718, 0.0
    %v2761 = vadd.f32 %v2759, %v2760
    %v2762 = vsel %vm715, %v2717, 0.0
    %v2763 = vadd.f32 %v2761, %v2762
    %v2764 = vsel %vm713, %v2721, 0.0
    %v2765 = vadd.f32 %v2763, %v2764
    %v2766 = vsel %vm715, %v2720, 0.0
    %v2767 = vadd.f32 %v2765, %v2766
    %v2768 = vsel %vm713, %v2724, 0.0
    %v2769 = vadd.f32 %v2767, %v2768
    %v2770 = vsel %vm715, %v2723, 0.0
    %v2771 = vadd.f32 %v2769, %v2770
    %2772 = vadd.xlane.f32.xlu0 %v2771
    %v2773 = vpop.xlane.xlu0 %2772
    %v2774 = vrot.slane %v2773, 4
    %v2775 = vadd.f32 %v2773, %v2774
    %v2776 = vrot.slane %v2775, 2
    %v2777 = vadd.f32 %v2775, %v2776
    %v2778 = vrot.slane %v2777, 1
    %v2779 = vadd.f32 %v2777, %v2778
    %s2780 = vtos %v2779
    %s2781 = sadd.f32 %s2612, %s2780
    %v2782 = vrot.slane %v2122, 7
    %v2783 = vrot.slane %v2124, 7
    %v2784 = vrot.slane %v2126, 7
    %v2785 = vrot.slane %v2128, 7
    %v2786 = vrot.slane %v2130, 7
    %v2787 = vrot.slane %v2132, 7
    %v2788 = vrot.slane %v2134, 7
    %v2789 = vrot.slane %v2136, 7
    %v2798 = vsub.f32 %v2122, %v2782
    %v2799 = vsub.f32 %v2124, %v2783
    %v2800 = vsub.f32 %v2126, %v2784
    %v2801 = vsub.f32 %v2128, %v2785
    %v2802 = vsub.f32 %v2130, %v2786
    %v2803 = vsub.f32 %v2132, %v2787
    %v2804 = vsub.f32 %v2134, %v2788
    %v2805 = vsub.f32 %v2136, %v2789
    %v2806 = vand.u32 2147483647, %v2798
    %v2807 = vand.u32 2147483647, %v2799
    %v2808 = vand.u32 2147483647, %v2800
    %v2809 = vand.u32 2147483647, %v2801
    %v2810 = vand.u32 2147483647, %v2802
    %v2811 = vand.u32 2147483647, %v2803
    %v2812 = vand.u32 2147483647, %v2804
    %v2813 = vand.u32 2147483647, %v2805
    %v2822 = vrot.slane %v2806, 1
    %v2823 = vrot.slane %v2807, 1
    %v2824 = vrot.slane %v2808, 1
    %v2825 = vrot.slane %v2809, 1
    %v2826 = vrot.slane %v2810, 1
    %v2827 = vrot.slane %v2811, 1
    %v2828 = vrot.slane %v2812, 1
    %v2829 = vrot.slane %v2813, 1
    %v2838 = vsel %vm812, %v2822, 0.0
    %v2839 = vsel %vm812, %v2823, 0.0
    %v2840 = vadd.f32 %v2838, %v2839
    %v2841 = vsel %vm812, %v2824, 0.0
    %v2842 = vadd.f32 %v2840, %v2841
    %v2843 = vsel %vm812, %v2825, 0.0
    %v2844 = vadd.f32 %v2842, %v2843
    %v2845 = vsel %vm812, %v2826, 0.0
    %v2846 = vadd.f32 %v2844, %v2845
    %v2847 = vsel %vm812, %v2827, 0.0
    %v2848 = vadd.f32 %v2846, %v2847
    %v2849 = vsel %vm812, %v2828, 0.0
    %v2850 = vadd.f32 %v2848, %v2849
    %v2851 = vsel %vm812, %v2829, 0.0
    %v2852 = vadd.f32 %v2850, %v2851
    %2853 = vadd.xlane.f32.xlu0 %v2852
    %v2854 = vpop.xlane.xlu0 %2853
    %v2855 = vrot.slane %v2854, 4
    %v2856 = vadd.f32 %v2854, %v2855
    %v2857 = vrot.slane %v2856, 2
    %v2858 = vadd.f32 %v2856, %v2857
    %v2859 = vrot.slane %v2858, 1
    %v2860 = vadd.f32 %v2858, %v2859
    %s2861 = vtos %v2860
    %s2862 = sadd.f32 %s2781, %s2861
    %v2863 = vrot.slane %v2123, 7
    %v2864 = vrot.slane %v2125, 7
    %v2865 = vrot.slane %v2127, 7
    %v2866 = vrot.slane %v2129, 7
    %v2867 = vrot.slane %v2131, 7
    %v2868 = vrot.slane %v2133, 7
    %v2869 = vrot.slane %v2135, 7
    %v2870 = vrot.slane %v2137, 7
    %v2879 = vsub.f32 %v2123, %v2863
    %v2880 = vsub.f32 %v2125, %v2864
    %v2881 = vsub.f32 %v2127, %v2865
    %v2882 = vsub.f32 %v2129, %v2866
    %v2883 = vsub.f32 %v2131, %v2867
    %v2884 = vsub.f32 %v2133, %v2868
    %v2885 = vsub.f32 %v2135, %v2869
    %v2886 = vsub.f32 %v2137, %v2870
    %v2887 = vand.u32 2147483647, %v2879
    %v2888 = vand.u32 2147483647, %v2880
    %v2889 = vand.u32 2147483647, %v2881
    %v2890 = vand.u32 2147483647, %v2882
    %v2891 = vand.u32 2147483647, %v2883
    %v2892 = vand.u32 2147483647, %v2884
    %v2893 = vand.u32 2147483647, %v2885
    %v2894 = vand.u32 2147483647, %v2886
    %v2903 = vrot.slane %v2887, 7
    %v2904 = vrot.slane %v2888, 7
    %v2905 = vrot.slane %v2889, 7
    %v2906 = vrot.slane %v2890, 7
    %v2907 = vrot.slane %v2891, 7
    %v2908 = vrot.slane %v2892, 7
    %v2909 = vrot.slane %v2893, 7
    %v2910 = vrot.slane %v2894, 7
    %v2919 = vsel %vm812, %v2903, 0.0
    %v2920 = vsel %vm812, %v2904, 0.0
    %v2921 = vadd.f32 %v2919, %v2920
    %v2922 = vsel %vm812, %v2905, 0.0
    %v2923 = vadd.f32 %v2921, %v2922
    %v2924 = vsel %vm812, %v2906, 0.0
    %v2925 = vadd.f32 %v2923, %v2924
    %v2926 = vsel %vm812, %v2907, 0.0
    %v2927 = vadd.f32 %v2925, %v2926
    %v2928 = vsel %vm812, %v2908, 0.0
    %v2929 = vadd.f32 %v2927, %v2928
    %v2930 = vsel %vm812, %v2909, 0.0
    %v2931 = vadd.f32 %v2929, %v2930
    %v2932 = vsel %vm812, %v2910, 0.0
    %v2933 = vadd.f32 %v2931, %v2932
    %2934 = vadd.xlane.f32.xlu0 %v2933
    %v2935 = vpop.xlane.xlu0 %2934
    %v2936 = vrot.slane %v2935, 4
    %v2937 = vadd.f32 %v2935, %v2936
    %v2938 = vrot.slane %v2937, 2
    %v2939 = vadd.f32 %v2937, %v2938
    %v2940 = vrot.slane %v2939, 1
    %v2941 = vadd.f32 %v2939, %v2940
    %s2942 = vtos %v2941
    %s2943 = sadd.f32 %s2862, %s2942
    %s2944 = smul.f32 %s2943, 0.25
    %s2945 = sadd.f32 %s919, %s2944
    %v2946 = vld [vmem:[%s5] sm:$0xf]
    %v2947 = vld [vmem:[%s5 + $0x4] sm:$0xf]
    %v2948 = vld [vmem:[%s5 + $0x8] sm:$0xf]
    %v2949 = vld [vmem:[%s5 + $0xc] sm:$0xf]
    %v2950 = vld [vmem:[%s5 + $0x10] sm:$0xf]
    %v2951 = vld [vmem:[%s5 + $0x14] sm:$0xf]
    %v2952 = vld [vmem:[%s5 + $0x18] sm:$0xf]
    %v2953 = vld [vmem:[%s5 + $0x1c] sm:$0xf]
    %v2954 = vld [vmem:[%s7] sm:$0xf]
    %vm2955 = vcmask 31744
    %v2957 = vsel %vm2955, %v2946, 0
    %vm2959 = vcmask 1043456
    %v2961 = vsel %vm2959, %v2954, 0
    %2963 = vmatprep.subr.mxu0 0.0
    %2964 = vmatpush1.msra.mxu0 %v2961
    %2965 = vmatprep.subr.mxu0 0.0
    %2966 = vmatpush1.msra.mxu0 0.0
    %2967 = vmatprep.subr.mxu0 0.0
    %2968 = vmatpush1.msra.mxu0 0.0
    %2969 = vmatprep.subr.mxu0 0.0
    %2970 = vmatpush1.msra.mxu0 0.0
    %2971 = vmatprep.subr.mxu0 0.0
    %2972 = vmatpush1.msra.mxu0 0.0
    %2973 = vmatprep.subr.mxu0 0.0
    %2974 = vmatpush1.msra.mxu0 0.0
    %2975 = vmatprep.subr.mxu0 0.0
    %2976 = vmatpush1.msra.mxu0 0.0
    %2977 = vmatprep.subr.mxu0 0.0
    %2978 = vmatpush1.msra.mxu0 0.0
    %2979 = vmatprep.subr.mxu0 0.0
    %2980 = vmatpush1.msra.mxu0 0.0
    %2981 = vmatprep.subr.mxu0 0.0
    %2982 = vmatpush1.msra.mxu0 0.0
    %2983 = vmatprep.subr.mxu0 0.0
    %2984 = vmatpush1.msra.mxu0 0.0
    %2985 = vmatprep.subr.mxu0 0.0
    %2986 = vmatpush1.msra.mxu0 0.0
    %2987 = vmatprep.subr.mxu0 0.0
    %2988 = vmatpush1.msra.mxu0 0.0
    %2989 = vmatprep.subr.mxu0 0.0
    %2990 = vmatpush1.msra.mxu0 0.0
    %2991 = vmatprep.subr.mxu0 0.0
    %2992 = vmatpush1.msra.mxu0 0.0
    %2993 = vmatprep.subr.mxu0 0.0
    %2994 = vmatpush1.msra.mxu0 0.0
    %2995 = vmatprep.subr.mxu0 0.0
    %2996 = vmatpush1.msra.mxu0 0.0
    %2997 = vmatprep.subr.mxu0 0.0
    %2998 = vmatpush1.msra.mxu0 0.0
    %2999 = vmatprep.subr.mxu0 0.0
    %3000 = vmatpush1.msra.mxu0 0.0
    %3001 = vmatprep.subr.mxu0 0.0
    %3002 = vmatpush1.msra.mxu0 0.0
    %3003 = vmatprep.subr.mxu0 0.0
    %3004 = vmatpush1.msra.mxu0 0.0
    %3005 = vmatprep.subr.mxu0 0.0
    %3006 = vmatpush1.msra.mxu0 0.0
    %3007 = vmatprep.subr.mxu0 0.0
    %3008 = vmatpush1.msra.mxu0 0.0
    %3009 = vmatprep.subr.mxu0 0.0
    %3010 = vmatpush1.msra.mxu0 0.0
    %3011 = vmatprep.subr.mxu0 0.0
    %3012 = vmatpush1.msra.mxu0 0.0
    %3013 = vmatprep.subr.mxu0 0.0
    %3014 = vmatpush1.msra.mxu0 0.0
    %3015 = vmatprep.subr.mxu0 0.0
    %3016 = vmatpush1.msra.mxu0 0.0
    %3017 = vmatprep.subr.mxu0 0.0
    %3018 = vmatpush1.msra.mxu0 0.0
    %3019 = vmatprep.subr.mxu0 0.0
    %3020 = vmatpush1.msra.mxu0 0.0
    %3021 = vmatprep.subr.mxu0 0.0
    %3022 = vmatpush1.msra.mxu0 0.0
    %3023 = vmatprep.subr.mxu0 0.0
    %3024 = vmatpush1.msra.mxu0 0.0
    %3025 = vmatprep.subr.mxu0 0.0
    %3026 = vmatpush1.msra.mxu0 0.0
    %3027 = vmatprep.mubr.f32.mxu0 0.0
    %3028 = vmatmul.mubr.f32.gmra.mrb[0].mxu0 %v2957
    %v3029 = vpop.f32.mrb[0].mxu0
    %v3030 = vadd.f32 0.0, %v3029
    %v3031 = vpop.f32.mrb[0].mxu0
    %3032 = vdwg.mxu0
    %v3034 = vsel %vm2955, %v2947, 0
    %3036 = vmatprep.subr.mxu0 0.0
    %3037 = vmatpush1.msra.mxu0 %v2961
    %3038 = vmatprep.subr.mxu0 0.0
    %3039 = vmatpush1.msra.mxu0 0.0
    %3040 = vmatprep.subr.mxu0 0.0
    %3041 = vmatpush1.msra.mxu0 0.0
    %3042 = vmatprep.subr.mxu0 0.0
    %3043 = vmatpush1.msra.mxu0 0.0
    %3044 = vmatprep.subr.mxu0 0.0
    %3045 = vmatpush1.msra.mxu0 0.0
    %3046 = vmatprep.subr.mxu0 0.0
    %3047 = vmatpush1.msra.mxu0 0.0
    %3048 = vmatprep.subr.mxu0 0.0
    %3049 = vmatpush1.msra.mxu0 0.0
    %3050 = vmatprep.subr.mxu0 0.0
    %3051 = vmatpush1.msra.mxu0 0.0
    %3052 = vmatprep.subr.mxu0 0.0
    %3053 = vmatpush1.msra.mxu0 0.0
    %3054 = vmatprep.subr.mxu0 0.0
    %3055 = vmatpush1.msra.mxu0 0.0
    %3056 = vmatprep.subr.mxu0 0.0
    %3057 = vmatpush1.msra.mxu0 0.0
    %3058 = vmatprep.subr.mxu0 0.0
    %3059 = vmatpush1.msra.mxu0 0.0
    %3060 = vmatprep.subr.mxu0 0.0
    %3061 = vmatpush1.msra.mxu0 0.0
    %3062 = vmatprep.subr.mxu0 0.0
    %3063 = vmatpush1.msra.mxu0 0.0
    %3064 = vmatprep.subr.mxu0 0.0
    %3065 = vmatpush1.msra.mxu0 0.0
    %3066 = vmatprep.subr.mxu0 0.0
    %3067 = vmatpush1.msra.mxu0 0.0
    %3068 = vmatprep.subr.mxu0 0.0
    %3069 = vmatpush1.msra.mxu0 0.0
    %3070 = vmatprep.subr.mxu0 0.0
    %3071 = vmatpush1.msra.mxu0 0.0
    %3072 = vmatprep.subr.mxu0 0.0
    %3073 = vmatpush1.msra.mxu0 0.0
    %3074 = vmatprep.subr.mxu0 0.0
    %3075 = vmatpush1.msra.mxu0 0.0
    %3076 = vmatprep.subr.mxu0 0.0
    %3077 = vmatpush1.msra.mxu0 0.0
    %3078 = vmatprep.subr.mxu0 0.0
    %3079 = vmatpush1.msra.mxu0 0.0
    %3080 = vmatprep.subr.mxu0 0.0
    %3081 = vmatpush1.msra.mxu0 0.0
    %3082 = vmatprep.subr.mxu0 0.0
    %3083 = vmatpush1.msra.mxu0 0.0
    %3084 = vmatprep.subr.mxu0 0.0
    %3085 = vmatpush1.msra.mxu0 0.0
    %3086 = vmatprep.subr.mxu0 0.0
    %3087 = vmatpush1.msra.mxu0 0.0
    %3088 = vmatprep.subr.mxu0 0.0
    %3089 = vmatpush1.msra.mxu0 0.0
    %3090 = vmatprep.subr.mxu0 0.0
    %3091 = vmatpush1.msra.mxu0 0.0
    %3092 = vmatprep.subr.mxu0 0.0
    %3093 = vmatpush1.msra.mxu0 0.0
    %3094 = vmatprep.subr.mxu0 0.0
    %3095 = vmatpush1.msra.mxu0 0.0
    %3096 = vmatprep.subr.mxu0 0.0
    %3097 = vmatpush1.msra.mxu0 0.0
    %3098 = vmatprep.subr.mxu0 0.0
    %3099 = vmatpush1.msra.mxu0 0.0
    %3100 = vmatprep.mubr.f32.mxu0 0.0
    %3101 = vmatmul.mubr.f32.gmra.mrb[0].mxu0 %v3034
    %v3102 = vpop.f32.mrb[0].mxu0
    %v3103 = vadd.f32 0.0, %v3102
    %v3104 = vpop.f32.mrb[0].mxu0
    %3105 = vdwg.mxu0
    %v3107 = vsel %vm2955, %v2948, 0
    %3109 = vmatprep.subr.mxu0 0.0
    %3110 = vmatpush1.msra.mxu0 %v2961
    %3111 = vmatprep.subr.mxu0 0.0
    %3112 = vmatpush1.msra.mxu0 0.0
    %3113 = vmatprep.subr.mxu0 0.0
    %3114 = vmatpush1.msra.mxu0 0.0
    %3115 = vmatprep.subr.mxu0 0.0
    %3116 = vmatpush1.msra.mxu0 0.0
    %3117 = vmatprep.subr.mxu0 0.0
    %3118 = vmatpush1.msra.mxu0 0.0
    %3119 = vmatprep.subr.mxu0 0.0
    %3120 = vmatpush1.msra.mxu0 0.0
    %3121 = vmatprep.subr.mxu0 0.0
    %3122 = vmatpush1.msra.mxu0 0.0
    %3123 = vmatprep.subr.mxu0 0.0
    %3124 = vmatpush1.msra.mxu0 0.0
    %3125 = vmatprep.subr.mxu0 0.0
    %3126 = vmatpush1.msra.mxu0 0.0
    %3127 = vmatprep.subr.mxu0 0.0
    %3128 = vmatpush1.msra.mxu0 0.0
    %3129 = vmatprep.subr.mxu0 0.0
    %3130 = vmatpush1.msra.mxu0 0.0
    %3131 = vmatprep.subr.mxu0 0.0
    %3132 = vmatpush1.msra.mxu0 0.0
    %3133 = vmatprep.subr.mxu0 0.0
    %3134 = vmatpush1.msra.mxu0 0.0
    %3135 = vmatprep.subr.mxu0 0.0
    %3136 = vmatpush1.msra.mxu0 0.0
    %3137 = vmatprep.subr.mxu0 0.0
    %3138 = vmatpush1.msra.mxu0 0.0
    %3139 = vmatprep.subr.mxu0 0.0
    %3140 = vmatpush1.msra.mxu0 0.0
    %3141 = vmatprep.subr.mxu0 0.0
    %3142 = vmatpush1.msra.mxu0 0.0
    %3143 = vmatprep.subr.mxu0 0.0
    %3144 = vmatpush1.msra.mxu0 0.0
    %3145 = vmatprep.subr.mxu0 0.0
    %3146 = vmatpush1.msra.mxu0 0.0
    %3147 = vmatprep.subr.mxu0 0.0
    %3148 = vmatpush1.msra.mxu0 0.0
    %3149 = vmatprep.subr.mxu0 0.0
    %3150 = vmatpush1.msra.mxu0 0.0
    %3151 = vmatprep.subr.mxu0 0.0
    %3152 = vmatpush1.msra.mxu0 0.0
    %3153 = vmatprep.subr.mxu0 0.0
    %3154 = vmatpush1.msra.mxu0 0.0
    %3155 = vmatprep.subr.mxu0 0.0
    %3156 = vmatpush1.msra.mxu0 0.0
    %3157 = vmatprep.subr.mxu0 0.0
    %3158 = vmatpush1.msra.mxu0 0.0
    %3159 = vmatprep.subr.mxu0 0.0
    %3160 = vmatpush1.msra.mxu0 0.0
    %3161 = vmatprep.subr.mxu0 0.0
    %3162 = vmatpush1.msra.mxu0 0.0
    %3163 = vmatprep.subr.mxu0 0.0
    %3164 = vmatpush1.msra.mxu0 0.0
    %3165 = vmatprep.subr.mxu0 0.0
    %3166 = vmatpush1.msra.mxu0 0.0
    %3167 = vmatprep.subr.mxu0 0.0
    %3168 = vmatpush1.msra.mxu0 0.0
    %3169 = vmatprep.subr.mxu0 0.0
    %3170 = vmatpush1.msra.mxu0 0.0
    %3171 = vmatprep.subr.mxu0 0.0
    %3172 = vmatpush1.msra.mxu0 0.0
    %3173 = vmatprep.mubr.f32.mxu0 0.0
    %3174 = vmatmul.mubr.f32.gmra.mrb[0].mxu0 %v3107
    %v3175 = vpop.f32.mrb[0].mxu0
    %v3176 = vadd.f32 0.0, %v3175
    %v3177 = vpop.f32.mrb[0].mxu0
    %3178 = vdwg.mxu0
    %v3180 = vsel %vm2955, %v2949, 0
    %3182 = vmatprep.subr.mxu0 0.0
    %3183 = vmatpush1.msra.mxu0 %v2961
    %3184 = vmatprep.subr.mxu0 0.0
    %3185 = vmatpush1.msra.mxu0 0.0
    %3186 = vmatprep.subr.mxu0 0.0
    %3187 = vmatpush1.msra.mxu0 0.0
    %3188 = vmatprep.subr.mxu0 0.0
    %3189 = vmatpush1.msra.mxu0 0.0
    %3190 = vmatprep.subr.mxu0 0.0
    %3191 = vmatpush1.msra.mxu0 0.0
    %3192 = vmatprep.subr.mxu0 0.0
    %3193 = vmatpush1.msra.mxu0 0.0
    %3194 = vmatprep.subr.mxu0 0.0
    %3195 = vmatpush1.msra.mxu0 0.0
    %3196 = vmatprep.subr.mxu0 0.0
    %3197 = vmatpush1.msra.mxu0 0.0
    %3198 = vmatprep.subr.mxu0 0.0
    %3199 = vmatpush1.msra.mxu0 0.0
    %3200 = vmatprep.subr.mxu0 0.0
    %3201 = vmatpush1.msra.mxu0 0.0
    %3202 = vmatprep.subr.mxu0 0.0
    %3203 = vmatpush1.msra.mxu0 0.0
    %3204 = vmatprep.subr.mxu0 0.0
    %3205 = vmatpush1.msra.mxu0 0.0
    %3206 = vmatprep.subr.mxu0 0.0
    %3207 = vmatpush1.msra.mxu0 0.0
    %3208 = vmatprep.subr.mxu0 0.0
    %3209 = vmatpush1.msra.mxu0 0.0
    %3210 = vmatprep.subr.mxu0 0.0
    %3211 = vmatpush1.msra.mxu0 0.0
    %3212 = vmatprep.subr.mxu0 0.0
    %3213 = vmatpush1.msra.mxu0 0.0
    %3214 = vmatprep.subr.mxu0 0.0
    %3215 = vmatpush1.msra.mxu0 0.0
    %3216 = vmatprep.subr.mxu0 0.0
    %3217 = vmatpush1.msra.mxu0 0.0
    %3218 = vmatprep.subr.mxu0 0.0
    %3219 = vmatpush1.msra.mxu0 0.0
    %3220 = vmatprep.subr.mxu0 0.0
    %3221 = vmatpush1.msra.mxu0 0.0
    %3222 = vmatprep.subr.mxu0 0.0
    %3223 = vmatpush1.msra.mxu0 0.0
    %3224 = vmatprep.subr.mxu0 0.0
    %3225 = vmatpush1.msra.mxu0 0.0
    %3226 = vmatprep.subr.mxu0 0.0
    %3227 = vmatpush1.msra.mxu0 0.0
    %3228 = vmatprep.subr.mxu0 0.0
    %3229 = vmatpush1.msra.mxu0 0.0
    %3230 = vmatprep.subr.mxu0 0.0
    %3231 = vmatpush1.msra.mxu0 0.0
    %3232 = vmatprep.subr.mxu0 0.0
    %3233 = vmatpush1.msra.mxu0 0.0
    %3234 = vmatprep.subr.mxu0 0.0
    %3235 = vmatpush1.msra.mxu0 0.0
    %3236 = vmatprep.subr.mxu0 0.0
    %3237 = vmatpush1.msra.mxu0 0.0
    %3238 = vmatprep.subr.mxu0 0.0
    %3239 = vmatpush1.msra.mxu0 0.0
    %3240 = vmatprep.subr.mxu0 0.0
    %3241 = vmatpush1.msra.mxu0 0.0
    %3242 = vmatprep.subr.mxu0 0.0
    %3243 = vmatpush1.msra.mxu0 0.0
    %3244 = vmatprep.subr.mxu0 0.0
    %3245 = vmatpush1.msra.mxu0 0.0
    %3246 = vmatprep.mubr.f32.mxu0 0.0
    %3247 = vmatmul.mubr.f32.gmra.mrb[0].mxu0 %v3180
    %v3248 = vpop.f32.mrb[0].mxu0
    %v3249 = vadd.f32 0.0, %v3248
    %v3250 = vpop.f32.mrb[0].mxu0
    %3251 = vdwg.mxu0
    %v3253 = vsel %vm2955, %v2950, 0
    %3255 = vmatprep.subr.mxu0 0.0
    %3256 = vmatpush1.msra.mxu0 %v2961
    %3257 = vmatprep.subr.mxu0 0.0
    %3258 = vmatpush1.msra.mxu0 0.0
    %3259 = vmatprep.subr.mxu0 0.0
    %3260 = vmatpush1.msra.mxu0 0.0
    %3261 = vmatprep.subr.mxu0 0.0
    %3262 = vmatpush1.msra.mxu0 0.0
    %3263 = vmatprep.subr.mxu0 0.0
    %3264 = vmatpush1.msra.mxu0 0.0
    %3265 = vmatprep.subr.mxu0 0.0
    %3266 = vmatpush1.msra.mxu0 0.0
    %3267 = vmatprep.subr.mxu0 0.0
    %3268 = vmatpush1.msra.mxu0 0.0
    %3269 = vmatprep.subr.mxu0 0.0
    %3270 = vmatpush1.msra.mxu0 0.0
    %3271 = vmatprep.subr.mxu0 0.0
    %3272 = vmatpush1.msra.mxu0 0.0
    %3273 = vmatprep.subr.mxu0 0.0
    %3274 = vmatpush1.msra.mxu0 0.0
    %3275 = vmatprep.subr.mxu0 0.0
    %3276 = vmatpush1.msra.mxu0 0.0
    %3277 = vmatprep.subr.mxu0 0.0
    %3278 = vmatpush1.msra.mxu0 0.0
    %3279 = vmatprep.subr.mxu0 0.0
    %3280 = vmatpush1.msra.mxu0 0.0
    %3281 = vmatprep.subr.mxu0 0.0
    %3282 = vmatpush1.msra.mxu0 0.0
    %3283 = vmatprep.subr.mxu0 0.0
    %3284 = vmatpush1.msra.mxu0 0.0
    %3285 = vmatprep.subr.mxu0 0.0
    %3286 = vmatpush1.msra.mxu0 0.0
    %3287 = vmatprep.subr.mxu0 0.0
    %3288 = vmatpush1.msra.mxu0 0.0
    %3289 = vmatprep.subr.mxu0 0.0
    %3290 = vmatpush1.msra.mxu0 0.0
    %3291 = vmatprep.subr.mxu0 0.0
    %3292 = vmatpush1.msra.mxu0 0.0
    %3293 = vmatprep.subr.mxu0 0.0
    %3294 = vmatpush1.msra.mxu0 0.0
    %3295 = vmatprep.subr.mxu0 0.0
    %3296 = vmatpush1.msra.mxu0 0.0
    %3297 = vmatprep.subr.mxu0 0.0
    %3298 = vmatpush1.msra.mxu0 0.0
    %3299 = vmatprep.subr.mxu0 0.0
    %3300 = vmatpush1.msra.mxu0 0.0
    %3301 = vmatprep.subr.mxu0 0.0
    %3302 = vmatpush1.msra.mxu0 0.0
    %3303 = vmatprep.subr.mxu0 0.0
    %3304 = vmatpush1.msra.mxu0 0.0
    %3305 = vmatprep.subr.mxu0 0.0
    %3306 = vmatpush1.msra.mxu0 0.0
    %3307 = vmatprep.subr.mxu0 0.0
    %3308 = vmatpush1.msra.mxu0 0.0
    %3309 = vmatprep.subr.mxu0 0.0
    %3310 = vmatpush1.msra.mxu0 0.0
    %3311 = vmatprep.subr.mxu0 0.0
    %3312 = vmatpush1.msra.mxu0 0.0
    %3313 = vmatprep.subr.mxu0 0.0
    %3314 = vmatpush1.msra.mxu0 0.0
    %3315 = vmatprep.subr.mxu0 0.0
    %3316 = vmatpush1.msra.mxu0 0.0
    %3317 = vmatprep.subr.mxu0 0.0
    %3318 = vmatpush1.msra.mxu0 0.0
    %3319 = vmatprep.mubr.f32.mxu0 0.0
    %3320 = vmatmul.mubr.f32.gmra.mrb[0].mxu0 %v3253
    %v3321 = vpop.f32.mrb[0].mxu0
    %v3322 = vadd.f32 0.0, %v3321
    %v3323 = vpop.f32.mrb[0].mxu0
    %3324 = vdwg.mxu0
    %v3326 = vsel %vm2955, %v2951, 0
    %3328 = vmatprep.subr.mxu0 0.0
    %3329 = vmatpush1.msra.mxu0 %v2961
    %3330 = vmatprep.subr.mxu0 0.0
    %3331 = vmatpush1.msra.mxu0 0.0
    %3332 = vmatprep.subr.mxu0 0.0
    %3333 = vmatpush1.msra.mxu0 0.0
    %3334 = vmatprep.subr.mxu0 0.0
    %3335 = vmatpush1.msra.mxu0 0.0
    %3336 = vmatprep.subr.mxu0 0.0
    %3337 = vmatpush1.msra.mxu0 0.0
    %3338 = vmatprep.subr.mxu0 0.0
    %3339 = vmatpush1.msra.mxu0 0.0
    %3340 = vmatprep.subr.mxu0 0.0
    %3341 = vmatpush1.msra.mxu0 0.0
    %3342 = vmatprep.subr.mxu0 0.0
    %3343 = vmatpush1.msra.mxu0 0.0
    %3344 = vmatprep.subr.mxu0 0.0
    %3345 = vmatpush1.msra.mxu0 0.0
    %3346 = vmatprep.subr.mxu0 0.0
    %3347 = vmatpush1.msra.mxu0 0.0
    %3348 = vmatprep.subr.mxu0 0.0
    %3349 = vmatpush1.msra.mxu0 0.0
    %3350 = vmatprep.subr.mxu0 0.0
    %3351 = vmatpush1.msra.mxu0 0.0
    %3352 = vmatprep.subr.mxu0 0.0
    %3353 = vmatpush1.msra.mxu0 0.0
    %3354 = vmatprep.subr.mxu0 0.0
    %3355 = vmatpush1.msra.mxu0 0.0
    %3356 = vmatprep.subr.mxu0 0.0
    %3357 = vmatpush1.msra.mxu0 0.0
    %3358 = vmatprep.subr.mxu0 0.0
    %3359 = vmatpush1.msra.mxu0 0.0
    %3360 = vmatprep.subr.mxu0 0.0
    %3361 = vmatpush1.msra.mxu0 0.0
    %3362 = vmatprep.subr.mxu0 0.0
    %3363 = vmatpush1.msra.mxu0 0.0
    %3364 = vmatprep.subr.mxu0 0.0
    %3365 = vmatpush1.msra.mxu0 0.0
    %3366 = vmatprep.subr.mxu0 0.0
    %3367 = vmatpush1.msra.mxu0 0.0
    %3368 = vmatprep.subr.mxu0 0.0
    %3369 = vmatpush1.msra.mxu0 0.0
    %3370 = vmatprep.subr.mxu0 0.0
    %3371 = vmatpush1.msra.mxu0 0.0
    %3372 = vmatprep.subr.mxu0 0.0
    %3373 = vmatpush1.msra.mxu0 0.0
    %3374 = vmatprep.subr.mxu0 0.0
    %3375 = vmatpush1.msra.mxu0 0.0
    %3376 = vmatprep.subr.mxu0 0.0
    %3377 = vmatpush1.msra.mxu0 0.0
    %3378 = vmatprep.subr.mxu0 0.0
    %3379 = vmatpush1.msra.mxu0 0.0
    %3380 = vmatprep.subr.mxu0 0.0
    %3381 = vmatpush1.msra.mxu0 0.0
    %3382 = vmatprep.subr.mxu0 0.0
    %3383 = vmatpush1.msra.mxu0 0.0
    %3384 = vmatprep.subr.mxu0 0.0
    %3385 = vmatpush1.msra.mxu0 0.0
    %3386 = vmatprep.subr.mxu0 0.0
    %3387 = vmatpush1.msra.mxu0 0.0
    %3388 = vmatprep.subr.mxu0 0.0
    %3389 = vmatpush1.msra.mxu0 0.0
    %3390 = vmatprep.subr.mxu0 0.0
    %3391 = vmatpush1.msra.mxu0 0.0
    %3392 = vmatprep.mubr.f32.mxu0 0.0
    %3393 = vmatmul.mubr.f32.gmra.mrb[0].mxu0 %v3326
    %v3394 = vpop.f32.mrb[0].mxu0
    %v3395 = vadd.f32 0.0, %v3394
    %v3396 = vpop.f32.mrb[0].mxu0
    %3397 = vdwg.mxu0
    %v3399 = vsel %vm2955, %v2952, 0
    %3401 = vmatprep.subr.mxu0 0.0
    %3402 = vmatpush1.msra.mxu0 %v2961
    %3403 = vmatprep.subr.mxu0 0.0
    %3404 = vmatpush1.msra.mxu0 0.0
    %3405 = vmatprep.subr.mxu0 0.0
    %3406 = vmatpush1.msra.mxu0 0.0
    %3407 = vmatprep.subr.mxu0 0.0
    %3408 = vmatpush1.msra.mxu0 0.0
    %3409 = vmatprep.subr.mxu0 0.0
    %3410 = vmatpush1.msra.mxu0 0.0
    %3411 = vmatprep.subr.mxu0 0.0
    %3412 = vmatpush1.msra.mxu0 0.0
    %3413 = vmatprep.subr.mxu0 0.0
    %3414 = vmatpush1.msra.mxu0 0.0
    %3415 = vmatprep.subr.mxu0 0.0
    %3416 = vmatpush1.msra.mxu0 0.0
    %3417 = vmatprep.subr.mxu0 0.0
    %3418 = vmatpush1.msra.mxu0 0.0
    %3419 = vmatprep.subr.mxu0 0.0
    %3420 = vmatpush1.msra.mxu0 0.0
    %3421 = vmatprep.subr.mxu0 0.0
    %3422 = vmatpush1.msra.mxu0 0.0
    %3423 = vmatprep.subr.mxu0 0.0
    %3424 = vmatpush1.msra.mxu0 0.0
    %3425 = vmatprep.subr.mxu0 0.0
    %3426 = vmatpush1.msra.mxu0 0.0
    %3427 = vmatprep.subr.mxu0 0.0
    %3428 = vmatpush1.msra.mxu0 0.0
    %3429 = vmatprep.subr.mxu0 0.0
    %3430 = vmatpush1.msra.mxu0 0.0
    %3431 = vmatprep.subr.mxu0 0.0
    %3432 = vmatpush1.msra.mxu0 0.0
    %3433 = vmatprep.subr.mxu0 0.0
    %3434 = vmatpush1.msra.mxu0 0.0
    %3435 = vmatprep.subr.mxu0 0.0
    %3436 = vmatpush1.msra.mxu0 0.0
    %3437 = vmatprep.subr.mxu0 0.0
    %3438 = vmatpush1.msra.mxu0 0.0
    %3439 = vmatprep.subr.mxu0 0.0
    %3440 = vmatpush1.msra.mxu0 0.0
    %3441 = vmatprep.subr.mxu0 0.0
    %3442 = vmatpush1.msra.mxu0 0.0
    %3443 = vmatprep.subr.mxu0 0.0
    %3444 = vmatpush1.msra.mxu0 0.0
    %3445 = vmatprep.subr.mxu0 0.0
    %3446 = vmatpush1.msra.mxu0 0.0
    %3447 = vmatprep.subr.mxu0 0.0
    %3448 = vmatpush1.msra.mxu0 0.0
    %3449 = vmatprep.subr.mxu0 0.0
    %3450 = vmatpush1.msra.mxu0 0.0
    %3451 = vmatprep.subr.mxu0 0.0
    %3452 = vmatpush1.msra.mxu0 0.0
    %3453 = vmatprep.subr.mxu0 0.0
    %3454 = vmatpush1.msra.mxu0 0.0
    %3455 = vmatprep.subr.mxu0 0.0
    %3456 = vmatpush1.msra.mxu0 0.0
    %3457 = vmatprep.subr.mxu0 0.0
    %3458 = vmatpush1.msra.mxu0 0.0
    %3459 = vmatprep.subr.mxu0 0.0
    %3460 = vmatpush1.msra.mxu0 0.0
    %3461 = vmatprep.subr.mxu0 0.0
    %3462 = vmatpush1.msra.mxu0 0.0
    %3463 = vmatprep.subr.mxu0 0.0
    %3464 = vmatpush1.msra.mxu0 0.0
    %3465 = vmatprep.mubr.f32.mxu0 0.0
    %3466 = vmatmul.mubr.f32.gmra.mrb[0].mxu0 %v3399
    %v3467 = vpop.f32.mrb[0].mxu0
    %v3468 = vadd.f32 0.0, %v3467
    %v3469 = vpop.f32.mrb[0].mxu0
    %3470 = vdwg.mxu0
    %v3472 = vsel %vm2955, %v2953, 0
    %3474 = vmatprep.subr.mxu0 0.0
    %3475 = vmatpush1.msra.mxu0 %v2961
    %3476 = vmatprep.subr.mxu0 0.0
    %3477 = vmatpush1.msra.mxu0 0.0
    %3478 = vmatprep.subr.mxu0 0.0
    %3479 = vmatpush1.msra.mxu0 0.0
    %3480 = vmatprep.subr.mxu0 0.0
    %3481 = vmatpush1.msra.mxu0 0.0
    %3482 = vmatprep.subr.mxu0 0.0
    %3483 = vmatpush1.msra.mxu0 0.0
    %3484 = vmatprep.subr.mxu0 0.0
    %3485 = vmatpush1.msra.mxu0 0.0
    %3486 = vmatprep.subr.mxu0 0.0
    %3487 = vmatpush1.msra.mxu0 0.0
    %3488 = vmatprep.subr.mxu0 0.0
    %3489 = vmatpush1.msra.mxu0 0.0
    %3490 = vmatprep.subr.mxu0 0.0
    %3491 = vmatpush1.msra.mxu0 0.0
    %3492 = vmatprep.subr.mxu0 0.0
    %3493 = vmatpush1.msra.mxu0 0.0
    %3494 = vmatprep.subr.mxu0 0.0
    %3495 = vmatpush1.msra.mxu0 0.0
    %3496 = vmatprep.subr.mxu0 0.0
    %3497 = vmatpush1.msra.mxu0 0.0
    %3498 = vmatprep.subr.mxu0 0.0
    %3499 = vmatpush1.msra.mxu0 0.0
    %3500 = vmatprep.subr.mxu0 0.0
    %3501 = vmatpush1.msra.mxu0 0.0
    %3502 = vmatprep.subr.mxu0 0.0
    %3503 = vmatpush1.msra.mxu0 0.0
    %3504 = vmatprep.subr.mxu0 0.0
    %3505 = vmatpush1.msra.mxu0 0.0
    %3506 = vmatprep.subr.mxu0 0.0
    %3507 = vmatpush1.msra.mxu0 0.0
    %3508 = vmatprep.subr.mxu0 0.0
    %3509 = vmatpush1.msra.mxu0 0.0
    %3510 = vmatprep.subr.mxu0 0.0
    %3511 = vmatpush1.msra.mxu0 0.0
    %3512 = vmatprep.subr.mxu0 0.0
    %3513 = vmatpush1.msra.mxu0 0.0
    %3514 = vmatprep.subr.mxu0 0.0
    %3515 = vmatpush1.msra.mxu0 0.0
    %3516 = vmatprep.subr.mxu0 0.0
    %3517 = vmatpush1.msra.mxu0 0.0
    %3518 = vmatprep.subr.mxu0 0.0
    %3519 = vmatpush1.msra.mxu0 0.0
    %3520 = vmatprep.subr.mxu0 0.0
    %3521 = vmatpush1.msra.mxu0 0.0
    %3522 = vmatprep.subr.mxu0 0.0
    %3523 = vmatpush1.msra.mxu0 0.0
    %3524 = vmatprep.subr.mxu0 0.0
    %3525 = vmatpush1.msra.mxu0 0.0
    %3526 = vmatprep.subr.mxu0 0.0
    %3527 = vmatpush1.msra.mxu0 0.0
    %3528 = vmatprep.subr.mxu0 0.0
    %3529 = vmatpush1.msra.mxu0 0.0
    %3530 = vmatprep.subr.mxu0 0.0
    %3531 = vmatpush1.msra.mxu0 0.0
    %3532 = vmatprep.subr.mxu0 0.0
    %3533 = vmatpush1.msra.mxu0 0.0
    %3534 = vmatprep.subr.mxu0 0.0
    %3535 = vmatpush1.msra.mxu0 0.0
    %3536 = vmatprep.subr.mxu0 0.0
    %3537 = vmatpush1.msra.mxu0 0.0
    %3538 = vmatprep.mubr.f32.mxu0 0.0
    %3539 = vmatmul.mubr.f32.gmra.mrb[0].mxu0 %v3472
    %v3540 = vpop.f32.mrb[0].mxu0
    %v3541 = vadd.f32 0.0, %v3540
    %v3542 = vpop.f32.mrb[0].mxu0
    %3543 = vdwg.mxu0
    %v3544 = vld [vmem:[%s6] sm:$0xff]
    %v3545 = vld [vmem:[%s6 + $0x8] sm:$0xff]
    %v3547 = vsel %vm2955, %v3544, 0
    %v3550 = vsel %vm2955, %v3545, 0
    %v3553 = vsel %vm2959, %v3030, 0
    %3555 = vmatprep.subr.mxu0 0.0
    %3556 = vmatpush1.msra.mxu0 %v3553
    %3557 = vmatprep.subr.mxu0 0.0
    %3558 = vmatpush1.msra.mxu0 0.0
    %3559 = vmatprep.subr.mxu0 0.0
    %3560 = vmatpush1.msra.mxu0 0.0
    %3561 = vmatprep.subr.mxu0 0.0
    %3562 = vmatpush1.msra.mxu0 0.0
    %3563 = vmatprep.subr.mxu0 0.0
    %3564 = vmatpush1.msra.mxu0 0.0
    %3565 = vmatprep.subr.mxu0 0.0
    %3566 = vmatpush1.msra.mxu0 0.0
    %3567 = vmatprep.subr.mxu0 0.0
    %3568 = vmatpush1.msra.mxu0 0.0
    %3569 = vmatprep.subr.mxu0 0.0
    %3570 = vmatpush1.msra.mxu0 0.0
    %3571 = vmatprep.subr.mxu0 0.0
    %3572 = vmatpush1.msra.mxu0 0.0
    %3573 = vmatprep.subr.mxu0 0.0
    %3574 = vmatpush1.msra.mxu0 0.0
    %3575 = vmatprep.subr.mxu0 0.0
    %3576 = vmatpush1.msra.mxu0 0.0
    %3577 = vmatprep.subr.mxu0 0.0
    %3578 = vmatpush1.msra.mxu0 0.0
    %3579 = vmatprep.subr.mxu0 0.0
    %3580 = vmatpush1.msra.mxu0 0.0
    %3581 = vmatprep.subr.mxu0 0.0
    %3582 = vmatpush1.msra.mxu0 0.0
    %3583 = vmatprep.subr.mxu0 0.0
    %3584 = vmatpush1.msra.mxu0 0.0
    %3585 = vmatprep.subr.mxu0 0.0
    %3586 = vmatpush1.msra.mxu0 0.0
    %3587 = vmatprep.subr.mxu0 0.0
    %3588 = vmatpush1.msra.mxu0 0.0
    %3589 = vmatprep.subr.mxu0 0.0
    %3590 = vmatpush1.msra.mxu0 0.0
    %3591 = vmatprep.subr.mxu0 0.0
    %3592 = vmatpush1.msra.mxu0 0.0
    %3593 = vmatprep.subr.mxu0 0.0
    %3594 = vmatpush1.msra.mxu0 0.0
    %3595 = vmatprep.subr.mxu0 0.0
    %3596 = vmatpush1.msra.mxu0 0.0
    %3597 = vmatprep.subr.mxu0 0.0
    %3598 = vmatpush1.msra.mxu0 0.0
    %3599 = vmatprep.subr.mxu0 0.0
    %3600 = vmatpush1.msra.mxu0 0.0
    %3601 = vmatprep.subr.mxu0 0.0
    %3602 = vmatpush1.msra.mxu0 0.0
    %3603 = vmatprep.subr.mxu0 0.0
    %3604 = vmatpush1.msra.mxu0 0.0
    %3605 = vmatprep.subr.mxu0 0.0
    %3606 = vmatpush1.msra.mxu0 0.0
    %3607 = vmatprep.subr.mxu0 0.0
    %3608 = vmatpush1.msra.mxu0 0.0
    %3609 = vmatprep.subr.mxu0 0.0
    %3610 = vmatpush1.msra.mxu0 0.0
    %3611 = vmatprep.subr.mxu0 0.0
    %3612 = vmatpush1.msra.mxu0 0.0
    %3613 = vmatprep.subr.mxu0 0.0
    %3614 = vmatpush1.msra.mxu0 0.0
    %3615 = vmatprep.subr.mxu0 0.0
    %3616 = vmatpush1.msra.mxu0 0.0
    %3617 = vmatprep.subr.mxu0 0.0
    %3618 = vmatpush1.msra.mxu0 0.0
    %3619 = vmatprep.mubr.f32.mxu0 0.0
    %3620 = vmatmul.mubr.f32.gmra.mrb[0].mxu0 %v3547
    %v3621 = vpop.f32.mrb[0].mxu0
    %v3622 = vadd.f32 0.0, %v3621
    %v3623 = vpop.f32.mrb[0].mxu0
    %3624 = vmatprep.mubr.f32.mxu0 0.0
    %3625 = vmatmul.mubr.f32.gmra.mrb[0].mxu0 %v3550
    %v3626 = vpop.f32.mrb[0].mxu0
    %v3627 = vadd.f32 0.0, %v3626
    %v3628 = vpop.f32.mrb[0].mxu0
    %3629 = vdwg.mxu0
    %v3631 = vsel %vm2959, %v3103, 0
    %3633 = vmatprep.subr.mxu0 0.0
    %3634 = vmatpush1.msra.mxu0 %v3631
    %3635 = vmatprep.subr.mxu0 0.0
    %3636 = vmatpush1.msra.mxu0 0.0
    %3637 = vmatprep.subr.mxu0 0.0
    %3638 = vmatpush1.msra.mxu0 0.0
    %3639 = vmatprep.subr.mxu0 0.0
    %3640 = vmatpush1.msra.mxu0 0.0
    %3641 = vmatprep.subr.mxu0 0.0
    %3642 = vmatpush1.msra.mxu0 0.0
    %3643 = vmatprep.subr.mxu0 0.0
    %3644 = vmatpush1.msra.mxu0 0.0
    %3645 = vmatprep.subr.mxu0 0.0
    %3646 = vmatpush1.msra.mxu0 0.0
    %3647 = vmatprep.subr.mxu0 0.0
    %3648 = vmatpush1.msra.mxu0 0.0
    %3649 = vmatprep.subr.mxu0 0.0
    %3650 = vmatpush1.msra.mxu0 0.0
    %3651 = vmatprep.subr.mxu0 0.0
    %3652 = vmatpush1.msra.mxu0 0.0
    %3653 = vmatprep.subr.mxu0 0.0
    %3654 = vmatpush1.msra.mxu0 0.0
    %3655 = vmatprep.subr.mxu0 0.0
    %3656 = vmatpush1.msra.mxu0 0.0
    %3657 = vmatprep.subr.mxu0 0.0
    %3658 = vmatpush1.msra.mxu0 0.0
    %3659 = vmatprep.subr.mxu0 0.0
    %3660 = vmatpush1.msra.mxu0 0.0
    %3661 = vmatprep.subr.mxu0 0.0
    %3662 = vmatpush1.msra.mxu0 0.0
    %3663 = vmatprep.subr.mxu0 0.0
    %3664 = vmatpush1.msra.mxu0 0.0
    %3665 = vmatprep.subr.mxu0 0.0
    %3666 = vmatpush1.msra.mxu0 0.0
    %3667 = vmatprep.subr.mxu0 0.0
    %3668 = vmatpush1.msra.mxu0 0.0
    %3669 = vmatprep.subr.mxu0 0.0
    %3670 = vmatpush1.msra.mxu0 0.0
    %3671 = vmatprep.subr.mxu0 0.0
    %3672 = vmatpush1.msra.mxu0 0.0
    %3673 = vmatprep.subr.mxu0 0.0
    %3674 = vmatpush1.msra.mxu0 0.0
    %3675 = vmatprep.subr.mxu0 0.0
    %3676 = vmatpush1.msra.mxu0 0.0
    %3677 = vmatprep.subr.mxu0 0.0
    %3678 = vmatpush1.msra.mxu0 0.0
    %3679 = vmatprep.subr.mxu0 0.0
    %3680 = vmatpush1.msra.mxu0 0.0
    %3681 = vmatprep.subr.mxu0 0.0
    %3682 = vmatpush1.msra.mxu0 0.0
    %3683 = vmatprep.subr.mxu0 0.0
    %3684 = vmatpush1.msra.mxu0 0.0
    %3685 = vmatprep.subr.mxu0 0.0
    %3686 = vmatpush1.msra.mxu0 0.0
    %3687 = vmatprep.subr.mxu0 0.0
    %3688 = vmatpush1.msra.mxu0 0.0
    %3689 = vmatprep.subr.mxu0 0.0
    %3690 = vmatpush1.msra.mxu0 0.0
    %3691 = vmatprep.subr.mxu0 0.0
    %3692 = vmatpush1.msra.mxu0 0.0
    %3693 = vmatprep.subr.mxu0 0.0
    %3694 = vmatpush1.msra.mxu0 0.0
    %3695 = vmatprep.subr.mxu0 0.0
    %3696 = vmatpush1.msra.mxu0 0.0
    %3697 = vmatprep.mubr.f32.mxu0 0.0
    %3698 = vmatmul.mubr.f32.gmra.mrb[0].mxu0 %v3547
    %v3699 = vpop.f32.mrb[0].mxu0
    %v3700 = vadd.f32 0.0, %v3699
    %v3701 = vpop.f32.mrb[0].mxu0
    %3702 = vmatprep.mubr.f32.mxu0 0.0
    %3703 = vmatmul.mubr.f32.gmra.mrb[0].mxu0 %v3550
    %v3704 = vpop.f32.mrb[0].mxu0
    %v3705 = vadd.f32 0.0, %v3704
    %v3706 = vpop.f32.mrb[0].mxu0
    %3707 = vdwg.mxu0
    %v3709 = vsel %vm2959, %v3176, 0
    %3711 = vmatprep.subr.mxu0 0.0
    %3712 = vmatpush1.msra.mxu0 %v3709
    %3713 = vmatprep.subr.mxu0 0.0
    %3714 = vmatpush1.msra.mxu0 0.0
    %3715 = vmatprep.subr.mxu0 0.0
    %3716 = vmatpush1.msra.mxu0 0.0
    %3717 = vmatprep.subr.mxu0 0.0
    %3718 = vmatpush1.msra.mxu0 0.0
    %3719 = vmatprep.subr.mxu0 0.0
    %3720 = vmatpush1.msra.mxu0 0.0
    %3721 = vmatprep.subr.mxu0 0.0
    %3722 = vmatpush1.msra.mxu0 0.0
    %3723 = vmatprep.subr.mxu0 0.0
    %3724 = vmatpush1.msra.mxu0 0.0
    %3725 = vmatprep.subr.mxu0 0.0
    %3726 = vmatpush1.msra.mxu0 0.0
    %3727 = vmatprep.subr.mxu0 0.0
    %3728 = vmatpush1.msra.mxu0 0.0
    %3729 = vmatprep.subr.mxu0 0.0
    %3730 = vmatpush1.msra.mxu0 0.0
    %3731 = vmatprep.subr.mxu0 0.0
    %3732 = vmatpush1.msra.mxu0 0.0
    %3733 = vmatprep.subr.mxu0 0.0
    %3734 = vmatpush1.msra.mxu0 0.0
    %3735 = vmatprep.subr.mxu0 0.0
    %3736 = vmatpush1.msra.mxu0 0.0
    %3737 = vmatprep.subr.mxu0 0.0
    %3738 = vmatpush1.msra.mxu0 0.0
    %3739 = vmatprep.subr.mxu0 0.0
    %3740 = vmatpush1.msra.mxu0 0.0
    %3741 = vmatprep.subr.mxu0 0.0
    %3742 = vmatpush1.msra.mxu0 0.0
    %3743 = vmatprep.subr.mxu0 0.0
    %3744 = vmatpush1.msra.mxu0 0.0
    %3745 = vmatprep.subr.mxu0 0.0
    %3746 = vmatpush1.msra.mxu0 0.0
    %3747 = vmatprep.subr.mxu0 0.0
    %3748 = vmatpush1.msra.mxu0 0.0
    %3749 = vmatprep.subr.mxu0 0.0
    %3750 = vmatpush1.msra.mxu0 0.0
    %3751 = vmatprep.subr.mxu0 0.0
    %3752 = vmatpush1.msra.mxu0 0.0
    %3753 = vmatprep.subr.mxu0 0.0
    %3754 = vmatpush1.msra.mxu0 0.0
    %3755 = vmatprep.subr.mxu0 0.0
    %3756 = vmatpush1.msra.mxu0 0.0
    %3757 = vmatprep.subr.mxu0 0.0
    %3758 = vmatpush1.msra.mxu0 0.0
    %3759 = vmatprep.subr.mxu0 0.0
    %3760 = vmatpush1.msra.mxu0 0.0
    %3761 = vmatprep.subr.mxu0 0.0
    %3762 = vmatpush1.msra.mxu0 0.0
    %3763 = vmatprep.subr.mxu0 0.0
    %3764 = vmatpush1.msra.mxu0 0.0
    %3765 = vmatprep.subr.mxu0 0.0
    %3766 = vmatpush1.msra.mxu0 0.0
    %3767 = vmatprep.subr.mxu0 0.0
    %3768 = vmatpush1.msra.mxu0 0.0
    %3769 = vmatprep.subr.mxu0 0.0
    %3770 = vmatpush1.msra.mxu0 0.0
    %3771 = vmatprep.subr.mxu0 0.0
    %3772 = vmatpush1.msra.mxu0 0.0
    %3773 = vmatprep.subr.mxu0 0.0
    %3774 = vmatpush1.msra.mxu0 0.0
    %3775 = vmatprep.mubr.f32.mxu0 0.0
    %3776 = vmatmul.mubr.f32.gmra.mrb[0].mxu0 %v3547
    %v3777 = vpop.f32.mrb[0].mxu0
    %v3778 = vadd.f32 0.0, %v3777
    %v3779 = vpop.f32.mrb[0].mxu0
    %3780 = vmatprep.mubr.f32.mxu0 0.0
    %3781 = vmatmul.mubr.f32.gmra.mrb[0].mxu0 %v3550
    %v3782 = vpop.f32.mrb[0].mxu0
    %v3783 = vadd.f32 0.0, %v3782
    %v3784 = vpop.f32.mrb[0].mxu0
    %3785 = vdwg.mxu0
    %v3787 = vsel %vm2959, %v3249, 0
    %3789 = vmatprep.subr.mxu0 0.0
    %3790 = vmatpush1.msra.mxu0 %v3787
    %3791 = vmatprep.subr.mxu0 0.0
    %3792 = vmatpush1.msra.mxu0 0.0
    %3793 = vmatprep.subr.mxu0 0.0
    %3794 = vmatpush1.msra.mxu0 0.0
    %3795 = vmatprep.subr.mxu0 0.0
    %3796 = vmatpush1.msra.mxu0 0.0
    %3797 = vmatprep.subr.mxu0 0.0
    %3798 = vmatpush1.msra.mxu0 0.0
    %3799 = vmatprep.subr.mxu0 0.0
    %3800 = vmatpush1.msra.mxu0 0.0
    %3801 = vmatprep.subr.mxu0 0.0
    %3802 = vmatpush1.msra.mxu0 0.0
    %3803 = vmatprep.subr.mxu0 0.0
    %3804 = vmatpush1.msra.mxu0 0.0
    %3805 = vmatprep.subr.mxu0 0.0
    %3806 = vmatpush1.msra.mxu0 0.0
    %3807 = vmatprep.subr.mxu0 0.0
    %3808 = vmatpush1.msra.mxu0 0.0
    %3809 = vmatprep.subr.mxu0 0.0
    %3810 = vmatpush1.msra.mxu0 0.0
    %3811 = vmatprep.subr.mxu0 0.0
    %3812 = vmatpush1.msra.mxu0 0.0
    %3813 = vmatprep.subr.mxu0 0.0
    %3814 = vmatpush1.msra.mxu0 0.0
    %3815 = vmatprep.subr.mxu0 0.0
    %3816 = vmatpush1.msra.mxu0 0.0
    %3817 = vmatprep.subr.mxu0 0.0
    %3818 = vmatpush1.msra.mxu0 0.0
    %3819 = vmatprep.subr.mxu0 0.0
    %3820 = vmatpush1.msra.mxu0 0.0
    %3821 = vmatprep.subr.mxu0 0.0
    %3822 = vmatpush1.msra.mxu0 0.0
    %3823 = vmatprep.subr.mxu0 0.0
    %3824 = vmatpush1.msra.mxu0 0.0
    %3825 = vmatprep.subr.mxu0 0.0
    %3826 = vmatpush1.msra.mxu0 0.0
    %3827 = vmatprep.subr.mxu0 0.0
    %3828 = vmatpush1.msra.mxu0 0.0
    %3829 = vmatprep.subr.mxu0 0.0
    %3830 = vmatpush1.msra.mxu0 0.0
    %3831 = vmatprep.subr.mxu0 0.0
    %3832 = vmatpush1.msra.mxu0 0.0
    %3833 = vmatprep.subr.mxu0 0.0
    %3834 = vmatpush1.msra.mxu0 0.0
    %3835 = vmatprep.subr.mxu0 0.0
    %3836 = vmatpush1.msra.mxu0 0.0
    %3837 = vmatprep.subr.mxu0 0.0
    %3838 = vmatpush1.msra.mxu0 0.0
    %3839 = vmatprep.subr.mxu0 0.0
    %3840 = vmatpush1.msra.mxu0 0.0
    %3841 = vmatprep.subr.mxu0 0.0
    %3842 = vmatpush1.msra.mxu0 0.0
    %3843 = vmatprep.subr.mxu0 0.0
    %3844 = vmatpush1.msra.mxu0 0.0
    %3845 = vmatprep.subr.mxu0 0.0
    %3846 = vmatpush1.msra.mxu0 0.0
    %3847 = vmatprep.subr.mxu0 0.0
    %3848 = vmatpush1.msra.mxu0 0.0
    %3849 = vmatprep.subr.mxu0 0.0
    %3850 = vmatpush1.msra.mxu0 0.0
    %3851 = vmatprep.subr.mxu0 0.0
    %3852 = vmatpush1.msra.mxu0 0.0
    %3853 = vmatprep.mubr.f32.mxu0 0.0
    %3854 = vmatmul.mubr.f32.gmra.mrb[0].mxu0 %v3547
    %v3855 = vpop.f32.mrb[0].mxu0
    %v3856 = vadd.f32 0.0, %v3855
    %v3857 = vpop.f32.mrb[0].mxu0
    %3858 = vmatprep.mubr.f32.mxu0 0.0
    %3859 = vmatmul.mubr.f32.gmra.mrb[0].mxu0 %v3550
    %v3860 = vpop.f32.mrb[0].mxu0
    %v3861 = vadd.f32 0.0, %v3860
    %v3862 = vpop.f32.mrb[0].mxu0
    %3863 = vdwg.mxu0
    %v3865 = vsel %vm2959, %v3322, 0
    %3867 = vmatprep.subr.mxu0 0.0
    %3868 = vmatpush1.msra.mxu0 %v3865
    %3869 = vmatprep.subr.mxu0 0.0
    %3870 = vmatpush1.msra.mxu0 0.0
    %3871 = vmatprep.subr.mxu0 0.0
    %3872 = vmatpush1.msra.mxu0 0.0
    %3873 = vmatprep.subr.mxu0 0.0
    %3874 = vmatpush1.msra.mxu0 0.0
    %3875 = vmatprep.subr.mxu0 0.0
    %3876 = vmatpush1.msra.mxu0 0.0
    %3877 = vmatprep.subr.mxu0 0.0
    %3878 = vmatpush1.msra.mxu0 0.0
    %3879 = vmatprep.subr.mxu0 0.0
    %3880 = vmatpush1.msra.mxu0 0.0
    %3881 = vmatprep.subr.mxu0 0.0
    %3882 = vmatpush1.msra.mxu0 0.0
    %3883 = vmatprep.subr.mxu0 0.0
    %3884 = vmatpush1.msra.mxu0 0.0
    %3885 = vmatprep.subr.mxu0 0.0
    %3886 = vmatpush1.msra.mxu0 0.0
    %3887 = vmatprep.subr.mxu0 0.0
    %3888 = vmatpush1.msra.mxu0 0.0
    %3889 = vmatprep.subr.mxu0 0.0
    %3890 = vmatpush1.msra.mxu0 0.0
    %3891 = vmatprep.subr.mxu0 0.0
    %3892 = vmatpush1.msra.mxu0 0.0
    %3893 = vmatprep.subr.mxu0 0.0
    %3894 = vmatpush1.msra.mxu0 0.0
    %3895 = vmatprep.subr.mxu0 0.0
    %3896 = vmatpush1.msra.mxu0 0.0
    %3897 = vmatprep.subr.mxu0 0.0
    %3898 = vmatpush1.msra.mxu0 0.0
    %3899 = vmatprep.subr.mxu0 0.0
    %3900 = vmatpush1.msra.mxu0 0.0
    %3901 = vmatprep.subr.mxu0 0.0
    %3902 = vmatpush1.msra.mxu0 0.0
    %3903 = vmatprep.subr.mxu0 0.0
    %3904 = vmatpush1.msra.mxu0 0.0
    %3905 = vmatprep.subr.mxu0 0.0
    %3906 = vmatpush1.msra.mxu0 0.0
    %3907 = vmatprep.subr.mxu0 0.0
    %3908 = vmatpush1.msra.mxu0 0.0
    %3909 = vmatprep.subr.mxu0 0.0
    %3910 = vmatpush1.msra.mxu0 0.0
    %3911 = vmatprep.subr.mxu0 0.0
    %3912 = vmatpush1.msra.mxu0 0.0
    %3913 = vmatprep.subr.mxu0 0.0
    %3914 = vmatpush1.msra.mxu0 0.0
    %3915 = vmatprep.subr.mxu0 0.0
    %3916 = vmatpush1.msra.mxu0 0.0
    %3917 = vmatprep.subr.mxu0 0.0
    %3918 = vmatpush1.msra.mxu0 0.0
    %3919 = vmatprep.subr.mxu0 0.0
    %3920 = vmatpush1.msra.mxu0 0.0
    %3921 = vmatprep.subr.mxu0 0.0
    %3922 = vmatpush1.msra.mxu0 0.0
    %3923 = vmatprep.subr.mxu0 0.0
    %3924 = vmatpush1.msra.mxu0 0.0
    %3925 = vmatprep.subr.mxu0 0.0
    %3926 = vmatpush1.msra.mxu0 0.0
    %3927 = vmatprep.subr.mxu0 0.0
    %3928 = vmatpush1.msra.mxu0 0.0
    %3929 = vmatprep.subr.mxu0 0.0
    %3930 = vmatpush1.msra.mxu0 0.0
    %3931 = vmatprep.mubr.f32.mxu0 0.0
    %3932 = vmatmul.mubr.f32.gmra.mrb[0].mxu0 %v3547
    %v3933 = vpop.f32.mrb[0].mxu0
    %v3934 = vadd.f32 0.0, %v3933
    %v3935 = vpop.f32.mrb[0].mxu0
    %3936 = vmatprep.mubr.f32.mxu0 0.0
    %3937 = vmatmul.mubr.f32.gmra.mrb[0].mxu0 %v3550
    %v3938 = vpop.f32.mrb[0].mxu0
    %v3939 = vadd.f32 0.0, %v3938
    %v3940 = vpop.f32.mrb[0].mxu0
    %3941 = vdwg.mxu0
    %v3943 = vsel %vm2959, %v3395, 0
    %3945 = vmatprep.subr.mxu0 0.0
    %3946 = vmatpush1.msra.mxu0 %v3943
    %3947 = vmatprep.subr.mxu0 0.0
    %3948 = vmatpush1.msra.mxu0 0.0
    %3949 = vmatprep.subr.mxu0 0.0
    %3950 = vmatpush1.msra.mxu0 0.0
    %3951 = vmatprep.subr.mxu0 0.0
    %3952 = vmatpush1.msra.mxu0 0.0
    %3953 = vmatprep.subr.mxu0 0.0
    %3954 = vmatpush1.msra.mxu0 0.0
    %3955 = vmatprep.subr.mxu0 0.0
    %3956 = vmatpush1.msra.mxu0 0.0
    %3957 = vmatprep.subr.mxu0 0.0
    %3958 = vmatpush1.msra.mxu0 0.0
    %3959 = vmatprep.subr.mxu0 0.0
    %3960 = vmatpush1.msra.mxu0 0.0
    %3961 = vmatprep.subr.mxu0 0.0
    %3962 = vmatpush1.msra.mxu0 0.0
    %3963 = vmatprep.subr.mxu0 0.0
    %3964 = vmatpush1.msra.mxu0 0.0
    %3965 = vmatprep.subr.mxu0 0.0
    %3966 = vmatpush1.msra.mxu0 0.0
    %3967 = vmatprep.subr.mxu0 0.0
    %3968 = vmatpush1.msra.mxu0 0.0
    %3969 = vmatprep.subr.mxu0 0.0
    %3970 = vmatpush1.msra.mxu0 0.0
    %3971 = vmatprep.subr.mxu0 0.0
    %3972 = vmatpush1.msra.mxu0 0.0
    %3973 = vmatprep.subr.mxu0 0.0
    %3974 = vmatpush1.msra.mxu0 0.0
    %3975 = vmatprep.subr.mxu0 0.0
    %3976 = vmatpush1.msra.mxu0 0.0
    %3977 = vmatprep.subr.mxu0 0.0
    %3978 = vmatpush1.msra.mxu0 0.0
    %3979 = vmatprep.subr.mxu0 0.0
    %3980 = vmatpush1.msra.mxu0 0.0
    %3981 = vmatprep.subr.mxu0 0.0
    %3982 = vmatpush1.msra.mxu0 0.0
    %3983 = vmatprep.subr.mxu0 0.0
    %3984 = vmatpush1.msra.mxu0 0.0
    %3985 = vmatprep.subr.mxu0 0.0
    %3986 = vmatpush1.msra.mxu0 0.0
    %3987 = vmatprep.subr.mxu0 0.0
    %3988 = vmatpush1.msra.mxu0 0.0
    %3989 = vmatprep.subr.mxu0 0.0
    %3990 = vmatpush1.msra.mxu0 0.0
    %3991 = vmatprep.subr.mxu0 0.0
    %3992 = vmatpush1.msra.mxu0 0.0
    %3993 = vmatprep.subr.mxu0 0.0
    %3994 = vmatpush1.msra.mxu0 0.0
    %3995 = vmatprep.subr.mxu0 0.0
    %3996 = vmatpush1.msra.mxu0 0.0
    %3997 = vmatprep.subr.mxu0 0.0
    %3998 = vmatpush1.msra.mxu0 0.0
    %3999 = vmatprep.subr.mxu0 0.0
    %4000 = vmatpush1.msra.mxu0 0.0
    %4001 = vmatprep.subr.mxu0 0.0
    %4002 = vmatpush1.msra.mxu0 0.0
    %4003 = vmatprep.subr.mxu0 0.0
    %4004 = vmatpush1.msra.mxu0 0.0
    %4005 = vmatprep.subr.mxu0 0.0
    %4006 = vmatpush1.msra.mxu0 0.0
    %4007 = vmatprep.subr.mxu0 0.0
    %4008 = vmatpush1.msra.mxu0 0.0
    %4009 = vmatprep.mubr.f32.mxu0 0.0
    %4010 = vmatmul.mubr.f32.gmra.mrb[0].mxu0 %v3547
    %v4011 = vpop.f32.mrb[0].mxu0
    %v4012 = vadd.f32 0.0, %v4011
    %v4013 = vpop.f32.mrb[0].mxu0
    %4014 = vmatprep.mubr.f32.mxu0 0.0
    %4015 = vmatmul.mubr.f32.gmra.mrb[0].mxu0 %v3550
    %v4016 = vpop.f32.mrb[0].mxu0
    %v4017 = vadd.f32 0.0, %v4016
    %v4018 = vpop.f32.mrb[0].mxu0
    %4019 = vdwg.mxu0
    %v4021 = vsel %vm2959, %v3468, 0
    %4023 = vmatprep.subr.mxu0 0.0
    %4024 = vmatpush1.msra.mxu0 %v4021
    %4025 = vmatprep.subr.mxu0 0.0
    %4026 = vmatpush1.msra.mxu0 0.0
    %4027 = vmatprep.subr.mxu0 0.0
    %4028 = vmatpush1.msra.mxu0 0.0
    %4029 = vmatprep.subr.mxu0 0.0
    %4030 = vmatpush1.msra.mxu0 0.0
    %4031 = vmatprep.subr.mxu0 0.0
    %4032 = vmatpush1.msra.mxu0 0.0
    %4033 = vmatprep.subr.mxu0 0.0
    %4034 = vmatpush1.msra.mxu0 0.0
    %4035 = vmatprep.subr.mxu0 0.0
    %4036 = vmatpush1.msra.mxu0 0.0
    %4037 = vmatprep.subr.mxu0 0.0
    %4038 = vmatpush1.msra.mxu0 0.0
    %4039 = vmatprep.subr.mxu0 0.0
    %4040 = vmatpush1.msra.mxu0 0.0
    %4041 = vmatprep.subr.mxu0 0.0
    %4042 = vmatpush1.msra.mxu0 0.0
    %4043 = vmatprep.subr.mxu0 0.0
    %4044 = vmatpush1.msra.mxu0 0.0
    %4045 = vmatprep.subr.mxu0 0.0
    %4046 = vmatpush1.msra.mxu0 0.0
    %4047 = vmatprep.subr.mxu0 0.0
    %4048 = vmatpush1.msra.mxu0 0.0
    %4049 = vmatprep.subr.mxu0 0.0
    %4050 = vmatpush1.msra.mxu0 0.0
    %4051 = vmatprep.subr.mxu0 0.0
    %4052 = vmatpush1.msra.mxu0 0.0
    %4053 = vmatprep.subr.mxu0 0.0
    %4054 = vmatpush1.msra.mxu0 0.0
    %4055 = vmatprep.subr.mxu0 0.0
    %4056 = vmatpush1.msra.mxu0 0.0
    %4057 = vmatprep.subr.mxu0 0.0
    %4058 = vmatpush1.msra.mxu0 0.0
    %4059 = vmatprep.subr.mxu0 0.0
    %4060 = vmatpush1.msra.mxu0 0.0
    %4061 = vmatprep.subr.mxu0 0.0
    %4062 = vmatpush1.msra.mxu0 0.0
    %4063 = vmatprep.subr.mxu0 0.0
    %4064 = vmatpush1.msra.mxu0 0.0
    %4065 = vmatprep.subr.mxu0 0.0
    %4066 = vmatpush1.msra.mxu0 0.0
    %4067 = vmatprep.subr.mxu0 0.0
    %4068 = vmatpush1.msra.mxu0 0.0
    %4069 = vmatprep.subr.mxu0 0.0
    %4070 = vmatpush1.msra.mxu0 0.0
    %4071 = vmatprep.subr.mxu0 0.0
    %4072 = vmatpush1.msra.mxu0 0.0
    %4073 = vmatprep.subr.mxu0 0.0
    %4074 = vmatpush1.msra.mxu0 0.0
    %4075 = vmatprep.subr.mxu0 0.0
    %4076 = vmatpush1.msra.mxu0 0.0
    %4077 = vmatprep.subr.mxu0 0.0
    %4078 = vmatpush1.msra.mxu0 0.0
    %4079 = vmatprep.subr.mxu0 0.0
    %4080 = vmatpush1.msra.mxu0 0.0
    %4081 = vmatprep.subr.mxu0 0.0
    %4082 = vmatpush1.msra.mxu0 0.0
    %4083 = vmatprep.subr.mxu0 0.0
    %4084 = vmatpush1.msra.mxu0 0.0
    %4085 = vmatprep.subr.mxu0 0.0
    %4086 = vmatpush1.msra.mxu0 0.0
    %4087 = vmatprep.mubr.f32.mxu0 0.0
    %4088 = vmatmul.mubr.f32.gmra.mrb[0].mxu0 %v3547
    %v4089 = vpop.f32.mrb[0].mxu0
    %v4090 = vadd.f32 0.0, %v4089
    %v4091 = vpop.f32.mrb[0].mxu0
    %4092 = vmatprep.mubr.f32.mxu0 0.0
    %4093 = vmatmul.mubr.f32.gmra.mrb[0].mxu0 %v3550
    %v4094 = vpop.f32.mrb[0].mxu0
    %v4095 = vadd.f32 0.0, %v4094
    %v4096 = vpop.f32.mrb[0].mxu0
    %4097 = vdwg.mxu0
    %v4099 = vsel %vm2959, %v3541, 0
    %4101 = vmatprep.subr.mxu0 0.0
    %4102 = vmatpush1.msra.mxu0 %v4099
    %4103 = vmatprep.subr.mxu0 0.0
    %4104 = vmatpush1.msra.mxu0 0.0
    %4105 = vmatprep.subr.mxu0 0.0
    %4106 = vmatpush1.msra.mxu0 0.0
    %4107 = vmatprep.subr.mxu0 0.0
    %4108 = vmatpush1.msra.mxu0 0.0
    %4109 = vmatprep.subr.mxu0 0.0
    %4110 = vmatpush1.msra.mxu0 0.0
    %4111 = vmatprep.subr.mxu0 0.0
    %4112 = vmatpush1.msra.mxu0 0.0
    %4113 = vmatprep.subr.mxu0 0.0
    %4114 = vmatpush1.msra.mxu0 0.0
    %4115 = vmatprep.subr.mxu0 0.0
    %4116 = vmatpush1.msra.mxu0 0.0
    %4117 = vmatprep.subr.mxu0 0.0
    %4118 = vmatpush1.msra.mxu0 0.0
    %4119 = vmatprep.subr.mxu0 0.0
    %4120 = vmatpush1.msra.mxu0 0.0
    %4121 = vmatprep.subr.mxu0 0.0
    %4122 = vmatpush1.msra.mxu0 0.0
    %4123 = vmatprep.subr.mxu0 0.0
    %4124 = vmatpush1.msra.mxu0 0.0
    %4125 = vmatprep.subr.mxu0 0.0
    %4126 = vmatpush1.msra.mxu0 0.0
    %4127 = vmatprep.subr.mxu0 0.0
    %4128 = vmatpush1.msra.mxu0 0.0
    %4129 = vmatprep.subr.mxu0 0.0
    %4130 = vmatpush1.msra.mxu0 0.0
    %4131 = vmatprep.subr.mxu0 0.0
    %4132 = vmatpush1.msra.mxu0 0.0
    %4133 = vmatprep.subr.mxu0 0.0
    %4134 = vmatpush1.msra.mxu0 0.0
    %4135 = vmatprep.subr.mxu0 0.0
    %4136 = vmatpush1.msra.mxu0 0.0
    %4137 = vmatprep.subr.mxu0 0.0
    %4138 = vmatpush1.msra.mxu0 0.0
    %4139 = vmatprep.subr.mxu0 0.0
    %4140 = vmatpush1.msra.mxu0 0.0
    %4141 = vmatprep.subr.mxu0 0.0
    %4142 = vmatpush1.msra.mxu0 0.0
    %4143 = vmatprep.subr.mxu0 0.0
    %4144 = vmatpush1.msra.mxu0 0.0
    %4145 = vmatprep.subr.mxu0 0.0
    %4146 = vmatpush1.msra.mxu0 0.0
    %4147 = vmatprep.subr.mxu0 0.0
    %4148 = vmatpush1.msra.mxu0 0.0
    %4149 = vmatprep.subr.mxu0 0.0
    %4150 = vmatpush1.msra.mxu0 0.0
    %4151 = vmatprep.subr.mxu0 0.0
    %4152 = vmatpush1.msra.mxu0 0.0
    %4153 = vmatprep.subr.mxu0 0.0
    %4154 = vmatpush1.msra.mxu0 0.0
    %4155 = vmatprep.subr.mxu0 0.0
    %4156 = vmatpush1.msra.mxu0 0.0
    %4157 = vmatprep.subr.mxu0 0.0
    %4158 = vmatpush1.msra.mxu0 0.0
    %4159 = vmatprep.subr.mxu0 0.0
    %4160 = vmatpush1.msra.mxu0 0.0
    %4161 = vmatprep.subr.mxu0 0.0
    %4162 = vmatpush1.msra.mxu0 0.0
    %4163 = vmatprep.subr.mxu0 0.0
    %4164 = vmatpush1.msra.mxu0 0.0
    %4165 = vmatprep.mubr.f32.mxu0 0.0
    %4166 = vmatmul.mubr.f32.gmra.mrb[0].mxu0 %v3547
    %v4167 = vpop.f32.mrb[0].mxu0
    %v4168 = vadd.f32 0.0, %v4167
    %v4169 = vpop.f32.mrb[0].mxu0
    %4170 = vmatprep.mubr.f32.mxu0 0.0
    %4171 = vmatmul.mubr.f32.gmra.mrb[0].mxu0 %v3550
    %v4172 = vpop.f32.mrb[0].mxu0
    %v4173 = vadd.f32 0.0, %v4172
    %v4174 = vpop.f32.mrb[0].mxu0
    %4175 = vdwg.mxu0
    %v4176 = vsub.f32 %v3622, %v58
    %v4177 = vsub.f32 %v3627, %v59
    %v4178 = vsub.f32 %v3700, %v60
    %v4179 = vsub.f32 %v3705, %v61
    %v4180 = vsub.f32 %v3778, %v62
    %v4181 = vsub.f32 %v3783, %v63
    %v4182 = vsub.f32 %v3856, %v64
    %v4183 = vsub.f32 %v3861, %v65
    %v4184 = vsub.f32 %v3934, %v66
    %v4185 = vsub.f32 %v3939, %v67
    %v4186 = vsub.f32 %v4012, %v68
    %v4187 = vsub.f32 %v4017, %v69
    %v4188 = vsub.f32 %v4090, %v70
    %v4189 = vsub.f32 %v4095, %v71
    %v4190 = vsub.f32 %v4168, %v72
    %v4191 = vsub.f32 %v4173, %v73
    %4208 = vrot.lane.b32.xlu0 %v4176, 2
    %v4209 = vpop.permute.xlu0 %4208
    %4210 = vrot.lane.b32.xlu0 %v4177, 2
    %v4211 = vpop.permute.xlu0 %4210
    %4212 = vrot.lane.b32.xlu0 %v4178, 2
    %v4213 = vpop.permute.xlu0 %4212
    %4214 = vrot.lane.b32.xlu0 %v4179, 2
    %v4215 = vpop.permute.xlu0 %4214
    %4216 = vrot.lane.b32.xlu0 %v4180, 2
    %v4217 = vpop.permute.xlu0 %4216
    %4218 = vrot.lane.b32.xlu0 %v4181, 2
    %v4219 = vpop.permute.xlu0 %4218
    %4220 = vrot.lane.b32.xlu0 %v4182, 2
    %v4221 = vpop.permute.xlu0 %4220
    %4222 = vrot.lane.b32.xlu0 %v4183, 2
    %v4223 = vpop.permute.xlu0 %4222
    %4224 = vrot.lane.b32.xlu0 %v4184, 2
    %v4225 = vpop.permute.xlu0 %4224
    %4226 = vrot.lane.b32.xlu0 %v4185, 2
    %v4227 = vpop.permute.xlu0 %4226
    %4228 = vrot.lane.b32.xlu0 %v4186, 2
    %v4229 = vpop.permute.xlu0 %4228
    %4230 = vrot.lane.b32.xlu0 %v4187, 2
    %v4231 = vpop.permute.xlu0 %4230
    %4232 = vrot.lane.b32.xlu0 %v4188, 2
    %v4233 = vpop.permute.xlu0 %4232
    %4234 = vrot.lane.b32.xlu0 %v4189, 2
    %v4235 = vpop.permute.xlu0 %4234
    %4236 = vrot.lane.b32.xlu0 %v4190, 2
    %v4237 = vpop.permute.xlu0 %4236
    %4238 = vrot.lane.b32.xlu0 %v4191, 2
    %v4239 = vpop.permute.xlu0 %4238
    %v4256 = vsub.f32 %v4176, %v4209
    %v4257 = vsub.f32 %v4177, %v4211
    %v4258 = vsub.f32 %v4178, %v4213
    %v4259 = vsub.f32 %v4179, %v4215
    %v4260 = vsub.f32 %v4180, %v4217
    %v4261 = vsub.f32 %v4181, %v4219
    %v4262 = vsub.f32 %v4182, %v4221
    %v4263 = vsub.f32 %v4183, %v4223
    %v4264 = vsub.f32 %v4184, %v4225
    %v4265 = vsub.f32 %v4185, %v4227
    %v4266 = vsub.f32 %v4186, %v4229
    %v4267 = vsub.f32 %v4187, %v4231
    %v4268 = vsub.f32 %v4188, %v4233
    %v4269 = vsub.f32 %v4189, %v4235
    %v4270 = vsub.f32 %v4190, %v4237
    %v4271 = vsub.f32 %v4191, %v4239
    %v4272 = vand.u32 2147483647, %v4256
    %v4273 = vand.u32 2147483647, %v4257
    %v4274 = vand.u32 2147483647, %v4258
    %v4275 = vand.u32 2147483647, %v4259
    %v4276 = vand.u32 2147483647, %v4260
    %v4277 = vand.u32 2147483647, %v4261
    %v4278 = vand.u32 2147483647, %v4262
    %v4279 = vand.u32 2147483647, %v4263
    %v4280 = vand.u32 2147483647, %v4264
    %v4281 = vand.u32 2147483647, %v4265
    %v4282 = vand.u32 2147483647, %v4266
    %v4283 = vand.u32 2147483647, %v4267
    %v4284 = vand.u32 2147483647, %v4268
    %v4285 = vand.u32 2147483647, %v4269
    %v4286 = vand.u32 2147483647, %v4270
    %v4287 = vand.u32 2147483647, %v4271
    %4304 = vrot.lane.b32.xlu0 %v4272, 126
    %v4305 = vpop.permute.xlu0 %4304
    %4306 = vrot.lane.b32.xlu0 %v4273, 126
    %v4307 = vpop.permute.xlu0 %4306
    %4308 = vrot.lane.b32.xlu0 %v4274, 126
    %v4309 = vpop.permute.xlu0 %4308
    %4310 = vrot.lane.b32.xlu0 %v4275, 126
    %v4311 = vpop.permute.xlu0 %4310
    %4312 = vrot.lane.b32.xlu0 %v4276, 126
    %v4313 = vpop.permute.xlu0 %4312
    %4314 = vrot.lane.b32.xlu0 %v4277, 126
    %v4315 = vpop.permute.xlu0 %4314
    %4316 = vrot.lane.b32.xlu0 %v4278, 126
    %v4317 = vpop.permute.xlu0 %4316
    %4318 = vrot.lane.b32.xlu0 %v4279, 126
    %v4319 = vpop.permute.xlu0 %4318
    %4320 = vrot.lane.b32.xlu0 %v4280, 126
    %v4321 = vpop.permute.xlu0 %4320
    %4322 = vrot.lane.b32.xlu0 %v4281, 126
    %v4323 = vpop.permute.xlu0 %4322
    %4324 = vrot.lane.b32.xlu0 %v4282, 126
    %v4325 = vpop.permute.xlu0 %4324
    %4326 = vrot.lane.b32.xlu0 %v4283, 126
    %v4327 = vpop.permute.xlu0 %4326
    %4328 = vrot.lane.b32.xlu0 %v4284, 126
    %v4329 = vpop.permute.xlu0 %4328
    %4330 = vrot.lane.b32.xlu0 %v4285, 126
    %v4331 = vpop.permute.xlu0 %4330
    %4332 = vrot.lane.b32.xlu0 %v4286, 126
    %v4333 = vpop.permute.xlu0 %4332
    %4334 = vrot.lane.b32.xlu0 %v4287, 126
    %v4335 = vpop.permute.xlu0 %4334
    %v4352 = vsel %vm266, %v4305, 0.0
    %v4353 = vsel %vm266, %v4307, 0.0
    %v4354 = vadd.f32 %v4352, %v4353
    %v4355 = vsel %vm266, %v4309, 0.0
    %v4356 = vadd.f32 %v4354, %v4355
    %v4357 = vsel %vm266, %v4311, 0.0
    %v4358 = vadd.f32 %v4356, %v4357
    %v4359 = vsel %vm266, %v4313, 0.0
    %v4360 = vadd.f32 %v4358, %v4359
    %v4361 = vsel %vm266, %v4315, 0.0
    %v4362 = vadd.f32 %v4360, %v4361
    %v4363 = vsel %vm266, %v4317, 0.0
    %v4364 = vadd.f32 %v4362, %v4363
    %v4365 = vsel %vm266, %v4319, 0.0
    %v4366 = vadd.f32 %v4364, %v4365
    %v4367 = vsel %vm266, %v4321, 0.0
    %v4368 = vadd.f32 %v4366, %v4367
    %v4369 = vsel %vm266, %v4323, 0.0
    %v4370 = vadd.f32 %v4368, %v4369
    %v4371 = vsel %vm266, %v4325, 0.0
    %v4372 = vadd.f32 %v4370, %v4371
    %v4373 = vsel %vm266, %v4327, 0.0
    %v4374 = vadd.f32 %v4372, %v4373
    %v4375 = vsel %vm266, %v4329, 0.0
    %v4376 = vadd.f32 %v4374, %v4375
    %v4377 = vsel %vm266, %v4331, 0.0
    %v4378 = vadd.f32 %v4376, %v4377
    %v4379 = vsel %vm266, %v4333, 0.0
    %v4380 = vadd.f32 %v4378, %v4379
    %v4381 = vsel %vm266, %v4335, 0.0
    %v4382 = vadd.f32 %v4380, %v4381
    %4383 = vadd.xlane.f32.xlu0 %v4382
    %v4384 = vpop.xlane.xlu0 %4383
    %v4385 = vrot.slane %v4384, 4
    %v4386 = vadd.f32 %v4384, %v4385
    %v4387 = vrot.slane %v4386, 2
    %v4388 = vadd.f32 %v4386, %v4387
    %v4389 = vrot.slane %v4388, 1
    %v4390 = vadd.f32 %v4388, %v4389
    %s4391 = vtos %v4390
    %s4392 = sadd.f32 %s4391, 0.0
    %4393 = vrot.lane.b32.xlu0 %v4176, 1
    %v4394 = vpop.permute.xlu0 %4393
    %4395 = vrot.lane.b32.xlu0 %v4177, 1
    %v4396 = vpop.permute.xlu0 %4395
    %4397 = vrot.lane.b32.xlu0 %v4178, 1
    %v4398 = vpop.permute.xlu0 %4397
    %4399 = vrot.lane.b32.xlu0 %v4179, 1
    %v4400 = vpop.permute.xlu0 %4399
    %4401 = vrot.lane.b32.xlu0 %v4180, 1
    %v4402 = vpop.permute.xlu0 %4401
    %4403 = vrot.lane.b32.xlu0 %v4181, 1
    %v4404 = vpop.permute.xlu0 %4403
    %4405 = vrot.lane.b32.xlu0 %v4182, 1
    %v4406 = vpop.permute.xlu0 %4405
    %4407 = vrot.lane.b32.xlu0 %v4183, 1
    %v4408 = vpop.permute.xlu0 %4407
    %4409 = vrot.lane.b32.xlu0 %v4184, 1
    %v4410 = vpop.permute.xlu0 %4409
    %4411 = vrot.lane.b32.xlu0 %v4185, 1
    %v4412 = vpop.permute.xlu0 %4411
    %4413 = vrot.lane.b32.xlu0 %v4186, 1
    %v4414 = vpop.permute.xlu0 %4413
    %4415 = vrot.lane.b32.xlu0 %v4187, 1
    %v4416 = vpop.permute.xlu0 %4415
    %4417 = vrot.lane.b32.xlu0 %v4188, 1
    %v4418 = vpop.permute.xlu0 %4417
    %4419 = vrot.lane.b32.xlu0 %v4189, 1
    %v4420 = vpop.permute.xlu0 %4419
    %4421 = vrot.lane.b32.xlu0 %v4190, 1
    %v4422 = vpop.permute.xlu0 %4421
    %4423 = vrot.lane.b32.xlu0 %v4191, 1
    %v4424 = vpop.permute.xlu0 %4423
    %v4441 = vsub.f32 %v4176, %v4394
    %v4442 = vsub.f32 %v4177, %v4396
    %v4443 = vsub.f32 %v4178, %v4398
    %v4444 = vsub.f32 %v4179, %v4400
    %v4445 = vsub.f32 %v4180, %v4402
    %v4446 = vsub.f32 %v4181, %v4404
    %v4447 = vsub.f32 %v4182, %v4406
    %v4448 = vsub.f32 %v4183, %v4408
    %v4449 = vsub.f32 %v4184, %v4410
    %v4450 = vsub.f32 %v4185, %v4412
    %v4451 = vsub.f32 %v4186, %v4414
    %v4452 = vsub.f32 %v4187, %v4416
    %v4453 = vsub.f32 %v4188, %v4418
    %v4454 = vsub.f32 %v4189, %v4420
    %v4455 = vsub.f32 %v4190, %v4422
    %v4456 = vsub.f32 %v4191, %v4424
    %v4457 = vand.u32 2147483647, %v4441
    %v4458 = vand.u32 2147483647, %v4442
    %v4459 = vand.u32 2147483647, %v4443
    %v4460 = vand.u32 2147483647, %v4444
    %v4461 = vand.u32 2147483647, %v4445
    %v4462 = vand.u32 2147483647, %v4446
    %v4463 = vand.u32 2147483647, %v4447
    %v4464 = vand.u32 2147483647, %v4448
    %v4465 = vand.u32 2147483647, %v4449
    %v4466 = vand.u32 2147483647, %v4450
    %v4467 = vand.u32 2147483647, %v4451
    %v4468 = vand.u32 2147483647, %v4452
    %v4469 = vand.u32 2147483647, %v4453
    %v4470 = vand.u32 2147483647, %v4454
    %v4471 = vand.u32 2147483647, %v4455
    %v4472 = vand.u32 2147483647, %v4456
    %4489 = vrot.lane.b32.xlu0 %v4457, 127
    %v4490 = vpop.permute.xlu0 %4489
    %4491 = vrot.lane.b32.xlu0 %v4458, 127
    %v4492 = vpop.permute.xlu0 %4491
    %4493 = vrot.lane.b32.xlu0 %v4459, 127
    %v4494 = vpop.permute.xlu0 %4493
    %4495 = vrot.lane.b32.xlu0 %v4460, 127
    %v4496 = vpop.permute.xlu0 %4495
    %4497 = vrot.lane.b32.xlu0 %v4461, 127
    %v4498 = vpop.permute.xlu0 %4497
    %4499 = vrot.lane.b32.xlu0 %v4462, 127
    %v4500 = vpop.permute.xlu0 %4499
    %4501 = vrot.lane.b32.xlu0 %v4463, 127
    %v4502 = vpop.permute.xlu0 %4501
    %4503 = vrot.lane.b32.xlu0 %v4464, 127
    %v4504 = vpop.permute.xlu0 %4503
    %4505 = vrot.lane.b32.xlu0 %v4465, 127
    %v4506 = vpop.permute.xlu0 %4505
    %4507 = vrot.lane.b32.xlu0 %v4466, 127
    %v4508 = vpop.permute.xlu0 %4507
    %4509 = vrot.lane.b32.xlu0 %v4467, 127
    %v4510 = vpop.permute.xlu0 %4509
    %4511 = vrot.lane.b32.xlu0 %v4468, 127
    %v4512 = vpop.permute.xlu0 %4511
    %4513 = vrot.lane.b32.xlu0 %v4469, 127
    %v4514 = vpop.permute.xlu0 %4513
    %4515 = vrot.lane.b32.xlu0 %v4470, 127
    %v4516 = vpop.permute.xlu0 %4515
    %4517 = vrot.lane.b32.xlu0 %v4471, 127
    %v4518 = vpop.permute.xlu0 %4517
    %4519 = vrot.lane.b32.xlu0 %v4472, 127
    %v4520 = vpop.permute.xlu0 %4519
    %v4537 = vsel %vm452, %v4490, 0.0
    %v4538 = vsel %vm452, %v4492, 0.0
    %v4539 = vadd.f32 %v4537, %v4538
    %v4540 = vsel %vm452, %v4494, 0.0
    %v4541 = vadd.f32 %v4539, %v4540
    %v4542 = vsel %vm452, %v4496, 0.0
    %v4543 = vadd.f32 %v4541, %v4542
    %v4544 = vsel %vm452, %v4498, 0.0
    %v4545 = vadd.f32 %v4543, %v4544
    %v4546 = vsel %vm452, %v4500, 0.0
    %v4547 = vadd.f32 %v4545, %v4546
    %v4548 = vsel %vm452, %v4502, 0.0
    %v4549 = vadd.f32 %v4547, %v4548
    %v4550 = vsel %vm452, %v4504, 0.0
    %v4551 = vadd.f32 %v4549, %v4550
    %v4552 = vsel %vm452, %v4506, 0.0
    %v4553 = vadd.f32 %v4551, %v4552
    %v4554 = vsel %vm452, %v4508, 0.0
    %v4555 = vadd.f32 %v4553, %v4554
    %v4556 = vsel %vm452, %v4510, 0.0
    %v4557 = vadd.f32 %v4555, %v4556
    %v4558 = vsel %vm452, %v4512, 0.0
    %v4559 = vadd.f32 %v4557, %v4558
    %v4560 = vsel %vm452, %v4514, 0.0
    %v4561 = vadd.f32 %v4559, %v4560
    %v4562 = vsel %vm452, %v4516, 0.0
    %v4563 = vadd.f32 %v4561, %v4562
    %v4564 = vsel %vm452, %v4518, 0.0
    %v4565 = vadd.f32 %v4563, %v4564
    %v4566 = vsel %vm452, %v4520, 0.0
    %v4567 = vadd.f32 %v4565, %v4566
    %4568 = vadd.xlane.f32.xlu0 %v4567
    %v4569 = vpop.xlane.xlu0 %4568
    %v4570 = vrot.slane %v4569, 4
    %v4571 = vadd.f32 %v4569, %v4570
    %v4572 = vrot.slane %v4571, 2
    %v4573 = vadd.f32 %v4571, %v4572
    %v4574 = vrot.slane %v4573, 1
    %v4575 = vadd.f32 %v4573, %v4574
    %s4576 = vtos %v4575
    %s4577 = sadd.f32 %s4392, %s4576
    %4578 = vrot.lane.b32.xlu0 %v4457, 113
    %v4579 = vpop.permute.xlu0 %4578
    %4580 = vrot.lane.b32.xlu0 %v4458, 113
    %v4581 = vpop.permute.xlu0 %4580
    %4582 = vrot.lane.b32.xlu0 %v4459, 113
    %v4583 = vpop.permute.xlu0 %4582
    %4584 = vrot.lane.b32.xlu0 %v4460, 113
    %v4585 = vpop.permute.xlu0 %4584
    %4586 = vrot.lane.b32.xlu0 %v4461, 113
    %v4587 = vpop.permute.xlu0 %4586
    %4588 = vrot.lane.b32.xlu0 %v4462, 113
    %v4589 = vpop.permute.xlu0 %4588
    %4590 = vrot.lane.b32.xlu0 %v4463, 113
    %v4591 = vpop.permute.xlu0 %4590
    %4592 = vrot.lane.b32.xlu0 %v4464, 113
    %v4593 = vpop.permute.xlu0 %4592
    %4594 = vrot.lane.b32.xlu0 %v4465, 113
    %v4595 = vpop.permute.xlu0 %4594
    %4596 = vrot.lane.b32.xlu0 %v4466, 113
    %v4597 = vpop.permute.xlu0 %4596
    %4598 = vrot.lane.b32.xlu0 %v4467, 113
    %v4599 = vpop.permute.xlu0 %4598
    %4600 = vrot.lane.b32.xlu0 %v4468, 113
    %v4601 = vpop.permute.xlu0 %4600
    %4602 = vrot.lane.b32.xlu0 %v4469, 113
    %v4603 = vpop.permute.xlu0 %4602
    %4604 = vrot.lane.b32.xlu0 %v4470, 113
    %v4605 = vpop.permute.xlu0 %4604
    %4606 = vrot.lane.b32.xlu0 %v4471, 113
    %v4607 = vpop.permute.xlu0 %4606
    %4608 = vrot.lane.b32.xlu0 %v4472, 113
    %v4609 = vpop.permute.xlu0 %4608
    %v4626 = vsel %vm452, %v4579, 0.0
    %v4627 = vsel %vm452, %v4581, 0.0
    %v4628 = vadd.f32 %v4626, %v4627
    %v4629 = vsel %vm452, %v4583, 0.0
    %v4630 = vadd.f32 %v4628, %v4629
    %v4631 = vsel %vm452, %v4585, 0.0
    %v4632 = vadd.f32 %v4630, %v4631
    %v4633 = vsel %vm452, %v4587, 0.0
    %v4634 = vadd.f32 %v4632, %v4633
    %v4635 = vsel %vm452, %v4589, 0.0
    %v4636 = vadd.f32 %v4634, %v4635
    %v4637 = vsel %vm452, %v4591, 0.0
    %v4638 = vadd.f32 %v4636, %v4637
    %v4639 = vsel %vm452, %v4593, 0.0
    %v4640 = vadd.f32 %v4638, %v4639
    %v4641 = vsel %vm452, %v4595, 0.0
    %v4642 = vadd.f32 %v4640, %v4641
    %v4643 = vsel %vm452, %v4597, 0.0
    %v4644 = vadd.f32 %v4642, %v4643
    %v4645 = vsel %vm452, %v4599, 0.0
    %v4646 = vadd.f32 %v4644, %v4645
    %v4647 = vsel %vm452, %v4601, 0.0
    %v4648 = vadd.f32 %v4646, %v4647
    %v4649 = vsel %vm452, %v4603, 0.0
    %v4650 = vadd.f32 %v4648, %v4649
    %v4651 = vsel %vm452, %v4605, 0.0
    %v4652 = vadd.f32 %v4650, %v4651
    %v4653 = vsel %vm452, %v4607, 0.0
    %v4654 = vadd.f32 %v4652, %v4653
    %v4655 = vsel %vm452, %v4609, 0.0
    %v4656 = vadd.f32 %v4654, %v4655
    %4657 = vadd.xlane.f32.xlu0 %v4656
    %v4658 = vpop.xlane.xlu0 %4657
    %v4659 = vrot.slane %v4658, 4
    %v4660 = vadd.f32 %v4658, %v4659
    %v4661 = vrot.slane %v4660, 2
    %v4662 = vadd.f32 %v4660, %v4661
    %v4663 = vrot.slane %v4662, 1
    %v4664 = vadd.f32 %v4662, %v4663
    %s4665 = vtos %v4664
    %s4666 = sadd.f32 %s4577, %s4665
    %v4667 = vrot.slane %v4176, 6
    %v4668 = vrot.slane %v4177, 6
    %v4669 = vsel %vm583, %v4667, %v4668
    %v4670 = vrot.slane %v4178, 6
    %v4671 = vrot.slane %v4179, 6
    %v4672 = vsel %vm583, %v4670, %v4671
    %v4673 = vrot.slane %v4180, 6
    %v4674 = vrot.slane %v4181, 6
    %v4675 = vsel %vm583, %v4673, %v4674
    %v4676 = vrot.slane %v4182, 6
    %v4677 = vrot.slane %v4183, 6
    %v4678 = vsel %vm583, %v4676, %v4677
    %v4679 = vrot.slane %v4184, 6
    %v4680 = vrot.slane %v4185, 6
    %v4681 = vsel %vm583, %v4679, %v4680
    %v4682 = vrot.slane %v4186, 6
    %v4683 = vrot.slane %v4187, 6
    %v4684 = vsel %vm583, %v4682, %v4683
    %v4685 = vrot.slane %v4188, 6
    %v4686 = vrot.slane %v4189, 6
    %v4687 = vsel %vm583, %v4685, %v4686
    %v4688 = vrot.slane %v4190, 6
    %v4689 = vrot.slane %v4191, 6
    %v4690 = vsel %vm583, %v4688, %v4689
    %v4707 = vsub.f32 %v4176, %v4667
    %v4708 = vsub.f32 %v4177, %v4669
    %v4709 = vsub.f32 %v4178, %v4670
    %v4710 = vsub.f32 %v4179, %v4672
    %v4711 = vsub.f32 %v4180, %v4673
    %v4712 = vsub.f32 %v4181, %v4675
    %v4713 = vsub.f32 %v4182, %v4676
    %v4714 = vsub.f32 %v4183, %v4678
    %v4715 = vsub.f32 %v4184, %v4679
    %v4716 = vsub.f32 %v4185, %v4681
    %v4717 = vsub.f32 %v4186, %v4682
    %v4718 = vsub.f32 %v4187, %v4684
    %v4719 = vsub.f32 %v4188, %v4685
    %v4720 = vsub.f32 %v4189, %v4687
    %v4721 = vsub.f32 %v4190, %v4688
    %v4722 = vsub.f32 %v4191, %v4690
    %v4723 = vand.u32 2147483647, %v4707
    %v4724 = vand.u32 2147483647, %v4708
    %v4725 = vand.u32 2147483647, %v4709
    %v4726 = vand.u32 2147483647, %v4710
    %v4727 = vand.u32 2147483647, %v4711
    %v4728 = vand.u32 2147483647, %v4712
    %v4729 = vand.u32 2147483647, %v4713
    %v4730 = vand.u32 2147483647, %v4714
    %v4731 = vand.u32 2147483647, %v4715
    %v4732 = vand.u32 2147483647, %v4716
    %v4733 = vand.u32 2147483647, %v4717
    %v4734 = vand.u32 2147483647, %v4718
    %v4735 = vand.u32 2147483647, %v4719
    %v4736 = vand.u32 2147483647, %v4720
    %v4737 = vand.u32 2147483647, %v4721
    %v4738 = vand.u32 2147483647, %v4722
    %v4755 = vrot.slane %v4723, 2
    %v4756 = vrot.slane %v4724, 2
    %v4757 = vsel %vm672, %v4755, %v4756
    %v4758 = vrot.slane %v4725, 2
    %v4759 = vrot.slane %v4726, 2
    %v4760 = vsel %vm672, %v4758, %v4759
    %v4761 = vrot.slane %v4727, 2
    %v4762 = vrot.slane %v4728, 2
    %v4763 = vsel %vm672, %v4761, %v4762
    %v4764 = vrot.slane %v4729, 2
    %v4765 = vrot.slane %v4730, 2
    %v4766 = vsel %vm672, %v4764, %v4765
    %v4767 = vrot.slane %v4731, 2
    %v4768 = vrot.slane %v4732, 2
    %v4769 = vsel %vm672, %v4767, %v4768
    %v4770 = vrot.slane %v4733, 2
    %v4771 = vrot.slane %v4734, 2
    %v4772 = vsel %vm672, %v4770, %v4771
    %v4773 = vrot.slane %v4735, 2
    %v4774 = vrot.slane %v4736, 2
    %v4775 = vsel %vm672, %v4773, %v4774
    %v4776 = vrot.slane %v4737, 2
    %v4777 = vrot.slane %v4738, 2
    %v4778 = vsel %vm672, %v4776, %v4777
    %v4795 = vsel %vm713, %v4757, 0.0
    %v4796 = vsel %vm715, %v4756, 0.0
    %v4797 = vadd.f32 %v4795, %v4796
    %v4798 = vsel %vm713, %v4760, 0.0
    %v4799 = vadd.f32 %v4797, %v4798
    %v4800 = vsel %vm715, %v4759, 0.0
    %v4801 = vadd.f32 %v4799, %v4800
    %v4802 = vsel %vm713, %v4763, 0.0
    %v4803 = vadd.f32 %v4801, %v4802
    %v4804 = vsel %vm715, %v4762, 0.0
    %v4805 = vadd.f32 %v4803, %v4804
    %v4806 = vsel %vm713, %v4766, 0.0
    %v4807 = vadd.f32 %v4805, %v4806
    %v4808 = vsel %vm715, %v4765, 0.0
    %v4809 = vadd.f32 %v4807, %v4808
    %v4810 = vsel %vm713, %v4769, 0.0
    %v4811 = vadd.f32 %v4809, %v4810
    %v4812 = vsel %vm715, %v4768, 0.0
    %v4813 = vadd.f32 %v4811, %v4812
    %v4814 = vsel %vm713, %v4772, 0.0
    %v4815 = vadd.f32 %v4813, %v4814
    %v4816 = vsel %vm715, %v4771, 0.0
    %v4817 = vadd.f32 %v4815, %v4816
    %v4818 = vsel %vm713, %v4775, 0.0
    %v4819 = vadd.f32 %v4817, %v4818
    %v4820 = vsel %vm715, %v4774, 0.0
    %v4821 = vadd.f32 %v4819, %v4820
    %v4822 = vsel %vm713, %v4778, 0.0
    %v4823 = vadd.f32 %v4821, %v4822
    %v4824 = vsel %vm715, %v4777, 0.0
    %v4825 = vadd.f32 %v4823, %v4824
    %4826 = vadd.xlane.f32.xlu0 %v4825
    %v4827 = vpop.xlane.xlu0 %4826
    %v4828 = vrot.slane %v4827, 4
    %v4829 = vadd.f32 %v4827, %v4828
    %v4830 = vrot.slane %v4829, 2
    %v4831 = vadd.f32 %v4829, %v4830
    %v4832 = vrot.slane %v4831, 1
    %v4833 = vadd.f32 %v4831, %v4832
    %s4834 = vtos %v4833
    %s4835 = sadd.f32 %s4666, %s4834
    %v4836 = vrot.slane %v4176, 7
    %v4837 = vrot.slane %v4178, 7
    %v4838 = vrot.slane %v4180, 7
    %v4839 = vrot.slane %v4182, 7
    %v4840 = vrot.slane %v4184, 7
    %v4841 = vrot.slane %v4186, 7
    %v4842 = vrot.slane %v4188, 7
    %v4843 = vrot.slane %v4190, 7
    %v4852 = vsub.f32 %v4176, %v4836
    %v4853 = vsub.f32 %v4178, %v4837
    %v4854 = vsub.f32 %v4180, %v4838
    %v4855 = vsub.f32 %v4182, %v4839
    %v4856 = vsub.f32 %v4184, %v4840
    %v4857 = vsub.f32 %v4186, %v4841
    %v4858 = vsub.f32 %v4188, %v4842
    %v4859 = vsub.f32 %v4190, %v4843
    %v4860 = vand.u32 2147483647, %v4852
    %v4861 = vand.u32 2147483647, %v4853
    %v4862 = vand.u32 2147483647, %v4854
    %v4863 = vand.u32 2147483647, %v4855
    %v4864 = vand.u32 2147483647, %v4856
    %v4865 = vand.u32 2147483647, %v4857
    %v4866 = vand.u32 2147483647, %v4858
    %v4867 = vand.u32 2147483647, %v4859
    %v4876 = vrot.slane %v4860, 1
    %v4877 = vrot.slane %v4861, 1
    %v4878 = vrot.slane %v4862, 1
    %v4879 = vrot.slane %v4863, 1
    %v4880 = vrot.slane %v4864, 1
    %v4881 = vrot.slane %v4865, 1
    %v4882 = vrot.slane %v4866, 1
    %v4883 = vrot.slane %v4867, 1
    %v4892 = vsel %vm812, %v4876, 0.0
    %v4893 = vsel %vm812, %v4877, 0.0
    %v4894 = vadd.f32 %v4892, %v4893
    %v4895 = vsel %vm812, %v4878, 0.0
    %v4896 = vadd.f32 %v4894, %v4895
    %v4897 = vsel %vm812, %v4879, 0.0
    %v4898 = vadd.f32 %v4896, %v4897
    %v4899 = vsel %vm812, %v4880, 0.0
    %v4900 = vadd.f32 %v4898, %v4899
    %v4901 = vsel %vm812, %v4881, 0.0
    %v4902 = vadd.f32 %v4900, %v4901
    %v4903 = vsel %vm812, %v4882, 0.0
    %v4904 = vadd.f32 %v4902, %v4903
    %v4905 = vsel %vm812, %v4883, 0.0
    %v4906 = vadd.f32 %v4904, %v4905
    %4907 = vadd.xlane.f32.xlu0 %v4906
    %v4908 = vpop.xlane.xlu0 %4907
    %v4909 = vrot.slane %v4908, 4
    %v4910 = vadd.f32 %v4908, %v4909
    %v4911 = vrot.slane %v4910, 2
    %v4912 = vadd.f32 %v4910, %v4911
    %v4913 = vrot.slane %v4912, 1
    %v4914 = vadd.f32 %v4912, %v4913
    %s4915 = vtos %v4914
    %s4916 = sadd.f32 %s4835, %s4915
    %v4917 = vrot.slane %v4177, 7
    %v4918 = vrot.slane %v4179, 7
    %v4919 = vrot.slane %v4181, 7
    %v4920 = vrot.slane %v4183, 7
    %v4921 = vrot.slane %v4185, 7
    %v4922 = vrot.slane %v4187, 7
    %v4923 = vrot.slane %v4189, 7
    %v4924 = vrot.slane %v4191, 7
    %v4933 = vsub.f32 %v4177, %v4917
    %v4934 = vsub.f32 %v4179, %v4918
    %v4935 = vsub.f32 %v4181, %v4919
    %v4936 = vsub.f32 %v4183, %v4920
    %v4937 = vsub.f32 %v4185, %v4921
    %v4938 = vsub.f32 %v4187, %v4922
    %v4939 = vsub.f32 %v4189, %v4923
    %v4940 = vsub.f32 %v4191, %v4924
    %v4941 = vand.u32 2147483647, %v4933
    %v4942 = vand.u32 2147483647, %v4934
    %v4943 = vand.u32 2147483647, %v4935
    %v4944 = vand.u32 2147483647, %v4936
    %v4945 = vand.u32 2147483647, %v4937
    %v4946 = vand.u32 2147483647, %v4938
    %v4947 = vand.u32 2147483647, %v4939
    %v4948 = vand.u32 2147483647, %v4940
    %v4957 = vrot.slane %v4941, 7
    %v4958 = vrot.slane %v4942, 7
    %v4959 = vrot.slane %v4943, 7
    %v4960 = vrot.slane %v4944, 7
    %v4961 = vrot.slane %v4945, 7
    %v4962 = vrot.slane %v4946, 7
    %v4963 = vrot.slane %v4947, 7
    %v4964 = vrot.slane %v4948, 7
    %v4973 = vsel %vm812, %v4957, 0.0
    %v4974 = vsel %vm812, %v4958, 0.0
    %v4975 = vadd.f32 %v4973, %v4974
    %v4976 = vsel %vm812, %v4959, 0.0
    %v4977 = vadd.f32 %v4975, %v4976
    %v4978 = vsel %vm812, %v4960, 0.0
    %v4979 = vadd.f32 %v4977, %v4978
    %v4980 = vsel %vm812, %v4961, 0.0
    %v4981 = vadd.f32 %v4979, %v4980
    %v4982 = vsel %vm812, %v4962, 0.0
    %v4983 = vadd.f32 %v4981, %v4982
    %v4984 = vsel %vm812, %v4963, 0.0
    %v4985 = vadd.f32 %v4983, %v4984
    %v4986 = vsel %vm812, %v4964, 0.0
    %v4987 = vadd.f32 %v4985, %v4986
    %4988 = vadd.xlane.f32.xlu0 %v4987
    %v4989 = vpop.xlane.xlu0 %4988
    %v4990 = vrot.slane %v4989, 4
    %v4991 = vadd.f32 %v4989, %v4990
    %v4992 = vrot.slane %v4991, 2
    %v4993 = vadd.f32 %v4991, %v4992
    %v4994 = vrot.slane %v4993, 1
    %v4995 = vadd.f32 %v4993, %v4994
    %s4996 = vtos %v4995
    %s4997 = sadd.f32 %s4916, %s4996
    %s4998 = smul.f32 %s4997, 0.125
    %s4999 = sadd.f32 %s2945, %s4998
    %v5000 = vstv %s4999
    %5001 = vst [vmem:[#allocation7] sm:$0xff] %v5000
    // Predicated region
    $region42: #{tpu_custom_call.1} parent=1 // pred_check
      _
    $region43: #{tpu_custom_call.1} parent=1 // pred_check_branch
      %5003 = sbr.rel (0) target = $region45
    $region44: #{tpu_custom_call.1} parent=1 // pred_region
      %s5005 = ssub.s32 128, 128
      %5006 = vsyncadd [#allocation4], %s5005
      %s5008 = sshll.u32 [#allocation7], 4
      %s5009 = int_to_ptr.vmem [resolvable:$true] %s5008
      %5011 = dma.vmem_to_hbm [thread:$0]  %s5009, 128, %s8, [#allocation4]
    $region45: #{tpu_custom_call.1} parent=1 // pred_fallthru
      _
    // Predicated region
    $region46: #{tpu_custom_call.1} parent=1 // pred_check
      _
    $region47: #{tpu_custom_call.1} parent=1 // pred_check_branch
      %5013 = sbr.rel (0) target = $region49
    $region48: #{tpu_custom_call.1} parent=1 // pred_region
      %5014 = dma.done [#allocation4], 128
    $region49: #{tpu_custom_call.1} parent=1 // pred_fallthru
      _
    %5015 = vsyncpa [#allocation3], 1
    %5016 = vsyncpa [#allocation6], 1
    %5017 = vsyncpa [#allocation4], 1

</llo_original>
